<compile_context>
chip_gen: v7x
topology: tpu7x:2x2x1
jax: 0.10.0
libtpu: 0.0.40
codegen_flags: <defaults>
</compile_context>

<pallas_src>
import math

import numpy as np
import jax
import jax.numpy as jnp
from jax.experimental import pallas as pl
from jax.experimental.pallas import tpu as pltpu

# --------------------------------------------------------------------------- config
INPUT_SIZE    = 16      # conv "length" dimension
WINDOW_SIZE   = 4       # conv "channel" dimension == LSTM sequence length
KERNEL_SIZE   = 5
DILATION_BASE = 2
LSTM_HIDDEN   = 320     # lstm_hidden * lstm_layers must equal 320 (nn.Linear(320, 1))
LSTM_LAYERS   = 1
BATCH         = 2

NUM_LAYERS = int(
    math.log((WINDOW_SIZE - 1) * (DILATION_BASE - 1) / (KERNEL_SIZE - 1) + 1)
    / math.log(DILATION_BASE)) + 1
assert NUM_LAYERS == 1 and LSTM_LAYERS == 1 and LSTM_HIDDEN * LSTM_LAYERS == 320

# TODO(synk): `self.sub_small_num_layer` is undefined in the original PyTorch code;
# we take one spatial layer with the leftover (dilation=1, padding=K-1) values, which
# is exactly what the literal code path produces for this config.
SPATIAL_DIL, SPATIAL_PAD = 1, KERNEL_SIZE - 1                             # (1, 4)

# Per-branch conv output lengths and pooled (floor-mode /2) lengths.
L_SP = INPUT_SIZE + 2 * SPATIAL_PAD - SPATIAL_DIL * (KERNEL_SIZE - 1)     # 20
L_C1 = INPUT_SIZE - 3 + 1                                                 # 14
L_CF = INPUT_SIZE + 2 * (INPUT_SIZE - 1) - (INPUT_SIZE - 1)               # 31
P_SP, P_C1, P_CF = L_SP // 2, L_C1 // 2, L_CF // 2                        # 10, 7, 15
RECEPTIVE = P_SP + P_C1 + P_CF                                            # 32
assert RECEPTIVE == 32

H  = LSTM_HIDDEN
HP = 384                       # hidden padded to 3*128 for aligned gate slices
T  = WINDOW_SIZE               # LSTM sequence length
NPOOL_COLS = WINDOW_SIZE * RECEPTIVE          # 128 (pooled concat, all channels)
NCONV_COLS = 2 * NPOOL_COLS                   # 256 (both maxpool candidates)

_VMEM = pl.BlockSpec(memory_space=pltpu.MemorySpace.VMEM)


# --------------------------------------------------------------------------- fused kernel
def _fused_kernel(x_ref, a_ref, bc_ref, wbd_ref, b1_ref,
                  wih_ref, bg_ref, whh_ref, w2_ref, b2_ref, o_ref):
    # x:(B,64)  a:(64,256)  bc:(1,256)  wbd:(128,8)  b1:(1,8)
    # wih:(2,4*HP)  bg:(1,4*HP)  whh:(HP,4*HP) bf16  w2:(HP,1)  b2:(1,1)  o:(B,1)
    B = x_ref.shape[0]

    # -- all three conv branches (zero padding folded in) as one Toeplitz matmul --
    y = jnp.dot(x_ref[...], a_ref[...], preferred_element_type=jnp.float32) + bc_ref[...]
    # -- MaxPool1d(2), floor mode: the two pool candidates live in the two aligned
    #    128-lane halves of y -> one VPU max, no relayout --
    pooled = jnp.maximum(y[:, :NPOOL_COLS], y[:, NPOOL_COLS:])             # (B, 128)
    # -- linear_1 (block-diagonal over the 4 window channels) + ReLU --
    feat = jnp.dot(pooled, wbd_ref[...], preferred_element_type=jnp.float32) + b1_ref[...]
    feat = jnp.maximum(feat, 0.0)                                          # (B, T*2)

    # -- LSTM: one packed (B,HP)x(HP,4*HP) recurrent dot per step (skipped at t=0) --
    wih = wih_ref[...]
    whh = whh_ref[...]
    bg  = bg_ref[...]
    h = jnp.zeros((B, HP), jnp.float32)
    c = jnp.zeros((B, HP), jnp.float32)
    for t in range(T):                                   # static unroll (T == 4)
        xt = feat[:, 2 * t: 2 * t + 2]                   # (B, 2)
        z = jnp.dot(xt, wih, preferred_element_type=jnp.float32) + bg
        if t > 0:                                        # h == 0 at t == 0
            z = z + jnp.dot(h.astype(whh.dtype), whh,
                            preferred_element_type=jnp.float32)
        i_g = jax.nn.sigmoid(z[:, 0 * HP:1 * HP])        # gate order i, f, g, o
        f_g = jax.nn.sigmoid(z[:, 1 * HP:2 * HP])
        g_g = jnp.tanh(z[:, 2 * HP:3 * HP])
        o_g = jax.nn.sigmoid(z[:, 3 * HP:4 * HP])
        c = f_g * c + i_g * g_g
        h = o_g * jnp.tanh(c)

    # -- linear_2 + sigmoid  (nn.Dropout(0.2) is identity in eval mode) --
    out = jnp.dot(h, w2_ref[...], preferred_element_type=jnp.float32) + b2_ref[...]
    o_ref[...] = jax.nn.sigmoid(out)


@jax.jit
def magnitude7_forward(x, packed):
    B = x.shape[0]
    x_flat = x.reshape(B, WINDOW_SIZE * INPUT_SIZE)      # free row-major reshape
    return pl.pallas_call(
        _fused_kernel,
        out_shape=jax.ShapeDtypeStruct((B, 1), jnp.float32),
        in_specs=[_VMEM] * 10,
        out_specs=_VMEM,
    )(x_flat, packed["A"], packed["bc"], packed["Wbd"], packed["b1"],
      packed["Wih"], packed["bg"], packed["Whh"], packed["w2"], packed["b2"])


# --------------------------------------------------------------------------- raw params (torch layouts)
def init_raw_params(key):
    ks = jax.random.split(key, 8)

    def conv_init(k, cout, cin, ksz):
        kw, kb = jax.random.split(k)
        bound = 1.0 / math.sqrt(cin * ksz)
        return (jax.random.uniform(kw, (cout, cin, ksz), jnp.float32, -bound, bound),
                jax.random.uniform(kb, (cout,), jnp.float32, -bound, bound))

    def linear_init(k, out_f, in_f):
        kw, kb = jax.random.split(k)
        bound = 1.0 / math.sqrt(in_f)
        return (jax.random.uniform(kw, (out_f, in_f), jnp.float32, -bound, bound),
                jax.random.uniform(kb, (out_f,), jnp.float32, -bound, bound))

    def xavier(k, shape):
        bound = math.sqrt(6.0 / (shape[0] + shape[1]))
        return jax.random.uniform(k, shape, jnp.float32, -bound, bound)

    p = {}
    p["w_sp"], p["b_sp"] = conv_init(ks[0], WINDOW_SIZE, WINDOW_SIZE, KERNEL_SIZE)
    p["w_c1"], p["b_c1"] = conv_init(ks[1], WINDOW_SIZE, WINDOW_SIZE, 3)
    p["w_cf"], p["b_cf"] = conv_init(ks[2], WINDOW_SIZE, WINDOW_SIZE, INPUT_SIZE)
    p["w_l1"], p["b_l1"] = linear_init(ks[3], 2, RECEPTIVE)
    # LSTM init per Magnitude_7.init_weights: xavier_uniform weights, zero biases.
    p["w_ih"] = xavier(ks[4], (4 * H, 2))
    p["w_hh"] = xavier(ks[5], (4 * H, H))
    p["b_ih"] = jnp.zeros((4 * H,), jnp.float32)
    p["b_hh"] = jnp.zeros((4 * H,), jnp.float32)
    p["w_l2"], p["b_l2"] = linear_init(ks[6], 1, H * LSTM_LAYERS)   # Linear(320, 1)
    return p


# --------------------------------------------------------------------------- one-time packing (init only)
def pack_params(rp):
    C, L = WINDOW_SIZE, INPUT_SIZE

    # ---- conv branches + maxpool pairing folded into one Toeplitz matrix ----
    # column index = (l % 2) * 128 + channel * 32 + pooled_concat_index
    A  = np.zeros((C * L, NCONV_COLS), np.float32)
    bc = np.zeros((NCONV_COLS,), np.float32)
    branches = [
        (np.asarray(rp["w_sp"]), np.asarray(rp["b_sp"]), SPATIAL_DIL, SPATIAL_PAD),
        (np.asarray(rp["w_c1"]), np.asarray(rp["b_c1"]), 1, 0),
        (np.asarray(rp["w_cf"]), np.asarray(rp["b_cf"]), 1, INPUT_SIZE - 1),
    ]
    off = 0
    for w, b, dil, pad in branches:
        cout, cin, K = w.shape
        lout = L + 2 * pad - dil * (K - 1)
        P = lout // 2
        for co in range(cout):
            for l in range(2 * P):               # floor-mode pool: drop trailing element
                col = (l % 2) * NPOOL_COLS + co * RECEPTIVE + off + l // 2
                bc[col] = b[co]
                for k in range(K):
                    t = l + k * dil - pad        # zero padding -> skip out-of-range taps
                    if 0 <= t < L:
                        A[np.arange(cin) * L + t, col] += w[co, :, k]
        off += P
    assert off == RECEPTIVE

    # ---- block-diagonal linear_1 (applied per window channel) ----
    w_l1 = np.asarray(rp["w_l1"])                # (2, 32) torch layout
    b_l1 = np.asarray(rp["b_l1"])                # (2,)
    Wbd = np.zeros((NPOOL_COLS, C * 2), np.float32)
    for co in range(C):
        Wbd[co * RECEPTIVE:(co + 1) * RECEPTIVE, co * 2:(co + 1) * 2] = w_l1.T
    b1 = np.tile(b_l1, C)

    # ---- LSTM weights, each gate padded 320 -> 384 for aligned lane slices ----
    w_ih = np.asarray(rp["w_ih"])                # (4H, 2)
    w_hh = np.asarray(rp["w_hh"])                # (4H, H)
    b_g  = np.asarray(rp["b_ih"]) + np.asarray(rp["b_hh"])
    Wih = np.zeros((2, 4 * HP), np.float32)
    Whh = np.zeros((HP, 4 * HP), np.float32)
    bg  = np.zeros((4 * HP,), np.float32)
    for g in range(4):                           # gate order i, f, g, o
        Wih[:, g * HP:g * HP + H] = w_ih[g * H:(g + 1) * H, :].T
        Whh[:H, g * HP:g * HP + H] = w_hh[g * H:(g + 1) * H, :].T
        bg[g * HP:g * HP + H] = b_g[g * H:(g + 1) * H]

    # ---- linear_2 ----
    w2 = np.zeros((HP, 1), np.float32)
    w2[:H, 0] = np.asarray(rp["w_l2"])[0]
    b2 = np.asarray(rp["b_l2"]).reshape(1, 1)

    return {
        "A":   jnp.asarray(A),
        "bc":  jnp.asarray(bc).reshape(1, NCONV_COLS),
        "Wbd": jnp.asarray(Wbd),
        "b1":  jnp.asarray(b1).reshape(1, C * 2),
        "Wih": jnp.asarray(Wih),
        "bg":  jnp.asarray(bg).reshape(1, 4 * HP),
        "Whh": jnp.asarray(Whh, dtype=jnp.bfloat16),   # bf16 weights, f32 accumulation
        "w2":  jnp.asarray(w2),
        "b2":  jnp.asarray(b2, dtype=jnp.float32),
    }


# --------------------------------------------------------------------------- pure-JAX reference (f32)
def _conv1d_ref(x, w, b, dilation, padding):
    B, cin, L = x.shape
    cout, _, K = w.shape
    lout = L + 2 * padding - dilation * (K - 1)
    xp = jnp.pad(x, ((0, 0), (0, 0), (padding, padding)))
    acc = jnp.zeros((B, cout, lout), jnp.float32)
    for k in range(K):
        seg = xp[:, :, k * dilation: k * dilation + lout]
        acc = acc + jnp.einsum("oc,bcl->bol", w[:, :, k], seg)
    return acc + b[None, :, None]


def _maxpool_ref(x, k=2):
    B, C, L = x.shape
    P = L // k
    return jnp.max(x[:, :, :P * k].reshape(B, C, P, k), axis=-1)


def reference_forward(x, rp):
    x1 = _maxpool_ref(_conv1d_ref(x, rp["w_sp"], rp["b_sp"], SPATIAL_DIL, SPATIAL_PAD))
    x2 = _maxpool_ref(_conv1d_ref(x, rp["w_c1"], rp["b_c1"], 1, 0))
    x3 = _maxpool_ref(_conv1d_ref(x, rp["w_cf"], rp["b_cf"], 1, INPUT_SIZE - 1))
    concat = jnp.concatenate([x1, x2, x3], axis=2)                  # (B, 4, 32)
    feat = jnp.maximum(jnp.einsum("bcr,or->bco", concat, rp["w_l1"]) + rp["b_l1"], 0.0)
    B = x.shape[0]
    h = jnp.zeros((B, H), jnp.float32)
    c = jnp.zeros((B, H), jnp.float32)
    for t in range(T):
        z = (feat[:, t, :] @ rp["w_ih"].T + h @ rp["w_hh"].T
             + rp["b_ih"] + rp["b_hh"])
        i_g = jax.nn.sigmoid(z[:, 0 * H:1 * H])
        f_g = jax.nn.sigmoid(z[:, 1 * H:2 * H])
        g_g = jnp.tanh(z[:, 2 * H:3 * H])
        o_g = jax.nn.sigmoid(z[:, 3 * H:4 * H])
        c = f_g * c + i_g * g_g
        h = o_g * jnp.tanh(c)
    return jax.nn.sigmoid(h @ rp["w_l2"].T + rp["b_l2"])


# --------------------------------------------------------------------------- main
if __name__ == "__main__":
    key = jax.random.PRNGKey(0)
    pkey, xkey = jax.random.split(key)
    raw = init_raw_params(pkey)
    packed = pack_params(raw)
    x = jax.random.normal(xkey, (BATCH, WINDOW_SIZE, INPUT_SIZE), jnp.float32)

    out = jax.block_until_ready(magnitude7_forward(x, packed))
    assert out.shape == (BATCH, 1), out.shape
    assert bool(jnp.all(jnp.isfinite(out)))

    # correctness check against the pure-JAX f32 reference (loose tol for bf16 Whh)
    ref = jax.block_until_ready(reference_forward(x, raw))
    assert float(jnp.max(jnp.abs(out - ref))) < 5e-2

    print("KERNEL_OK")
</pallas_src>

<mosaic_0001>
module attributes {stable_mosaic.version = 11 : i64} {
  func.func @_fused_kernel(%arg0: memref<2x64xf32, #tpu.memory_space<vmem>>, %arg1: memref<64x256xf32, #tpu.memory_space<vmem>>, %arg2: memref<1x256xf32, #tpu.memory_space<vmem>>, %arg3: memref<128x8xf32, #tpu.memory_space<vmem>>, %arg4: memref<1x8xf32, #tpu.memory_space<vmem>>, %arg5: memref<2x1536xf32, #tpu.memory_space<vmem>>, %arg6: memref<1x1536xf32, #tpu.memory_space<vmem>>, %arg7: memref<384x1536xbf16, #tpu.memory_space<vmem>>, %arg8: memref<384x1xf32, #tpu.memory_space<vmem>>, %arg9: memref<1x1xf32, #tpu.memory_space<vmem>>, %arg10: memref<2x1xf32, #tpu.memory_space<vmem>>) attributes {dimension_semantics = [], scalar_prefetch = 0 : i64, scratch_operands = 0 : i64, tpu.core_type = #tpu.core_type<tc>} {
    %c0 = arith.constant 0 : index
    %c0_0 = arith.constant 0 : index
    %0 = vector.load %arg0[%c0, %c0_0] : memref<2x64xf32, #tpu.memory_space<vmem>>, vector<2x64xf32>
    %c0_1 = arith.constant 0 : index
    %c0_2 = arith.constant 0 : index
    %1 = vector.load %arg1[%c0_1, %c0_2] : memref<64x256xf32, #tpu.memory_space<vmem>>, vector<64x256xf32>
    %cst = arith.constant dense<0.000000e+00> : vector<2x256xf32>
    %2 = tpu.matmul %0, %1, %cst {dimension_numbers = #tpu.dot_dimension_numbers<[1], [0], [0], [1], [0, 0, 1, 1], [], []>} : vector<2x64xf32>, vector<64x256xf32>, vector<2x256xf32> -> vector<2x256xf32>
    %c0_3 = arith.constant 0 : index
    %c0_4 = arith.constant 0 : index
    %3 = vector.load %arg2[%c0_3, %c0_4] : memref<1x256xf32, #tpu.memory_space<vmem>>, vector<1x256xf32>
    %4 = vector.broadcast %3 : vector<1x256xf32> to vector<2x256xf32>
    %5 = arith.addf %2, %4 : vector<2x256xf32>
    %6 = vector.extract_strided_slice %5 {offsets = [0, 0], sizes = [2, 128], strides = [1, 1]} : vector<2x256xf32> to vector<2x128xf32>
    %7 = vector.extract_strided_slice %5 {offsets = [0, 128], sizes = [2, 128], strides = [1, 1]} : vector<2x256xf32> to vector<2x128xf32>
    %8 = arith.maximumf %6, %7 : vector<2x128xf32>
    %c0_5 = arith.constant 0 : index
    %c0_6 = arith.constant 0 : index
    %9 = vector.load %arg3[%c0_5, %c0_6] : memref<128x8xf32, #tpu.memory_space<vmem>>, vector<128x8xf32>
    %cst_7 = arith.constant dense<0.000000e+00> : vector<2x8xf32>
    %10 = tpu.matmul %8, %9, %cst_7 {dimension_numbers = #tpu.dot_dimension_numbers<[1], [0], [0], [1], [0, 0, 1, 1], [], []>} : vector<2x128xf32>, vector<128x8xf32>, vector<2x8xf32> -> vector<2x8xf32>
    %c0_8 = arith.constant 0 : index
    %c0_9 = arith.constant 0 : index
    %11 = vector.load %arg4[%c0_8, %c0_9] : memref<1x8xf32, #tpu.memory_space<vmem>>, vector<1x8xf32>
    %12 = vector.broadcast %11 : vector<1x8xf32> to vector<2x8xf32>
    %13 = arith.addf %10, %12 : vector<2x8xf32>
    %cst_10 = arith.constant 0.000000e+00 : f32
    %14 = vector.broadcast %cst_10 : f32 to vector<2x8xf32>
    %15 = arith.maximumf %13, %14 : vector<2x8xf32>
    %c0_11 = arith.constant 0 : index
    %c0_12 = arith.constant 0 : index
    %16 = vector.load %arg5[%c0_11, %c0_12] : memref<2x1536xf32, #tpu.memory_space<vmem>>, vector<2x1536xf32>
    %c0_13 = arith.constant 0 : index
    %c0_14 = arith.constant 0 : index
    %17 = vector.load %arg7[%c0_13, %c0_14] : memref<384x1536xbf16, #tpu.memory_space<vmem>>, vector<384x1536xbf16>
    %c0_15 = arith.constant 0 : index
    %c0_16 = arith.constant 0 : index
    %18 = vector.load %arg6[%c0_15, %c0_16] : memref<1x1536xf32, #tpu.memory_space<vmem>>, vector<1x1536xf32>
    %cst_17 = arith.constant 0.000000e+00 : f32
    %19 = vector.broadcast %cst_17 : f32 to vector<2x384xf32>
    %20 = vector.extract_strided_slice %15 {offsets = [0, 0], sizes = [2, 2], strides = [1, 1]} : vector<2x8xf32> to vector<2x2xf32>
    %cst_18 = arith.constant dense<0.000000e+00> : vector<2x1536xf32>
    %21 = tpu.matmul %20, %16, %cst_18 {dimension_numbers = #tpu.dot_dimension_numbers<[1], [0], [0], [1], [0, 0, 1, 1], [], []>} : vector<2x2xf32>, vector<2x1536xf32>, vector<2x1536xf32> -> vector<2x1536xf32>
    %22 = vector.broadcast %18 : vector<1x1536xf32> to vector<2x1536xf32>
    %23 = arith.addf %21, %22 : vector<2x1536xf32>
    %24 = vector.extract_strided_slice %23 {offsets = [0, 0], sizes = [2, 384], strides = [1, 1]} : vector<2x1536xf32> to vector<2x384xf32>
    %25 = arith.negf %24 : vector<2x384xf32>
    %26 = math.exp %25 : vector<2x384xf32>
    %cst_19 = arith.constant 1.000000e+00 : f32
    %27 = vector.broadcast %cst_19 : f32 to vector<2x384xf32>
    %28 = arith.addf %27, %26 : vector<2x384xf32>
    %29 = arith.divf %27, %28 : vector<2x384xf32>
    %30 = vector.extract_strided_slice %23 {offsets = [0, 384], sizes = [2, 384], strides = [1, 1]} : vector<2x1536xf32> to vector<2x384xf32>
    %31 = arith.negf %30 : vector<2x384xf32>
    %32 = math.exp %31 : vector<2x384xf32>
    %cst_20 = arith.constant 1.000000e+00 : f32
    %33 = vector.broadcast %cst_20 : f32 to vector<2x384xf32>
    %34 = arith.addf %33, %32 : vector<2x384xf32>
    %35 = arith.divf %33, %34 : vector<2x384xf32>
    %36 = vector.extract_strided_slice %23 {offsets = [0, 768], sizes = [2, 384], strides = [1, 1]} : vector<2x1536xf32> to vector<2x384xf32>
    %37 = math.tanh %36 : vector<2x384xf32>
    %38 = vector.extract_strided_slice %23 {offsets = [0, 1152], sizes = [2, 384], strides = [1, 1]} : vector<2x1536xf32> to vector<2x384xf32>
    %39 = arith.negf %38 : vector<2x384xf32>
    %40 = math.exp %39 : vector<2x384xf32>
    %cst_21 = arith.constant 1.000000e+00 : f32
    %41 = vector.broadcast %cst_21 : f32 to vector<2x384xf32>
    %42 = arith.addf %41, %40 : vector<2x384xf32>
    %43 = arith.divf %41, %42 : vector<2x384xf32>
    %44 = arith.mulf %35, %19 : vector<2x384xf32>
    %45 = arith.mulf %29, %37 : vector<2x384xf32>
    %46 = arith.addf %44, %45 : vector<2x384xf32>
    %47 = math.tanh %46 : vector<2x384xf32>
    %48 = arith.mulf %43, %47 : vector<2x384xf32>
    %49 = vector.extract_strided_slice %15 {offsets = [0, 2], sizes = [2, 2], strides = [1, 1]} : vector<2x8xf32> to vector<2x2xf32>
    %cst_22 = arith.constant dense<0.000000e+00> : vector<2x1536xf32>
    %50 = tpu.matmul %49, %16, %cst_22 {dimension_numbers = #tpu.dot_dimension_numbers<[1], [0], [0], [1], [0, 0, 1, 1], [], []>} : vector<2x2xf32>, vector<2x1536xf32>, vector<2x1536xf32> -> vector<2x1536xf32>
    %51 = vector.broadcast %18 : vector<1x1536xf32> to vector<2x1536xf32>
    %52 = arith.addf %50, %51 : vector<2x1536xf32>
    %53 = arith.truncf %48 : vector<2x384xf32> to vector<2x384xbf16>
    %cst_23 = arith.constant dense<0.000000e+00> : vector<2x1536xf32>
    %54 = tpu.matmul %53, %17, %cst_23 {dimension_numbers = #tpu.dot_dimension_numbers<[1], [0], [0], [1], [0, 0, 1, 1], [], []>} : vector<2x384xbf16>, vector<384x1536xbf16>, vector<2x1536xf32> -> vector<2x1536xf32>
    %55 = arith.addf %52, %54 : vector<2x1536xf32>
    %56 = vector.extract_strided_slice %55 {offsets = [0, 0], sizes = [2, 384], strides = [1, 1]} : vector<2x1536xf32> to vector<2x384xf32>
    %57 = arith.negf %56 : vector<2x384xf32>
    %58 = math.exp %57 : vector<2x384xf32>
    %cst_24 = arith.constant 1.000000e+00 : f32
    %59 = vector.broadcast %cst_24 : f32 to vector<2x384xf32>
    %60 = arith.addf %59, %58 : vector<2x384xf32>
    %61 = arith.divf %59, %60 : vector<2x384xf32>
    %62 = vector.extract_strided_slice %55 {offsets = [0, 384], sizes = [2, 384], strides = [1, 1]} : vector<2x1536xf32> to vector<2x384xf32>
    %63 = arith.negf %62 : vector<2x384xf32>
    %64 = math.exp %63 : vector<2x384xf32>
    %cst_25 = arith.constant 1.000000e+00 : f32
    %65 = vector.broadcast %cst_25 : f32 to vector<2x384xf32>
    %66 = arith.addf %65, %64 : vector<2x384xf32>
    %67 = arith.divf %65, %66 : vector<2x384xf32>
    %68 = vector.extract_strided_slice %55 {offsets = [0, 768], sizes = [2, 384], strides = [1, 1]} : vector<2x1536xf32> to vector<2x384xf32>
    %69 = math.tanh %68 : vector<2x384xf32>
    %70 = vector.extract_strided_slice %55 {offsets = [0, 1152], sizes = [2, 384], strides = [1, 1]} : vector<2x1536xf32> to vector<2x384xf32>
    %71 = arith.negf %70 : vector<2x384xf32>
    %72 = math.exp %71 : vector<2x384xf32>
    %cst_26 = arith.constant 1.000000e+00 : f32
    %73 = vector.broadcast %cst_26 : f32 to vector<2x384xf32>
    %74 = arith.addf %73, %72 : vector<2x384xf32>
    %75 = arith.divf %73, %74 : vector<2x384xf32>
    %76 = arith.mulf %67, %46 : vector<2x384xf32>
    %77 = arith.mulf %61, %69 : vector<2x384xf32>
    %78 = arith.addf %76, %77 : vector<2x384xf32>
    %79 = math.tanh %78 : vector<2x384xf32>
    %80 = arith.mulf %75, %79 : vector<2x384xf32>
    %81 = vector.extract_strided_slice %15 {offsets = [0, 4], sizes = [2, 2], strides = [1, 1]} : vector<2x8xf32> to vector<2x2xf32>
    %cst_27 = arith.constant dense<0.000000e+00> : vector<2x1536xf32>
    %82 = tpu.matmul %81, %16, %cst_27 {dimension_numbers = #tpu.dot_dimension_numbers<[1], [0], [0], [1], [0, 0, 1, 1], [], []>} : vector<2x2xf32>, vector<2x1536xf32>, vector<2x1536xf32> -> vector<2x1536xf32>
    %83 = vector.broadcast %18 : vector<1x1536xf32> to vector<2x1536xf32>
    %84 = arith.addf %82, %83 : vector<2x1536xf32>
    %85 = arith.truncf %80 : vector<2x384xf32> to vector<2x384xbf16>
    %cst_28 = arith.constant dense<0.000000e+00> : vector<2x1536xf32>
    %86 = tpu.matmul %85, %17, %cst_28 {dimension_numbers = #tpu.dot_dimension_numbers<[1], [0], [0], [1], [0, 0, 1, 1], [], []>} : vector<2x384xbf16>, vector<384x1536xbf16>, vector<2x1536xf32> -> vector<2x1536xf32>
    %87 = arith.addf %84, %86 : vector<2x1536xf32>
    %88 = vector.extract_strided_slice %87 {offsets = [0, 0], sizes = [2, 384], strides = [1, 1]} : vector<2x1536xf32> to vector<2x384xf32>
    %89 = arith.negf %88 : vector<2x384xf32>
    %90 = math.exp %89 : vector<2x384xf32>
    %cst_29 = arith.constant 1.000000e+00 : f32
    %91 = vector.broadcast %cst_29 : f32 to vector<2x384xf32>
    %92 = arith.addf %91, %90 : vector<2x384xf32>
    %93 = arith.divf %91, %92 : vector<2x384xf32>
    %94 = vector.extract_strided_slice %87 {offsets = [0, 384], sizes = [2, 384], strides = [1, 1]} : vector<2x1536xf32> to vector<2x384xf32>
    %95 = arith.negf %94 : vector<2x384xf32>
    %96 = math.exp %95 : vector<2x384xf32>
    %cst_30 = arith.constant 1.000000e+00 : f32
    %97 = vector.broadcast %cst_30 : f32 to vector<2x384xf32>
    %98 = arith.addf %97, %96 : vector<2x384xf32>
    %99 = arith.divf %97, %98 : vector<2x384xf32>
    %100 = vector.extract_strided_slice %87 {offsets = [0, 768], sizes = [2, 384], strides = [1, 1]} : vector<2x1536xf32> to vector<2x384xf32>
    %101 = math.tanh %100 : vector<2x384xf32>
    %102 = vector.extract_strided_slice %87 {offsets = [0, 1152], sizes = [2, 384], strides = [1, 1]} : vector<2x1536xf32> to vector<2x384xf32>
    %103 = arith.negf %102 : vector<2x384xf32>
    %104 = math.exp %103 : vector<2x384xf32>
    %cst_31 = arith.constant 1.000000e+00 : f32
    %105 = vector.broadcast %cst_31 : f32 to vector<2x384xf32>
    %106 = arith.addf %105, %104 : vector<2x384xf32>
    %107 = arith.divf %105, %106 : vector<2x384xf32>
    %108 = arith.mulf %99, %78 : vector<2x384xf32>
    %109 = arith.mulf %93, %101 : vector<2x384xf32>
    %110 = arith.addf %108, %109 : vector<2x384xf32>
    %111 = math.tanh %110 : vector<2x384xf32>
    %112 = arith.mulf %107, %111 : vector<2x384xf32>
    %113 = vector.extract_strided_slice %15 {offsets = [0, 6], sizes = [2, 2], strides = [1, 1]} : vector<2x8xf32> to vector<2x2xf32>
    %cst_32 = arith.constant dense<0.000000e+00> : vector<2x1536xf32>
    %114 = tpu.matmul %113, %16, %cst_32 {dimension_numbers = #tpu.dot_dimension_numbers<[1], [0], [0], [1], [0, 0, 1, 1], [], []>} : vector<2x2xf32>, vector<2x1536xf32>, vector<2x1536xf32> -> vector<2x1536xf32>
    %115 = vector.broadcast %18 : vector<1x1536xf32> to vector<2x1536xf32>
    %116 = arith.addf %114, %115 : vector<2x1536xf32>
    %117 = arith.truncf %112 : vector<2x384xf32> to vector<2x384xbf16>
    %cst_33 = arith.constant dense<0.000000e+00> : vector<2x1536xf32>
    %118 = tpu.matmul %117, %17, %cst_33 {dimension_numbers = #tpu.dot_dimension_numbers<[1], [0], [0], [1], [0, 0, 1, 1], [], []>} : vector<2x384xbf16>, vector<384x1536xbf16>, vector<2x1536xf32> -> vector<2x1536xf32>
    %119 = arith.addf %116, %118 : vector<2x1536xf32>
    %120 = vector.extract_strided_slice %119 {offsets = [0, 0], sizes = [2, 384], strides = [1, 1]} : vector<2x1536xf32> to vector<2x384xf32>
    %121 = arith.negf %120 : vector<2x384xf32>
    %122 = math.exp %121 : vector<2x384xf32>
    %cst_34 = arith.constant 1.000000e+00 : f32
    %123 = vector.broadcast %cst_34 : f32 to vector<2x384xf32>
    %124 = arith.addf %123, %122 : vector<2x384xf32>
    %125 = arith.divf %123, %124 : vector<2x384xf32>
    %126 = vector.extract_strided_slice %119 {offsets = [0, 384], sizes = [2, 384], strides = [1, 1]} : vector<2x1536xf32> to vector<2x384xf32>
    %127 = arith.negf %126 : vector<2x384xf32>
    %128 = math.exp %127 : vector<2x384xf32>
    %cst_35 = arith.constant 1.000000e+00 : f32
    %129 = vector.broadcast %cst_35 : f32 to vector<2x384xf32>
    %130 = arith.addf %129, %128 : vector<2x384xf32>
    %131 = arith.divf %129, %130 : vector<2x384xf32>
    %132 = vector.extract_strided_slice %119 {offsets = [0, 768], sizes = [2, 384], strides = [1, 1]} : vector<2x1536xf32> to vector<2x384xf32>
    %133 = math.tanh %132 : vector<2x384xf32>
    %134 = vector.extract_strided_slice %119 {offsets = [0, 1152], sizes = [2, 384], strides = [1, 1]} : vector<2x1536xf32> to vector<2x384xf32>
    %135 = arith.negf %134 : vector<2x384xf32>
    %136 = math.exp %135 : vector<2x384xf32>
    %cst_36 = arith.constant 1.000000e+00 : f32
    %137 = vector.broadcast %cst_36 : f32 to vector<2x384xf32>
    %138 = arith.addf %137, %136 : vector<2x384xf32>
    %139 = arith.divf %137, %138 : vector<2x384xf32>
    %140 = arith.mulf %131, %110 : vector<2x384xf32>
    %141 = arith.mulf %125, %133 : vector<2x384xf32>
    %142 = arith.addf %140, %141 : vector<2x384xf32>
    %143 = math.tanh %142 : vector<2x384xf32>
    %144 = arith.mulf %139, %143 : vector<2x384xf32>
    %c0_37 = arith.constant 0 : index
    %c0_38 = arith.constant 0 : index
    %145 = vector.load %arg8[%c0_37, %c0_38] : memref<384x1xf32, #tpu.memory_space<vmem>>, vector<384x1xf32>
    %cst_39 = arith.constant dense<0.000000e+00> : vector<2x1xf32>
    %146 = tpu.matmul %144, %145, %cst_39 {dimension_numbers = #tpu.dot_dimension_numbers<[1], [0], [0], [1], [0, 0, 1, 1], [], []>} : vector<2x384xf32>, vector<384x1xf32>, vector<2x1xf32> -> vector<2x1xf32>
    %c0_40 = arith.constant 0 : index
    %c0_41 = arith.constant 0 : index
    %147 = vector.load %arg9[%c0_40, %c0_41] : memref<1x1xf32, #tpu.memory_space<vmem>>, vector<1x1xf32>
    %148 = vector.broadcast %147 : vector<1x1xf32> to vector<2x1xf32>
    %149 = arith.addf %146, %148 : vector<2x1xf32>
    %150 = arith.negf %149 : vector<2x1xf32>
    %151 = math.exp %150 : vector<2x1xf32>
    %cst_42 = arith.constant 1.000000e+00 : f32
    %152 = vector.broadcast %cst_42 : f32 to vector<2x1xf32>
    %153 = arith.addf %152, %151 : vector<2x1xf32>
    %154 = arith.divf %152, %153 : vector<2x1xf32>
    %c0_43 = arith.constant 0 : index
    %c0_44 = arith.constant 0 : index
    %155 = vector.load %arg10[%c0_43, %c0_44] : memref<2x1xf32, #tpu.memory_space<vmem>>, vector<2x1xf32>
    tpu.vector_store %arg10[%c0_43, %c0_44], %154 {strides = array<i32>} : memref<2x1xf32, #tpu.memory_space<vmem>>, vector<2x1xf32>,
    return
  }
}

</mosaic_0001>

<llo_original>
// kernel: magnitude7_forward.1
$region0: #{magnitude7_forward.1}
  #allocation0 [shape = 'u32[]', space=smem, size = 0x4, offset = 0x4, fixed_abs, tag = 'smem constant byte address 0x4 - core index']
  #allocation1 [shape = 'u32[144,128]{1,0:T(1,128)}', space=vmem, size = 0x12000, scoped, tag = 'internal scratch']
  #allocation2 [shape = 'f32[1,1]{1,0:T(1,128)S(1)}', space=vmem, size = 0x200, scoped, tag = 'scoped memory for magnitude7_forward.1']
  %s0 = inlined_call_operand.vmem [shape: f32[2,64], index: 0, kind: input, shape index: {}]
  %s1 = inlined_call_operand.hbm [shape: f32[64,256], index: 1, kind: input, shape index: {}]
  %s2 = inlined_call_operand.hbm [shape: f32[1,256], index: 2, kind: input, shape index: {}]
  %s3 = inlined_call_operand.vmem [shape: f32[128,8], index: 3, kind: input, shape index: {}]
  %s4 = inlined_call_operand.hbm [shape: f32[1,8], index: 4, kind: input, shape index: {}]
  %s5 = inlined_call_operand.hbm [shape: f32[2,1536], index: 5, kind: input, shape index: {}]
  %s6 = inlined_call_operand.hbm [shape: f32[1,1536], index: 6, kind: input, shape index: {}]
  %s7 = inlined_call_operand.hbm [shape: bf16[384,1536], index: 7, kind: input, shape index: {}]
  %s8 = inlined_call_operand.vmem [shape: f32[384,1], index: 8, kind: input, shape index: {}]
  %s9 = inlined_call_operand.<no memory space> [shape: f32[1,1], index: 9, kind: input, shape index: {}]
  %s10 = inlined_call_operand.vmem [shape: f32[2,1], index: 10, kind: output, shape index: {}]
  %s11 = sld [smem:[#allocation0]]
  $region74: #{magnitude7_forward.1} parent=0
    _
  %s13 = ssub.s32 1, %s11
  %s14 = scalar_select 0, %s13, %s11
  %v15 = vstv %s9
  %16 = vst [vmem:[#allocation2] sm:$0x1] %v15
  $region1: #{magnitude7_forward.1} parent=0
    #allocation3 [shape = 'u8[65536]{0}', space=vmem, size = 0x10000, scoped, tag = 'input window, operand 1, single buffered']
    #allocation4 [shape = 's32[1]{0}', space=sflag, size = 0x4, scoped, tag = 'scoped memory for magnitude7_forward.1']
    #allocation5 [shape = 'u8[1024]{0}', space=vmem, size = 0x400, scoped, tag = 'input window, operand 2, single buffered']
    #allocation6 [shape = 's32[1]{0}', space=sflag, size = 0x4, scoped, tag = 'scoped memory for magnitude7_forward.1']
    #allocation7 [shape = 'u8[512]{0}', space=vmem, size = 0x400, scoped, tag = 'input window, operand 4, single buffered']
    #allocation8 [shape = 'u8[12288]{0}', space=vmem, size = 0x3000, scoped, tag = 'input window, operand 5, single buffered']
    #allocation9 [shape = 's32[1]{0}', space=sflag, size = 0x4, scoped, tag = 'scoped memory for magnitude7_forward.1']
    #allocation10 [shape = 'u8[6144]{0}', space=vmem, size = 0x1800, scoped, tag = 'input window, operand 6, single buffered']
    #allocation11 [shape = 'u8[1179648]{0}', space=vmem, size = 0x120000, scoped, tag = 'input window, operand 7, single buffered']
    #allocation12 [shape = 's32[1]{0}', space=sflag, size = 0x4, scoped, tag = 'scoped memory for magnitude7_forward.1']
    %17 = vsyncpa [#allocation4], 0
    %18 = vsyncpa [#allocation6], 0
    %19 = vsyncpa [#allocation9], 0
    %20 = vsyncpa [#allocation12], 0
    // Predicated region
    $region2: #{magnitude7_forward.1} parent=1 // pred_check
      _
    $region3: #{magnitude7_forward.1} parent=1 // pred_check_branch
      %22 = sbr.rel (0) target = $region5
    $region4: #{magnitude7_forward.1} parent=1 // pred_region
      _
    $region5: #{magnitude7_forward.1} parent=1 // pred_fallthru
      _
    // Predicated region
    $region6: #{magnitude7_forward.1} parent=1 // pred_check
      _
    $region7: #{magnitude7_forward.1} parent=1 // pred_check_branch
      %24 = sbr.rel (0) target = $region9
    $region8: #{magnitude7_forward.1} parent=1 // pred_region
      %s26 = ssub.s32 2048, 2048
      %27 = vsyncadd [#allocation4], %s26
      %s28 = sshll.u32 [#allocation3], 4
      %s29 = int_to_ptr.vmem [resolvable:$true] %s28
      %34 = dma.hbm_to_vmem [thread:$0]  %s1, 2048, %s29, [#allocation4], 256, 256, 16
    $region9: #{magnitude7_forward.1} parent=1 // pred_fallthru
      _
    // Predicated region
    $region10: #{magnitude7_forward.1} parent=1 // pred_check
      _
    $region11: #{magnitude7_forward.1} parent=1 // pred_check_branch
      %36 = sbr.rel (0) target = $region13
    $region12: #{magnitude7_forward.1} parent=1 // pred_region
      %s38 = ssub.s32 32, 32
      %39 = vsyncadd [#allocation6], %s38
      %s41 = sshll.u32 [#allocation5], 4
      %s42 = int_to_ptr.vmem [resolvable:$true] %s41
      %44 = dma.hbm_to_vmem [thread:$0]  %s2, 32, %s42, [#allocation6]
    $region13: #{magnitude7_forward.1} parent=1 // pred_fallthru
      _
    // Predicated region
    $region14: #{magnitude7_forward.1} parent=1 // pred_check
      _
    $region15: #{magnitude7_forward.1} parent=1 // pred_check_branch
      %46 = sbr.rel (0) target = $region17
    $region16: #{magnitude7_forward.1} parent=1 // pred_region
      _
    $region17: #{magnitude7_forward.1} parent=1 // pred_fallthru
      _
    // Predicated region
    $region18: #{magnitude7_forward.1} parent=1 // pred_check
      _
    $region19: #{magnitude7_forward.1} parent=1 // pred_check_branch
      %48 = sbr.rel (0) target = $region21
    $region20: #{magnitude7_forward.1} parent=1 // pred_region
      %s50 = ssub.s32 16, 16
      %51 = vsyncadd [#allocation6], %s50
      %s53 = sshll.u32 [#allocation7], 4
      %s54 = int_to_ptr.vmem [resolvable:$true] %s53
      %56 = dma.hbm_to_vmem [thread:$0]  %s4, 16, %s54, [#allocation6]
    $region21: #{magnitude7_forward.1} parent=1 // pred_fallthru
      _
    // Predicated region
    $region22: #{magnitude7_forward.1} parent=1 // pred_check
      _
    $region23: #{magnitude7_forward.1} parent=1 // pred_check_branch
      %58 = sbr.rel (0) target = $region25
    $region24: #{magnitude7_forward.1} parent=1 // pred_region
      %s60 = ssub.s32 384, 384
      %61 = vsyncadd [#allocation9], %s60
      %s63 = sshll.u32 [#allocation8], 4
      %s64 = int_to_ptr.vmem [resolvable:$true] %s63
      %66 = dma.hbm_to_vmem [thread:$0]  %s5, 384, %s64, [#allocation9]
    $region25: #{magnitude7_forward.1} parent=1 // pred_fallthru
      _
    // Predicated region
    $region26: #{magnitude7_forward.1} parent=1 // pred_check
      _
    $region27: #{magnitude7_forward.1} parent=1 // pred_check_branch
      %68 = sbr.rel (0) target = $region29
    $region28: #{magnitude7_forward.1} parent=1 // pred_region
      %s70 = ssub.s32 192, 192
      %71 = vsyncadd [#allocation9], %s70
      %s73 = sshll.u32 [#allocation10], 4
      %s74 = int_to_ptr.vmem [resolvable:$true] %s73
      %76 = dma.hbm_to_vmem [thread:$0]  %s6, 192, %s74, [#allocation9]
    $region29: #{magnitude7_forward.1} parent=1 // pred_fallthru
      _
    // Predicated region
    $region30: #{magnitude7_forward.1} parent=1 // pred_check
      _
    $region31: #{magnitude7_forward.1} parent=1 // pred_check_branch
      %78 = sbr.rel (0) target = $region33
    $region32: #{magnitude7_forward.1} parent=1 // pred_region
      %s80 = ssub.s32 36864, 36864
      %81 = vsyncadd [#allocation12], %s80
      %s82 = sshll.u32 [#allocation11], 4
      %s83 = int_to_ptr.vmem [resolvable:$true] %s82
      %88 = dma.hbm_to_vmem [thread:$0]  %s7, 36864, %s83, [#allocation12], 768, 768, 48
    $region33: #{magnitude7_forward.1} parent=1 // pred_fallthru
      _
    // Predicated region
    $region34: #{magnitude7_forward.1} parent=1 // pred_check
      _
    $region35: #{magnitude7_forward.1} parent=1 // pred_check_branch
      %90 = sbr.rel (0) target = $region37
    $region36: #{magnitude7_forward.1} parent=1 // pred_region
      _
    $region37: #{magnitude7_forward.1} parent=1 // pred_fallthru
      _
    // Predicated region
    $region38: #{magnitude7_forward.1} parent=1 // pred_check
      _
    $region39: #{magnitude7_forward.1} parent=1 // pred_check_branch
      %92 = sbr.rel (0) target = $region41
    $region40: #{magnitude7_forward.1} parent=1 // pred_region
      _
    $region41: #{magnitude7_forward.1} parent=1 // pred_fallthru
      _
    // Predicated region
    $region42: #{magnitude7_forward.1} parent=1 // pred_check
      _
    $region43: #{magnitude7_forward.1} parent=1 // pred_check_branch
      %94 = sbr.rel (0) target = $region45
    $region44: #{magnitude7_forward.1} parent=1 // pred_region
      %95 = dma.done [#allocation4], 2048
    $region45: #{magnitude7_forward.1} parent=1 // pred_fallthru
      _
    // Predicated region
    $region46: #{magnitude7_forward.1} parent=1 // pred_check
      _
    $region47: #{magnitude7_forward.1} parent=1 // pred_check_branch
      %97 = sbr.rel (0) target = $region49
    $region48: #{magnitude7_forward.1} parent=1 // pred_region
      %98 = dma.done [#allocation6], 32
    $region49: #{magnitude7_forward.1} parent=1 // pred_fallthru
      _
    // Predicated region
    $region50: #{magnitude7_forward.1} parent=1 // pred_check
      _
    $region51: #{magnitude7_forward.1} parent=1 // pred_check_branch
      %100 = sbr.rel (0) target = $region53
    $region52: #{magnitude7_forward.1} parent=1 // pred_region
      %101 = dma.done [#allocation6], 16
    $region53: #{magnitude7_forward.1} parent=1 // pred_fallthru
      _
    // Predicated region
    $region54: #{magnitude7_forward.1} parent=1 // pred_check
      _
    $region55: #{magnitude7_forward.1} parent=1 // pred_check_branch
      %103 = sbr.rel (0) target = $region57
    $region56: #{magnitude7_forward.1} parent=1 // pred_region
      %104 = dma.done [#allocation9], 384
    $region57: #{magnitude7_forward.1} parent=1 // pred_fallthru
      _
    // Predicated region
    $region58: #{magnitude7_forward.1} parent=1 // pred_check
      _
    $region59: #{magnitude7_forward.1} parent=1 // pred_check_branch
      %106 = sbr.rel (0) target = $region61
    $region60: #{magnitude7_forward.1} parent=1 // pred_region
      %107 = dma.done [#allocation9], 192
    $region61: #{magnitude7_forward.1} parent=1 // pred_fallthru
      _
    // Predicated region
    $region62: #{magnitude7_forward.1} parent=1 // pred_check
      _
    $region63: #{magnitude7_forward.1} parent=1 // pred_check_branch
      %109 = sbr.rel (0) target = $region65
    $region64: #{magnitude7_forward.1} parent=1 // pred_region
      %110 = dma.done [#allocation12], 36864
    $region65: #{magnitude7_forward.1} parent=1 // pred_fallthru
      _
    %v112 = vld [vmem:[%s0] sm:$0x3]
    %v113 = vld [vmem:[#allocation3] sm:$0xff]
    %v114 = vld [vmem:[#allocation3 + $0x8] sm:$0xff]
    %v115 = vld [vmem:[#allocation3 + $0x10] sm:$0xff]
    %v116 = vld [vmem:[#allocation3 + $0x18] sm:$0xff]
    %v117 = vld [vmem:[#allocation3 + $0x20] sm:$0xff]
    %v118 = vld [vmem:[#allocation3 + $0x28] sm:$0xff]
    %v119 = vld [vmem:[#allocation3 + $0x30] sm:$0xff]
    %v120 = vld [vmem:[#allocation3 + $0x38] sm:$0xff]
    %v121 = vld [vmem:[#allocation3 + $0x40] sm:$0xff]
    %v122 = vld [vmem:[#allocation3 + $0x48] sm:$0xff]
    %v123 = vld [vmem:[#allocation3 + $0x50] sm:$0xff]
    %v124 = vld [vmem:[#allocation3 + $0x58] sm:$0xff]
    %v125 = vld [vmem:[#allocation3 + $0x60] sm:$0xff]
    %v126 = vld [vmem:[#allocation3 + $0x68] sm:$0xff]
    %v127 = vld [vmem:[#allocation3 + $0x70] sm:$0xff]
    %v128 = vld [vmem:[#allocation3 + $0x78] sm:$0xff]
    %v129 = vld [vmem:[#allocation5] sm:$0x3]
    %v131 = vlaneseq
    %v132 = vshrl.u32 %v131, 7
    %v133 = vsub.s32 0, %v132
    %v134 = vrot.slane %v129, %v133
    %v135 = vlaneseq
    %v136 = vshrl.u32 %v135, 7
    %v137 = vsub.s32 1, %v136
    %v138 = vrot.slane %v129, %v137
    %vm141 = vcmask 523264
    %v143 = vsel %vm141, %v112, 0
    %145 = vmatprep.subr.mxu0 %v114
    %146 = vmatpush1.msra.mxu0 %v113
    %147 = vmatprep.subr.mxu0 %v116
    %148 = vmatpush1.msra.mxu0 %v115
    %149 = vmatprep.subr.mxu0 %v118
    %150 = vmatpush1.msra.mxu0 %v117
    %151 = vmatprep.subr.mxu0 %v120
    %152 = vmatpush1.msra.mxu0 %v119
    %153 = vmatprep.subr.mxu0 %v122
    %154 = vmatpush1.msra.mxu0 %v121
    %155 = vmatprep.subr.mxu0 %v124
    %156 = vmatpush1.msra.mxu0 %v123
    %157 = vmatprep.subr.mxu0 %v126
    %158 = vmatpush1.msra.mxu0 %v125
    %159 = vmatprep.subr.mxu0 %v128
    %160 = vmatpush1.msra.mxu0 %v127
    %161 = vmatprep.subr.mxu0 0.0
    %162 = vmatpush1.msra.mxu0 0.0
    %163 = vmatprep.subr.mxu0 0.0
    %164 = vmatpush1.msra.mxu0 0.0
    %165 = vmatprep.subr.mxu0 0.0
    %166 = vmatpush1.msra.mxu0 0.0
    %167 = vmatprep.subr.mxu0 0.0
    %168 = vmatpush1.msra.mxu0 0.0
    %169 = vmatprep.subr.mxu0 0.0
    %170 = vmatpush1.msra.mxu0 0.0
    %171 = vmatprep.subr.mxu0 0.0
    %172 = vmatpush1.msra.mxu0 0.0
    %173 = vmatprep.subr.mxu0 0.0
    %174 = vmatpush1.msra.mxu0 0.0
    %175 = vmatprep.subr.mxu0 0.0
    %176 = vmatpush1.msra.mxu0 0.0
    %177 = vmatprep.subr.mxu0 0.0
    %178 = vmatpush1.msra.mxu0 0.0
    %179 = vmatprep.subr.mxu0 0.0
    %180 = vmatpush1.msra.mxu0 0.0
    %181 = vmatprep.subr.mxu0 0.0
    %182 = vmatpush1.msra.mxu0 0.0
    %183 = vmatprep.subr.mxu0 0.0
    %184 = vmatpush1.msra.mxu0 0.0
    %185 = vmatprep.subr.mxu0 0.0
    %186 = vmatpush1.msra.mxu0 0.0
    %187 = vmatprep.subr.mxu0 0.0
    %188 = vmatpush1.msra.mxu0 0.0
    %189 = vmatprep.subr.mxu0 0.0
    %190 = vmatpush1.msra.mxu0 0.0
    %191 = vmatprep.subr.mxu0 0.0
    %192 = vmatpush1.msra.mxu0 0.0
    %193 = vmatprep.subr.mxu0 0.0
    %194 = vmatpush1.msra.mxu0 0.0
    %195 = vmatprep.subr.mxu0 0.0
    %196 = vmatpush1.msra.mxu0 0.0
    %197 = vmatprep.subr.mxu0 0.0
    %198 = vmatpush1.msra.mxu0 0.0
    %199 = vmatprep.subr.mxu0 0.0
    %200 = vmatpush1.msra.mxu0 0.0
    %201 = vmatprep.subr.mxu0 0.0
    %202 = vmatpush1.msra.mxu0 0.0
    %203 = vmatprep.subr.mxu0 0.0
    %204 = vmatpush1.msra.mxu0 0.0
    %205 = vmatprep.subr.mxu0 0.0
    %206 = vmatpush1.msra.mxu0 0.0
    %207 = vmatprep.subr.mxu0 0.0
    %208 = vmatpush1.msra.mxu0 0.0
    %209 = vmatprep.mubr.f32.mxu0 0.0
    %210 = vmatmul.mubr.f32.gmra.mrb[0].mxu0 %v143
    %v211 = vpop.f32.mrb[0].mxu0
    %v212 = vadd.f32 %v134, %v211
    %v213 = vpop.f32.mrb[0].mxu0
    %v214 = vadd.f32 %v138, %v213
    %215 = vdwg.mxu0
    %v216 = vmax.f32 %v212, %v214
    %v217 = vld [vmem:[%s3] sm:$0xff]
    %v218 = vld [vmem:[%s3 + $0x8] sm:$0xff]
    %v219 = vld [vmem:[%s3 + $0x10] sm:$0xff]
    %v220 = vld [vmem:[%s3 + $0x18] sm:$0xff]
    %v221 = vld [vmem:[%s3 + $0x20] sm:$0xff]
    %v222 = vld [vmem:[%s3 + $0x28] sm:$0xff]
    %v223 = vld [vmem:[%s3 + $0x30] sm:$0xff]
    %v224 = vld [vmem:[%s3 + $0x38] sm:$0xff]
    %v225 = vld [vmem:[%s3 + $0x40] sm:$0xff]
    %v226 = vld [vmem:[%s3 + $0x48] sm:$0xff]
    %v227 = vld [vmem:[%s3 + $0x50] sm:$0xff]
    %v228 = vld [vmem:[%s3 + $0x58] sm:$0xff]
    %v229 = vld [vmem:[%s3 + $0x60] sm:$0xff]
    %v230 = vld [vmem:[%s3 + $0x68] sm:$0xff]
    %v231 = vld [vmem:[%s3 + $0x70] sm:$0xff]
    %v232 = vld [vmem:[%s3 + $0x78] sm:$0xff]
    %v233 = vld [vmem:[#allocation7] sm:$0x1]
    %v235 = vlaneseq
    %v236 = vshrl.u32 %v235, 7
    %v237 = vsub.s32 0, %v236
    %v238 = vrot.slane %v233, %v237
    %240 = vmatprep.subr.mxu0 0.0
    %241 = vmatpush1.msra.mxu0 %v217
    %242 = vmatprep.subr.mxu0 0.0
    %243 = vmatpush1.msra.mxu0 %v218
    %244 = vmatprep.subr.mxu0 0.0
    %245 = vmatpush1.msra.mxu0 %v219
    %246 = vmatprep.subr.mxu0 0.0
    %247 = vmatpush1.msra.mxu0 %v220
    %248 = vmatprep.subr.mxu0 0.0
    %249 = vmatpush1.msra.mxu0 %v221
    %250 = vmatprep.subr.mxu0 0.0
    %251 = vmatpush1.msra.mxu0 %v222
    %252 = vmatprep.subr.mxu0 0.0
    %253 = vmatpush1.msra.mxu0 %v223
    %254 = vmatprep.subr.mxu0 0.0
    %255 = vmatpush1.msra.mxu0 %v224
    %256 = vmatprep.subr.mxu0 0.0
    %257 = vmatpush1.msra.mxu0 %v225
    %258 = vmatprep.subr.mxu0 0.0
    %259 = vmatpush1.msra.mxu0 %v226
    %260 = vmatprep.subr.mxu0 0.0
    %261 = vmatpush1.msra.mxu0 %v227
    %262 = vmatprep.subr.mxu0 0.0
    %263 = vmatpush1.msra.mxu0 %v228
    %264 = vmatprep.subr.mxu0 0.0
    %265 = vmatpush1.msra.mxu0 %v229
    %266 = vmatprep.subr.mxu0 0.0
    %267 = vmatpush1.msra.mxu0 %v230
    %268 = vmatprep.subr.mxu0 0.0
    %269 = vmatpush1.msra.mxu0 %v231
    %270 = vmatprep.subr.mxu0 0.0
    %271 = vmatpush1.msra.mxu0 %v232
    %272 = vmatprep.subr.mxu0 0.0
    %273 = vmatpush1.msra.mxu0 0.0
    %274 = vmatprep.subr.mxu0 0.0
    %275 = vmatpush1.msra.mxu0 0.0
    %276 = vmatprep.subr.mxu0 0.0
    %277 = vmatpush1.msra.mxu0 0.0
    %278 = vmatprep.subr.mxu0 0.0
    %279 = vmatpush1.msra.mxu0 0.0
    %280 = vmatprep.subr.mxu0 0.0
    %281 = vmatpush1.msra.mxu0 0.0
    %282 = vmatprep.subr.mxu0 0.0
    %283 = vmatpush1.msra.mxu0 0.0
    %284 = vmatprep.subr.mxu0 0.0
    %285 = vmatpush1.msra.mxu0 0.0
    %286 = vmatprep.subr.mxu0 0.0
    %287 = vmatpush1.msra.mxu0 0.0
    %288 = vmatprep.subr.mxu0 0.0
    %289 = vmatpush1.msra.mxu0 0.0
    %290 = vmatprep.subr.mxu0 0.0
    %291 = vmatpush1.msra.mxu0 0.0
    %292 = vmatprep.subr.mxu0 0.0
    %293 = vmatpush1.msra.mxu0 0.0
    %294 = vmatprep.subr.mxu0 0.0
    %295 = vmatpush1.msra.mxu0 0.0
    %296 = vmatprep.subr.mxu0 0.0
    %297 = vmatpush1.msra.mxu0 0.0
    %298 = vmatprep.subr.mxu0 0.0
    %299 = vmatpush1.msra.mxu0 0.0
    %300 = vmatprep.subr.mxu0 0.0
    %301 = vmatpush1.msra.mxu0 0.0
    %302 = vmatprep.subr.mxu0 0.0
    %303 = vmatpush1.msra.mxu0 0.0
    %304 = vmatprep.mubr.f32.mxu0 0.0
    %305 = vmatmul.mubr.f32.gmra.mrb[0].mxu0 %v216
    %v306 = vpop.f32.mrb[0].mxu0
    %v307 = vadd.f32 %v238, %v306
    %v308 = vpop.f32.mrb[0].mxu0
    %309 = vdwg.mxu0
    %v310 = vmax.f32 %v307, 0.0
    %v311 = vld [vmem:[#allocation8] sm:$0xff]
    %v312 = vld [vmem:[#allocation8 + $0x8] sm:$0xff]
    %v313 = vld [vmem:[#allocation8 + $0x10] sm:$0xff]
    %v314 = vld [vmem:[#allocation11] sm:$0xff]
    %v315 = vld [vmem:[#allocation11 + $0x8] sm:$0xff]
    %v316 = vld [vmem:[#allocation11 + $0x10] sm:$0xff]
    %v317 = vld [vmem:[#allocation11 + $0x18] sm:$0xff]
    %v318 = vld [vmem:[#allocation11 + $0x20] sm:$0xff]
    %v319 = vld [vmem:[#allocation11 + $0x28] sm:$0xff]
    %v320 = vld [vmem:[#allocation11 + $0x30] sm:$0xff]
    %v321 = vld [vmem:[#allocation11 + $0x38] sm:$0xff]
    %v322 = vld [vmem:[#allocation11 + $0x40] sm:$0xff]
    %v323 = vld [vmem:[#allocation11 + $0x48] sm:$0xff]
    %v324 = vld [vmem:[#allocation11 + $0x50] sm:$0xff]
    %v325 = vld [vmem:[#allocation11 + $0x58] sm:$0xff]
    %v326 = vld [vmem:[#allocation11 + $0x60] sm:$0xff]
    %v327 = vld [vmem:[#allocation11 + $0x68] sm:$0xff]
    %v328 = vld [vmem:[#allocation11 + $0x70] sm:$0xff]
    %v329 = vld [vmem:[#allocation11 + $0x78] sm:$0xff]
    %v330 = vld [vmem:[#allocation11 + $0x80] sm:$0xff]
    %v331 = vld [vmem:[#allocation11 + $0x88] sm:$0xff]
    %v332 = vld [vmem:[#allocation11 + $0x90] sm:$0xff]
    %v333 = vld [vmem:[#allocation11 + $0x98] sm:$0xff]
    %v334 = vld [vmem:[#allocation11 + $0xa0] sm:$0xff]
    %v335 = vld [vmem:[#allocation11 + $0xa8] sm:$0xff]
    %v336 = vld [vmem:[#allocation11 + $0xb0] sm:$0xff]
    %v337 = vld [vmem:[#allocation11 + $0xb8] sm:$0xff]
    %v338 = vld [vmem:[#allocation11 + $0xc0] sm:$0xff]
    %v339 = vld [vmem:[#allocation11 + $0xc8] sm:$0xff]
    %v340 = vld [vmem:[#allocation11 + $0xd0] sm:$0xff]
    %v341 = vld [vmem:[#allocation11 + $0xd8] sm:$0xff]
    %v342 = vld [vmem:[#allocation11 + $0xe0] sm:$0xff]
    %v343 = vld [vmem:[#allocation11 + $0xe8] sm:$0xff]
    %v344 = vld [vmem:[#allocation11 + $0xf0] sm:$0xff]
    %v345 = vld [vmem:[#allocation11 + $0xf8] sm:$0xff]
    %v346 = vld [vmem:[#allocation11 + $0x100] sm:$0xff]
    %v347 = vld [vmem:[#allocation11 + $0x108] sm:$0xff]
    %v348 = vld [vmem:[#allocation11 + $0x110] sm:$0xff]
    %v349 = vld [vmem:[#allocation11 + $0x118] sm:$0xff]
    %v350 = vld [vmem:[#allocation11 + $0x120] sm:$0xff]
    %v351 = vld [vmem:[#allocation11 + $0x128] sm:$0xff]
    %v352 = vld [vmem:[#allocation11 + $0x130] sm:$0xff]
    %v353 = vld [vmem:[#allocation11 + $0x138] sm:$0xff]
    %v354 = vld [vmem:[#allocation11 + $0x140] sm:$0xff]
    %v355 = vld [vmem:[#allocation11 + $0x148] sm:$0xff]
    %v356 = vld [vmem:[#allocation11 + $0x150] sm:$0xff]
    %v357 = vld [vmem:[#allocation11 + $0x158] sm:$0xff]
    %v358 = vld [vmem:[#allocation11 + $0x160] sm:$0xff]
    %v359 = vld [vmem:[#allocation11 + $0x168] sm:$0xff]
    %v360 = vld [vmem:[#allocation11 + $0x170] sm:$0xff]
    %v361 = vld [vmem:[#allocation11 + $0x178] sm:$0xff]
    %v362 = vld [vmem:[#allocation11 + $0x180] sm:$0xff]
    %v363 = vld [vmem:[#allocation11 + $0x188] sm:$0xff]
    %v364 = vld [vmem:[#allocation11 + $0x190] sm:$0xff]
    %v365 = vld [vmem:[#allocation11 + $0x198] sm:$0xff]
    %v366 = vld [vmem:[#allocation11 + $0x1a0] sm:$0xff]
    %v367 = vld [vmem:[#allocation11 + $0x1a8] sm:$0xff]
    %v368 = vld [vmem:[#allocation11 + $0x1b0] sm:$0xff]
    %v369 = vld [vmem:[#allocation11 + $0x1b8] sm:$0xff]
    %v370 = vld [vmem:[#allocation11 + $0x1c0] sm:$0xff]
    %v371 = vld [vmem:[#allocation11 + $0x1c8] sm:$0xff]
    %v372 = vld [vmem:[#allocation11 + $0x1d0] sm:$0xff]
    %v373 = vld [vmem:[#allocation11 + $0x1d8] sm:$0xff]
    %v374 = vld [vmem:[#allocation11 + $0x1e0] sm:$0xff]
    %v375 = vld [vmem:[#allocation11 + $0x1e8] sm:$0xff]
    %v376 = vld [vmem:[#allocation11 + $0x1f0] sm:$0xff]
    %v377 = vld [vmem:[#allocation11 + $0x1f8] sm:$0xff]
    %v378 = vld [vmem:[#allocation11 + $0x200] sm:$0xff]
    %v379 = vld [vmem:[#allocation11 + $0x208] sm:$0xff]
    %v380 = vld [vmem:[#allocation11 + $0x210] sm:$0xff]
    %v381 = vld [vmem:[#allocation11 + $0x218] sm:$0xff]
    %v382 = vld [vmem:[#allocation11 + $0x220] sm:$0xff]
    %v383 = vld [vmem:[#allocation11 + $0x228] sm:$0xff]
    %v384 = vld [vmem:[#allocation11 + $0x230] sm:$0xff]
    %v385 = vld [vmem:[#allocation11 + $0x238] sm:$0xff]
    %v386 = vld [vmem:[#allocation11 + $0x240] sm:$0xff]
    %v387 = vld [vmem:[#allocation11 + $0x248] sm:$0xff]
    %v388 = vld [vmem:[#allocation11 + $0x250] sm:$0xff]
    %v389 = vld [vmem:[#allocation11 + $0x258] sm:$0xff]
    %v390 = vld [vmem:[#allocation11 + $0x260] sm:$0xff]
    %v391 = vld [vmem:[#allocation11 + $0x268] sm:$0xff]
    %v392 = vld [vmem:[#allocation11 + $0x270] sm:$0xff]
    %v393 = vld [vmem:[#allocation11 + $0x278] sm:$0xff]
    %v394 = vld [vmem:[#allocation11 + $0x280] sm:$0xff]
    %v395 = vld [vmem:[#allocation11 + $0x288] sm:$0xff]
    %v396 = vld [vmem:[#allocation11 + $0x290] sm:$0xff]
    %v397 = vld [vmem:[#allocation11 + $0x298] sm:$0xff]
    %v398 = vld [vmem:[#allocation11 + $0x2a0] sm:$0xff]
    %v399 = vld [vmem:[#allocation11 + $0x2a8] sm:$0xff]
    %v400 = vld [vmem:[#allocation11 + $0x2b0] sm:$0xff]
    %v401 = vld [vmem:[#allocation11 + $0x2b8] sm:$0xff]
    %v402 = vld [vmem:[#allocation11 + $0x2c0] sm:$0xff]
    %v403 = vld [vmem:[#allocation11 + $0x2c8] sm:$0xff]
    %v404 = vld [vmem:[#allocation11 + $0x2d0] sm:$0xff]
    %v405 = vld [vmem:[#allocation11 + $0x2d8] sm:$0xff]
    %v406 = vld [vmem:[#allocation11 + $0x2e0] sm:$0xff]
    %v407 = vld [vmem:[#allocation11 + $0x2e8] sm:$0xff]
    %v408 = vld [vmem:[#allocation11 + $0x2f0] sm:$0xff]
    %v409 = vld [vmem:[#allocation11 + $0x2f8] sm:$0xff]
    %v410 = vld [vmem:[#allocation11 + $0x300] sm:$0xff]
    %v411 = vld [vmem:[#allocation11 + $0x308] sm:$0xff]
    %v412 = vld [vmem:[#allocation11 + $0x310] sm:$0xff]
    %v413 = vld [vmem:[#allocation11 + $0x318] sm:$0xff]
    %v414 = vld [vmem:[#allocation11 + $0x320] sm:$0xff]
    %v415 = vld [vmem:[#allocation11 + $0x328] sm:$0xff]
    %v416 = vld [vmem:[#allocation11 + $0x330] sm:$0xff]
    %v417 = vld [vmem:[#allocation11 + $0x338] sm:$0xff]
    %v418 = vld [vmem:[#allocation11 + $0x340] sm:$0xff]
    %v419 = vld [vmem:[#allocation11 + $0x348] sm:$0xff]
    %v420 = vld [vmem:[#allocation11 + $0x350] sm:$0xff]
    %v421 = vld [vmem:[#allocation11 + $0x358] sm:$0xff]
    %v422 = vld [vmem:[#allocation11 + $0x360] sm:$0xff]
    %v423 = vld [vmem:[#allocation11 + $0x368] sm:$0xff]
    %v424 = vld [vmem:[#allocation11 + $0x370] sm:$0xff]
    %v425 = vld [vmem:[#allocation11 + $0x378] sm:$0xff]
    %v426 = vld [vmem:[#allocation11 + $0x380] sm:$0xff]
    %v427 = vld [vmem:[#allocation11 + $0x388] sm:$0xff]
    %v428 = vld [vmem:[#allocation11 + $0x390] sm:$0xff]
    %v429 = vld [vmem:[#allocation11 + $0x398] sm:$0xff]
    %v430 = vld [vmem:[#allocation11 + $0x3a0] sm:$0xff]
    %v431 = vld [vmem:[#allocation11 + $0x3a8] sm:$0xff]
    %v432 = vld [vmem:[#allocation11 + $0x3b0] sm:$0xff]
    %v433 = vld [vmem:[#allocation11 + $0x3b8] sm:$0xff]
    %v434 = vld [vmem:[#allocation11 + $0x3c0] sm:$0xff]
    %v435 = vld [vmem:[#allocation11 + $0x3c8] sm:$0xff]
    %v436 = vld [vmem:[#allocation11 + $0x3d0] sm:$0xff]
    %v437 = vld [vmem:[#allocation11 + $0x3d8] sm:$0xff]
    %v438 = vld [vmem:[#allocation11 + $0x3e0] sm:$0xff]
    %v439 = vld [vmem:[#allocation11 + $0x3e8] sm:$0xff]
    %v440 = vld [vmem:[#allocation11 + $0x3f0] sm:$0xff]
    %v441 = vld [vmem:[#allocation11 + $0x3f8] sm:$0xff]
    %v442 = vld [vmem:[#allocation11 + $0x400] sm:$0xff]
    %v443 = vld [vmem:[#allocation11 + $0x408] sm:$0xff]
    %v444 = vld [vmem:[#allocation11 + $0x410] sm:$0xff]
    %v445 = vld [vmem:[#allocation11 + $0x418] sm:$0xff]
    %v446 = vld [vmem:[#allocation11 + $0x420] sm:$0xff]
    %v447 = vld [vmem:[#allocation11 + $0x428] sm:$0xff]
    %v448 = vld [vmem:[#allocation11 + $0x430] sm:$0xff]
    %v449 = vld [vmem:[#allocation11 + $0x438] sm:$0xff]
    %v450 = vld [vmem:[#allocation11 + $0x440] sm:$0xff]
    %v451 = vld [vmem:[#allocation11 + $0x448] sm:$0xff]
    %v452 = vld [vmem:[#allocation11 + $0x450] sm:$0xff]
    %v453 = vld [vmem:[#allocation11 + $0x458] sm:$0xff]
    %v454 = vld [vmem:[#allocation11 + $0x460] sm:$0xff]
    %v455 = vld [vmem:[#allocation11 + $0x468] sm:$0xff]
    %v456 = vld [vmem:[#allocation11 + $0x470] sm:$0xff]
    %v457 = vld [vmem:[#allocation11 + $0x478] sm:$0xff]
    %v458 = vld [vmem:[#allocation11 + $0x480] sm:$0xff]
    %v459 = vld [vmem:[#allocation11 + $0x488] sm:$0xff]
    %v460 = vld [vmem:[#allocation11 + $0x490] sm:$0xff]
    %v461 = vld [vmem:[#allocation11 + $0x498] sm:$0xff]
    %v462 = vld [vmem:[#allocation11 + $0x4a0] sm:$0xff]
    %v463 = vld [vmem:[#allocation11 + $0x4a8] sm:$0xff]
    %v464 = vld [vmem:[#allocation11 + $0x4b0] sm:$0xff]
    %v465 = vld [vmem:[#allocation11 + $0x4b8] sm:$0xff]
    %v466 = vld [vmem:[#allocation11 + $0x4c0] sm:$0xff]
    %v467 = vld [vmem:[#allocation11 + $0x4c8] sm:$0xff]
    %v468 = vld [vmem:[#allocation11 + $0x4d0] sm:$0xff]
    %v469 = vld [vmem:[#allocation11 + $0x4d8] sm:$0xff]
    %v470 = vld [vmem:[#allocation11 + $0x4e0] sm:$0xff]
    %v471 = vld [vmem:[#allocation11 + $0x4e8] sm:$0xff]
    %v472 = vld [vmem:[#allocation11 + $0x4f0] sm:$0xff]
    %v473 = vld [vmem:[#allocation11 + $0x4f8] sm:$0xff]
    %v474 = vld [vmem:[#allocation11 + $0x500] sm:$0xff]
    %v475 = vld [vmem:[#allocation11 + $0x508] sm:$0xff]
    %v476 = vld [vmem:[#allocation11 + $0x510] sm:$0xff]
    %v477 = vld [vmem:[#allocation11 + $0x518] sm:$0xff]
    %v478 = vld [vmem:[#allocation11 + $0x520] sm:$0xff]
    %v479 = vld [vmem:[#allocation11 + $0x528] sm:$0xff]
    %v480 = vld [vmem:[#allocation11 + $0x530] sm:$0xff]
    %v481 = vld [vmem:[#allocation11 + $0x538] sm:$0xff]
    %v482 = vld [vmem:[#allocation11 + $0x540] sm:$0xff]
    %v483 = vld [vmem:[#allocation11 + $0x548] sm:$0xff]
    %v484 = vld [vmem:[#allocation11 + $0x550] sm:$0xff]
    %v485 = vld [vmem:[#allocation11 + $0x558] sm:$0xff]
    %v486 = vld [vmem:[#allocation11 + $0x560] sm:$0xff]
    %v487 = vld [vmem:[#allocation11 + $0x568] sm:$0xff]
    %v488 = vld [vmem:[#allocation11 + $0x570] sm:$0xff]
    %v489 = vld [vmem:[#allocation11 + $0x578] sm:$0xff]
    %v490 = vld [vmem:[#allocation11 + $0x580] sm:$0xff]
    %v491 = vld [vmem:[#allocation11 + $0x588] sm:$0xff]
    %v492 = vld [vmem:[#allocation11 + $0x590] sm:$0xff]
    %v493 = vld [vmem:[#allocation11 + $0x598] sm:$0xff]
    %v494 = vld [vmem:[#allocation11 + $0x5a0] sm:$0xff]
    %v495 = vld [vmem:[#allocation11 + $0x5a8] sm:$0xff]
    %v496 = vld [vmem:[#allocation11 + $0x5b0] sm:$0xff]
    %v497 = vld [vmem:[#allocation11 + $0x5b8] sm:$0xff]
    %v498 = vld [vmem:[#allocation11 + $0x5c0] sm:$0xff]
    %v499 = vld [vmem:[#allocation11 + $0x5c8] sm:$0xff]
    %v500 = vld [vmem:[#allocation11 + $0x5d0] sm:$0xff]
    %v501 = vld [vmem:[#allocation11 + $0x5d8] sm:$0xff]
    %v502 = vld [vmem:[#allocation11 + $0x5e0] sm:$0xff]
    %v503 = vld [vmem:[#allocation11 + $0x5e8] sm:$0xff]
    %v504 = vld [vmem:[#allocation11 + $0x5f0] sm:$0xff]
    %v505 = vld [vmem:[#allocation11 + $0x5f8] sm:$0xff]
    %v506 = vld [vmem:[#allocation11 + $0x600] sm:$0xff]
    %v507 = vld [vmem:[#allocation11 + $0x608] sm:$0xff]
    %v508 = vld [vmem:[#allocation11 + $0x610] sm:$0xff]
    %v509 = vld [vmem:[#allocation11 + $0x618] sm:$0xff]
    %v510 = vld [vmem:[#allocation11 + $0x620] sm:$0xff]
    %v511 = vld [vmem:[#allocation11 + $0x628] sm:$0xff]
    %v512 = vld [vmem:[#allocation11 + $0x630] sm:$0xff]
    %v513 = vld [vmem:[#allocation11 + $0x638] sm:$0xff]
    %v514 = vld [vmem:[#allocation11 + $0x640] sm:$0xff]
    %v515 = vld [vmem:[#allocation11 + $0x648] sm:$0xff]
    %v516 = vld [vmem:[#allocation11 + $0x650] sm:$0xff]
    %v517 = vld [vmem:[#allocation11 + $0x658] sm:$0xff]
    %v518 = vld [vmem:[#allocation11 + $0x660] sm:$0xff]
    %v519 = vld [vmem:[#allocation11 + $0x668] sm:$0xff]
    %v520 = vld [vmem:[#allocation11 + $0x670] sm:$0xff]
    %v521 = vld [vmem:[#allocation11 + $0x678] sm:$0xff]
    %v522 = vld [vmem:[#allocation11 + $0x680] sm:$0xff]
    %v523 = vld [vmem:[#allocation11 + $0x688] sm:$0xff]
    %v524 = vld [vmem:[#allocation11 + $0x690] sm:$0xff]
    %v525 = vld [vmem:[#allocation11 + $0x698] sm:$0xff]
    %v526 = vld [vmem:[#allocation11 + $0x6a0] sm:$0xff]
    %v527 = vld [vmem:[#allocation11 + $0x6a8] sm:$0xff]
    %v528 = vld [vmem:[#allocation11 + $0x6b0] sm:$0xff]
    %v529 = vld [vmem:[#allocation11 + $0x6b8] sm:$0xff]
    %v530 = vld [vmem:[#allocation11 + $0x6c0] sm:$0xff]
    %v531 = vld [vmem:[#allocation11 + $0x6c8] sm:$0xff]
    %v532 = vld [vmem:[#allocation11 + $0x6d0] sm:$0xff]
    %v533 = vld [vmem:[#allocation11 + $0x6d8] sm:$0xff]
    %v534 = vld [vmem:[#allocation11 + $0x6e0] sm:$0xff]
    %v535 = vld [vmem:[#allocation11 + $0x6e8] sm:$0xff]
    %v536 = vld [vmem:[#allocation11 + $0x6f0] sm:$0xff]
    %v537 = vld [vmem:[#allocation11 + $0x6f8] sm:$0xff]
    %v538 = vld [vmem:[#allocation11 + $0x700] sm:$0xff]
    %v539 = vld [vmem:[#allocation11 + $0x708] sm:$0xff]
    %v540 = vld [vmem:[#allocation11 + $0x710] sm:$0xff]
    %v541 = vld [vmem:[#allocation11 + $0x718] sm:$0xff]
    %v542 = vld [vmem:[#allocation11 + $0x720] sm:$0xff]
    %v543 = vld [vmem:[#allocation11 + $0x728] sm:$0xff]
    %v544 = vld [vmem:[#allocation11 + $0x730] sm:$0xff]
    %v545 = vld [vmem:[#allocation11 + $0x738] sm:$0xff]
    %v546 = vld [vmem:[#allocation11 + $0x740] sm:$0xff]
    %v547 = vld [vmem:[#allocation11 + $0x748] sm:$0xff]
    %v548 = vld [vmem:[#allocation11 + $0x750] sm:$0xff]
    %v549 = vld [vmem:[#allocation11 + $0x758] sm:$0xff]
    %v550 = vld [vmem:[#allocation11 + $0x760] sm:$0xff]
    %v551 = vld [vmem:[#allocation11 + $0x768] sm:$0xff]
    %v552 = vld [vmem:[#allocation11 + $0x770] sm:$0xff]
    %v553 = vld [vmem:[#allocation11 + $0x778] sm:$0xff]
    %v554 = vld [vmem:[#allocation11 + $0x780] sm:$0xff]
    %v555 = vld [vmem:[#allocation11 + $0x788] sm:$0xff]
    %v556 = vld [vmem:[#allocation11 + $0x790] sm:$0xff]
    %v557 = vld [vmem:[#allocation11 + $0x798] sm:$0xff]
    %v558 = vld [vmem:[#allocation11 + $0x7a0] sm:$0xff]
    %v559 = vld [vmem:[#allocation11 + $0x7a8] sm:$0xff]
    %v560 = vld [vmem:[#allocation11 + $0x7b0] sm:$0xff]
    %v561 = vld [vmem:[#allocation11 + $0x7b8] sm:$0xff]
    %v562 = vld [vmem:[#allocation11 + $0x7c0] sm:$0xff]
    %v563 = vld [vmem:[#allocation11 + $0x7c8] sm:$0xff]
    %v564 = vld [vmem:[#allocation11 + $0x7d0] sm:$0xff]
    %v565 = vld [vmem:[#allocation11 + $0x7d8] sm:$0xff]
    %v566 = vld [vmem:[#allocation11 + $0x7e0] sm:$0xff]
    %v567 = vld [vmem:[#allocation11 + $0x7e8] sm:$0xff]
    %v568 = vld [vmem:[#allocation11 + $0x7f0] sm:$0xff]
    %v569 = vld [vmem:[#allocation11 + $0x7f8] sm:$0xff]
    %v570 = vld [vmem:[#allocation11 + $0x800] sm:$0xff]
    %v571 = vld [vmem:[#allocation11 + $0x808] sm:$0xff]
    %v572 = vld [vmem:[#allocation11 + $0x810] sm:$0xff]
    %v573 = vld [vmem:[#allocation11 + $0x818] sm:$0xff]
    %v574 = vld [vmem:[#allocation11 + $0x820] sm:$0xff]
    %v575 = vld [vmem:[#allocation11 + $0x828] sm:$0xff]
    %v576 = vld [vmem:[#allocation11 + $0x830] sm:$0xff]
    %v577 = vld [vmem:[#allocation11 + $0x838] sm:$0xff]
    %v578 = vld [vmem:[#allocation11 + $0x840] sm:$0xff]
    %v579 = vld [vmem:[#allocation11 + $0x848] sm:$0xff]
    %v580 = vld [vmem:[#allocation11 + $0x850] sm:$0xff]
    %v581 = vld [vmem:[#allocation11 + $0x858] sm:$0xff]
    %v582 = vld [vmem:[#allocation11 + $0x860] sm:$0xff]
    %v583 = vld [vmem:[#allocation11 + $0x868] sm:$0xff]
    %v584 = vld [vmem:[#allocation11 + $0x870] sm:$0xff]
    %v585 = vld [vmem:[#allocation11 + $0x878] sm:$0xff]
    %v586 = vld [vmem:[#allocation11 + $0x880] sm:$0xff]
    %v587 = vld [vmem:[#allocation11 + $0x888] sm:$0xff]
    %v588 = vld [vmem:[#allocation11 + $0x890] sm:$0xff]
    %v589 = vld [vmem:[#allocation11 + $0x898] sm:$0xff]
    %v590 = vld [vmem:[#allocation11 + $0x8a0] sm:$0xff]
    %v591 = vld [vmem:[#allocation11 + $0x8a8] sm:$0xff]
    %v592 = vld [vmem:[#allocation11 + $0x8b0] sm:$0xff]
    %v593 = vld [vmem:[#allocation11 + $0x8b8] sm:$0xff]
    %v594 = vld [vmem:[#allocation11 + $0x8c0] sm:$0xff]
    %v595 = vld [vmem:[#allocation11 + $0x8c8] sm:$0xff]
    %v596 = vld [vmem:[#allocation11 + $0x8d0] sm:$0xff]
    %v597 = vld [vmem:[#allocation11 + $0x8d8] sm:$0xff]
    %v598 = vld [vmem:[#allocation11 + $0x8e0] sm:$0xff]
    %v599 = vld [vmem:[#allocation11 + $0x8e8] sm:$0xff]
    %v600 = vld [vmem:[#allocation11 + $0x8f0] sm:$0xff]
    %v601 = vld [vmem:[#allocation11 + $0x8f8] sm:$0xff]
    %v602 = vld [vmem:[#allocation10] sm:$0xff]
    %v603 = vld [vmem:[#allocation10 + $0x8] sm:$0xf]
    %v606 = vlaneseq
    %v607 = vshrl.u32 %v606, 7
    %v608 = vsub.s32 0, %v607
    %v609 = vrot.slane %v602, %v608
    %v610 = vlaneseq
    %v611 = vshrl.u32 %v610, 7
    %v612 = vsub.s32 1, %v611
    %v613 = vrot.slane %v602, %v612
    %v614 = vlaneseq
    %v615 = vshrl.u32 %v614, 7
    %v616 = vsub.s32 2, %v615
    %v617 = vrot.slane %v602, %v616
    %v618 = vlaneseq
    %v619 = vshrl.u32 %v618, 7
    %v620 = vsub.s32 3, %v619
    %v621 = vrot.slane %v602, %v620
    %v622 = vlaneseq
    %v623 = vshrl.u32 %v622, 7
    %v624 = vsub.s32 4, %v623
    %v625 = vrot.slane %v602, %v624
    %v626 = vlaneseq
    %v627 = vshrl.u32 %v626, 7
    %v628 = vsub.s32 5, %v627
    %v629 = vrot.slane %v602, %v628
    %v630 = vlaneseq
    %v631 = vshrl.u32 %v630, 7
    %v632 = vsub.s32 6, %v631
    %v633 = vrot.slane %v602, %v632
    %v634 = vlaneseq
    %v635 = vshrl.u32 %v634, 7
    %v636 = vsub.s32 7, %v635
    %v637 = vrot.slane %v602, %v636
    %v638 = vlaneseq
    %v639 = vshrl.u32 %v638, 7
    %v640 = vsub.s32 0, %v639
    %v641 = vrot.slane %v603, %v640
    %v642 = vlaneseq
    %v643 = vshrl.u32 %v642, 7
    %v644 = vsub.s32 1, %v643
    %v645 = vrot.slane %v603, %v644
    %v646 = vlaneseq
    %v647 = vshrl.u32 %v646, 7
    %v648 = vsub.s32 2, %v647
    %v649 = vrot.slane %v603, %v648
    %v650 = vlaneseq
    %v651 = vshrl.u32 %v650, 7
    %v652 = vsub.s32 3, %v651
    %v653 = vrot.slane %v603, %v652
    %v669 = vcombine.high %v311, %v311
    %v671 = vunpack.c.l.s4 1983009808
    %v672 = vunpack.c.0.s8 %v671
    %v673 = vlaneseq
    %v674 = vshrl.u32 %v673, 7
    %v675 = vsub.s32 %v672, %v674
    %v676 = vrot.slane %v311, %v675
    %v678 = vunpack.c.l.s4 1983009808
    %v679 = vunpack.c.0.s8 %v678
    %v680 = vlaneseq
    %v681 = vshrl.u32 %v680, 7
    %v682 = vsub.s32 %v679, %v681
    %v683 = vrot.slane %v669, %v682
    %v684 = vcombine.high %v676, %v676
    %v685 = vcombine.high %v683, %v683
    %v686 = vcombine.high %v312, %v312
    %v688 = vunpack.c.l.s4 1983009808
    %v689 = vunpack.c.0.s8 %v688
    %v690 = vlaneseq
    %v691 = vshrl.u32 %v690, 7
    %v692 = vsub.s32 %v689, %v691
    %v693 = vrot.slane %v312, %v692
    %v695 = vunpack.c.l.s4 1983009808
    %v696 = vunpack.c.0.s8 %v695
    %v697 = vlaneseq
    %v698 = vshrl.u32 %v697, 7
    %v699 = vsub.s32 %v696, %v698
    %v700 = vrot.slane %v686, %v699
    %v701 = vcombine.high %v693, %v693
    %v702 = vcombine.high %v700, %v700
    %v703 = vcombine.high %v313, %v313
    %v705 = vunpack.c.l.s4 1983009808
    %v706 = vunpack.c.0.s8 %v705
    %v707 = vlaneseq
    %v708 = vshrl.u32 %v707, 7
    %v709 = vsub.s32 %v706, %v708
    %v710 = vrot.slane %v313, %v709
    %v712 = vunpack.c.l.s4 1983009808
    %v713 = vunpack.c.0.s8 %v712
    %v714 = vlaneseq
    %v715 = vshrl.u32 %v714, 7
    %v716 = vsub.s32 %v713, %v715
    %v717 = vrot.slane %v703, %v716
    %v718 = vcombine.high %v710, %v710
    %v719 = vcombine.high %v717, %v717
    %vm720 = vcmask 15360
    %v722 = vsel %vm720, %v310, 0
    %vm724 = vcmask 1041408
    %v725 = vsel %vm724, %v676, 0
    %v727 = vsel %vm724, %v684, 0
    %v729 = vsel %vm724, %v683, 0
    %v731 = vsel %vm724, %v685, 0
    %v733 = vsel %vm724, %v693, 0
    %v735 = vsel %vm724, %v701, 0
    %v737 = vsel %vm724, %v700, 0
    %v739 = vsel %vm724, %v702, 0
    %v741 = vsel %vm724, %v710, 0
    %v743 = vsel %vm724, %v718, 0
    %v745 = vsel %vm724, %v717, 0
    %v747 = vsel %vm724, %v719, 0
    %749 = vmatprep.subr.mxu0 %v727
    %750 = vmatpush1.msra.mxu0 %v725
    %751 = vmatprep.subr.mxu0 0.0
    %752 = vmatpush1.msra.mxu0 0.0
    %753 = vmatprep.subr.mxu0 0.0
    %754 = vmatpush1.msra.mxu0 0.0
    %755 = vmatprep.subr.mxu0 0.0
    %756 = vmatpush1.msra.mxu0 0.0
    %757 = vmatprep.subr.mxu0 0.0
    %758 = vmatpush1.msra.mxu0 0.0
    %759 = vmatprep.subr.mxu0 0.0
    %760 = vmatpush1.msra.mxu0 0.0
    %761 = vmatprep.subr.mxu0 0.0
    %762 = vmatpush1.msra.mxu0 0.0
    %763 = vmatprep.subr.mxu0 0.0
    %764 = vmatpush1.msra.mxu0 0.0
    %765 = vmatprep.subr.mxu0 0.0
    %766 = vmatpush1.msra.mxu0 0.0
    %767 = vmatprep.subr.mxu0 0.0
    %768 = vmatpush1.msra.mxu0 0.0
    %769 = vmatprep.subr.mxu0 0.0
    %770 = vmatpush1.msra.mxu0 0.0
    %771 = vmatprep.subr.mxu0 0.0
    %772 = vmatpush1.msra.mxu0 0.0
    %773 = vmatprep.subr.mxu0 0.0
    %774 = vmatpush1.msra.mxu0 0.0
    %775 = vmatprep.subr.mxu0 0.0
    %776 = vmatpush1.msra.mxu0 0.0
    %777 = vmatprep.subr.mxu0 0.0
    %778 = vmatpush1.msra.mxu0 0.0
    %779 = vmatprep.subr.mxu0 0.0
    %780 = vmatpush1.msra.mxu0 0.0
    %781 = vmatprep.subr.mxu0 0.0
    %782 = vmatpush1.msra.mxu0 0.0
    %783 = vmatprep.subr.mxu0 0.0
    %784 = vmatpush1.msra.mxu0 0.0
    %785 = vmatprep.subr.mxu0 0.0
    %786 = vmatpush1.msra.mxu0 0.0
    %787 = vmatprep.subr.mxu0 0.0
    %788 = vmatpush1.msra.mxu0 0.0
    %789 = vmatprep.subr.mxu0 0.0
    %790 = vmatpush1.msra.mxu0 0.0
    %791 = vmatprep.subr.mxu0 0.0
    %792 = vmatpush1.msra.mxu0 0.0
    %793 = vmatprep.subr.mxu0 0.0
    %794 = vmatpush1.msra.mxu0 0.0
    %795 = vmatprep.subr.mxu0 0.0
    %796 = vmatpush1.msra.mxu0 0.0
    %797 = vmatprep.subr.mxu0 0.0
    %798 = vmatpush1.msra.mxu0 0.0
    %799 = vmatprep.subr.mxu0 0.0
    %800 = vmatpush1.msra.mxu0 0.0
    %801 = vmatprep.subr.mxu0 0.0
    %802 = vmatpush1.msra.mxu0 0.0
    %803 = vmatprep.subr.mxu0 0.0
    %804 = vmatpush1.msra.mxu0 0.0
    %805 = vmatprep.subr.mxu0 0.0
    %806 = vmatpush1.msra.mxu0 0.0
    %807 = vmatprep.subr.mxu0 0.0
    %808 = vmatpush1.msra.mxu0 0.0
    %809 = vmatprep.subr.mxu0 0.0
    %810 = vmatpush1.msra.mxu0 0.0
    %811 = vmatprep.subr.mxu0 0.0
    %812 = vmatpush1.msra.mxu0 0.0
    %813 = vmatprep.mubr.f32.mxu0 0.0
    %814 = vmatmul.mubr.f32.gmra.mrb[0].mxu0 %v722
    %v815 = vpop.f32.mrb[0].mxu0
    %v816 = vadd.f32 %v609, %v815
    %v817 = vpop.f32.mrb[0].mxu0
    %v818 = vadd.f32 %v613, %v817
    %819 = vdwg.mxu0
    %820 = vmatprep.subr.mxu0 %v731
    %821 = vmatpush1.msra.mxu0 %v729
    %822 = vmatprep.subr.mxu0 0.0
    %823 = vmatpush1.msra.mxu0 0.0
    %824 = vmatprep.subr.mxu0 0.0
    %825 = vmatpush1.msra.mxu0 0.0
    %826 = vmatprep.subr.mxu0 0.0
    %827 = vmatpush1.msra.mxu0 0.0
    %828 = vmatprep.subr.mxu0 0.0
    %829 = vmatpush1.msra.mxu0 0.0
    %830 = vmatprep.subr.mxu0 0.0
    %831 = vmatpush1.msra.mxu0 0.0
    %832 = vmatprep.subr.mxu0 0.0
    %833 = vmatpush1.msra.mxu0 0.0
    %834 = vmatprep.subr.mxu0 0.0
    %835 = vmatpush1.msra.mxu0 0.0
    %836 = vmatprep.subr.mxu0 0.0
    %837 = vmatpush1.msra.mxu0 0.0
    %838 = vmatprep.subr.mxu0 0.0
    %839 = vmatpush1.msra.mxu0 0.0
    %840 = vmatprep.subr.mxu0 0.0
    %841 = vmatpush1.msra.mxu0 0.0
    %842 = vmatprep.subr.mxu0 0.0
    %843 = vmatpush1.msra.mxu0 0.0
    %844 = vmatprep.subr.mxu0 0.0
    %845 = vmatpush1.msra.mxu0 0.0
    %846 = vmatprep.subr.mxu0 0.0
    %847 = vmatpush1.msra.mxu0 0.0
    %848 = vmatprep.subr.mxu0 0.0
    %849 = vmatpush1.msra.mxu0 0.0
    %850 = vmatprep.subr.mxu0 0.0
    %851 = vmatpush1.msra.mxu0 0.0
    %852 = vmatprep.subr.mxu0 0.0
    %853 = vmatpush1.msra.mxu0 0.0
    %854 = vmatprep.subr.mxu0 0.0
    %855 = vmatpush1.msra.mxu0 0.0
    %856 = vmatprep.subr.mxu0 0.0
    %857 = vmatpush1.msra.mxu0 0.0
    %858 = vmatprep.subr.mxu0 0.0
    %859 = vmatpush1.msra.mxu0 0.0
    %860 = vmatprep.subr.mxu0 0.0
    %861 = vmatpush1.msra.mxu0 0.0
    %862 = vmatprep.subr.mxu0 0.0
    %863 = vmatpush1.msra.mxu0 0.0
    %864 = vmatprep.subr.mxu0 0.0
    %865 = vmatpush1.msra.mxu0 0.0
    %866 = vmatprep.subr.mxu0 0.0
    %867 = vmatpush1.msra.mxu0 0.0
    %868 = vmatprep.subr.mxu0 0.0
    %869 = vmatpush1.msra.mxu0 0.0
    %870 = vmatprep.subr.mxu0 0.0
    %871 = vmatpush1.msra.mxu0 0.0
    %872 = vmatprep.subr.mxu0 0.0
    %873 = vmatpush1.msra.mxu0 0.0
    %874 = vmatprep.subr.mxu0 0.0
    %875 = vmatpush1.msra.mxu0 0.0
    %876 = vmatprep.subr.mxu0 0.0
    %877 = vmatpush1.msra.mxu0 0.0
    %878 = vmatprep.subr.mxu0 0.0
    %879 = vmatpush1.msra.mxu0 0.0
    %880 = vmatprep.subr.mxu0 0.0
    %881 = vmatpush1.msra.mxu0 0.0
    %882 = vmatprep.subr.mxu0 0.0
    %883 = vmatpush1.msra.mxu0 0.0
    %884 = vmatprep.mubr.f32.mxu0 0.0
    %885 = vmatmul.mubr.f32.gmra.mrb[0].mxu0 %v722
    %v886 = vpop.f32.mrb[0].mxu0
    %v887 = vadd.f32 %v617, %v886
    %v888 = vpop.f32.mrb[0].mxu0
    %v889 = vadd.f32 %v621, %v888
    %890 = vdwg.mxu0
    %891 = vmatprep.subr.mxu0 %v735
    %892 = vmatpush1.msra.mxu0 %v733
    %893 = vmatprep.subr.mxu0 0.0
    %894 = vmatpush1.msra.mxu0 0.0
    %895 = vmatprep.subr.mxu0 0.0
    %896 = vmatpush1.msra.mxu0 0.0
    %897 = vmatprep.subr.mxu0 0.0
    %898 = vmatpush1.msra.mxu0 0.0
    %899 = vmatprep.subr.mxu0 0.0
    %900 = vmatpush1.msra.mxu0 0.0
    %901 = vmatprep.subr.mxu0 0.0
    %902 = vmatpush1.msra.mxu0 0.0
    %903 = vmatprep.subr.mxu0 0.0
    %904 = vmatpush1.msra.mxu0 0.0
    %905 = vmatprep.subr.mxu0 0.0
    %906 = vmatpush1.msra.mxu0 0.0
    %907 = vmatprep.subr.mxu0 0.0
    %908 = vmatpush1.msra.mxu0 0.0
    %909 = vmatprep.subr.mxu0 0.0
    %910 = vmatpush1.msra.mxu0 0.0
    %911 = vmatprep.subr.mxu0 0.0
    %912 = vmatpush1.msra.mxu0 0.0
    %913 = vmatprep.subr.mxu0 0.0
    %914 = vmatpush1.msra.mxu0 0.0
    %915 = vmatprep.subr.mxu0 0.0
    %916 = vmatpush1.msra.mxu0 0.0
    %917 = vmatprep.subr.mxu0 0.0
    %918 = vmatpush1.msra.mxu0 0.0
    %919 = vmatprep.subr.mxu0 0.0
    %920 = vmatpush1.msra.mxu0 0.0
    %921 = vmatprep.subr.mxu0 0.0
    %922 = vmatpush1.msra.mxu0 0.0
    %923 = vmatprep.subr.mxu0 0.0
    %924 = vmatpush1.msra.mxu0 0.0
    %925 = vmatprep.subr.mxu0 0.0
    %926 = vmatpush1.msra.mxu0 0.0
    %927 = vmatprep.subr.mxu0 0.0
    %928 = vmatpush1.msra.mxu0 0.0
    %929 = vmatprep.subr.mxu0 0.0
    %930 = vmatpush1.msra.mxu0 0.0
    %931 = vmatprep.subr.mxu0 0.0
    %932 = vmatpush1.msra.mxu0 0.0
    %933 = vmatprep.subr.mxu0 0.0
    %934 = vmatpush1.msra.mxu0 0.0
    %935 = vmatprep.subr.mxu0 0.0
    %936 = vmatpush1.msra.mxu0 0.0
    %937 = vmatprep.subr.mxu0 0.0
    %938 = vmatpush1.msra.mxu0 0.0
    %939 = vmatprep.subr.mxu0 0.0
    %940 = vmatpush1.msra.mxu0 0.0
    %941 = vmatprep.subr.mxu0 0.0
    %942 = vmatpush1.msra.mxu0 0.0
    %943 = vmatprep.subr.mxu0 0.0
    %944 = vmatpush1.msra.mxu0 0.0
    %945 = vmatprep.subr.mxu0 0.0
    %946 = vmatpush1.msra.mxu0 0.0
    %947 = vmatprep.subr.mxu0 0.0
    %948 = vmatpush1.msra.mxu0 0.0
    %949 = vmatprep.subr.mxu0 0.0
    %950 = vmatpush1.msra.mxu0 0.0
    %951 = vmatprep.subr.mxu0 0.0
    %952 = vmatpush1.msra.mxu0 0.0
    %953 = vmatprep.subr.mxu0 0.0
    %954 = vmatpush1.msra.mxu0 0.0
    %955 = vmatprep.mubr.f32.mxu0 0.0
    %956 = vmatmul.mubr.f32.gmra.mrb[0].mxu0 %v722
    %v957 = vpop.f32.mrb[0].mxu0
    %v958 = vadd.f32 %v625, %v957
    %v959 = vpop.f32.mrb[0].mxu0
    %v960 = vadd.f32 %v629, %v959
    %961 = vdwg.mxu0
    %962 = vmatprep.subr.mxu0 %v739
    %963 = vmatpush1.msra.mxu0 %v737
    %964 = vmatprep.subr.mxu0 0.0
    %965 = vmatpush1.msra.mxu0 0.0
    %966 = vmatprep.subr.mxu0 0.0
    %967 = vmatpush1.msra.mxu0 0.0
    %968 = vmatprep.subr.mxu0 0.0
    %969 = vmatpush1.msra.mxu0 0.0
    %970 = vmatprep.subr.mxu0 0.0
    %971 = vmatpush1.msra.mxu0 0.0
    %972 = vmatprep.subr.mxu0 0.0
    %973 = vmatpush1.msra.mxu0 0.0
    %974 = vmatprep.subr.mxu0 0.0
    %975 = vmatpush1.msra.mxu0 0.0
    %976 = vmatprep.subr.mxu0 0.0
    %977 = vmatpush1.msra.mxu0 0.0
    %978 = vmatprep.subr.mxu0 0.0
    %979 = vmatpush1.msra.mxu0 0.0
    %980 = vmatprep.subr.mxu0 0.0
    %981 = vmatpush1.msra.mxu0 0.0
    %982 = vmatprep.subr.mxu0 0.0
    %983 = vmatpush1.msra.mxu0 0.0
    %984 = vmatprep.subr.mxu0 0.0
    %985 = vmatpush1.msra.mxu0 0.0
    %986 = vmatprep.subr.mxu0 0.0
    %987 = vmatpush1.msra.mxu0 0.0
    %988 = vmatprep.subr.mxu0 0.0
    %989 = vmatpush1.msra.mxu0 0.0
    %990 = vmatprep.subr.mxu0 0.0
    %991 = vmatpush1.msra.mxu0 0.0
    %992 = vmatprep.subr.mxu0 0.0
    %993 = vmatpush1.msra.mxu0 0.0
    %994 = vmatprep.subr.mxu0 0.0
    %995 = vmatpush1.msra.mxu0 0.0
    %996 = vmatprep.subr.mxu0 0.0
    %997 = vmatpush1.msra.mxu0 0.0
    %998 = vmatprep.subr.mxu0 0.0
    %999 = vmatpush1.msra.mxu0 0.0
    %1000 = vmatprep.subr.mxu0 0.0
    %1001 = vmatpush1.msra.mxu0 0.0
    %1002 = vmatprep.subr.mxu0 0.0
    %1003 = vmatpush1.msra.mxu0 0.0
    %1004 = vmatprep.subr.mxu0 0.0
    %1005 = vmatpush1.msra.mxu0 0.0
    %1006 = vmatprep.subr.mxu0 0.0
    %1007 = vmatpush1.msra.mxu0 0.0
    %1008 = vmatprep.subr.mxu0 0.0
    %1009 = vmatpush1.msra.mxu0 0.0
    %1010 = vmatprep.subr.mxu0 0.0
    %1011 = vmatpush1.msra.mxu0 0.0
    %1012 = vmatprep.subr.mxu0 0.0
    %1013 = vmatpush1.msra.mxu0 0.0
    %1014 = vmatprep.subr.mxu0 0.0
    %1015 = vmatpush1.msra.mxu0 0.0
    %1016 = vmatprep.subr.mxu0 0.0
    %1017 = vmatpush1.msra.mxu0 0.0
    %1018 = vmatprep.subr.mxu0 0.0
    %1019 = vmatpush1.msra.mxu0 0.0
    %1020 = vmatprep.subr.mxu0 0.0
    %1021 = vmatpush1.msra.mxu0 0.0
    %1022 = vmatprep.subr.mxu0 0.0
    %1023 = vmatpush1.msra.mxu0 0.0
    %1024 = vmatprep.subr.mxu0 0.0
    %1025 = vmatpush1.msra.mxu0 0.0
    %1026 = vmatprep.mubr.f32.mxu0 0.0
    %1027 = vmatmul.mubr.f32.gmra.mrb[0].mxu0 %v722
    %v1028 = vpop.f32.mrb[0].mxu0
    %v1029 = vadd.f32 %v633, %v1028
    %v1030 = vpop.f32.mrb[0].mxu0
    %v1031 = vadd.f32 %v637, %v1030
    %1032 = vdwg.mxu0
    %1033 = vmatprep.subr.mxu0 %v743
    %1034 = vmatpush1.msra.mxu0 %v741
    %1035 = vmatprep.subr.mxu0 0.0
    %1036 = vmatpush1.msra.mxu0 0.0
    %1037 = vmatprep.subr.mxu0 0.0
    %1038 = vmatpush1.msra.mxu0 0.0
    %1039 = vmatprep.subr.mxu0 0.0
    %1040 = vmatpush1.msra.mxu0 0.0
    %1041 = vmatprep.subr.mxu0 0.0
    %1042 = vmatpush1.msra.mxu0 0.0
    %1043 = vmatprep.subr.mxu0 0.0
    %1044 = vmatpush1.msra.mxu0 0.0
    %1045 = vmatprep.subr.mxu0 0.0
    %1046 = vmatpush1.msra.mxu0 0.0
    %1047 = vmatprep.subr.mxu0 0.0
    %1048 = vmatpush1.msra.mxu0 0.0
    %1049 = vmatprep.subr.mxu0 0.0
    %1050 = vmatpush1.msra.mxu0 0.0
    %1051 = vmatprep.subr.mxu0 0.0
    %1052 = vmatpush1.msra.mxu0 0.0
    %1053 = vmatprep.subr.mxu0 0.0
    %1054 = vmatpush1.msra.mxu0 0.0
    %1055 = vmatprep.subr.mxu0 0.0
    %1056 = vmatpush1.msra.mxu0 0.0
    %1057 = vmatprep.subr.mxu0 0.0
    %1058 = vmatpush1.msra.mxu0 0.0
    %1059 = vmatprep.subr.mxu0 0.0
    %1060 = vmatpush1.msra.mxu0 0.0
    %1061 = vmatprep.subr.mxu0 0.0
    %1062 = vmatpush1.msra.mxu0 0.0
    %1063 = vmatprep.subr.mxu0 0.0
    %1064 = vmatpush1.msra.mxu0 0.0
    %1065 = vmatprep.subr.mxu0 0.0
    %1066 = vmatpush1.msra.mxu0 0.0
    %1067 = vmatprep.subr.mxu0 0.0
    %1068 = vmatpush1.msra.mxu0 0.0
    %1069 = vmatprep.subr.mxu0 0.0
    %1070 = vmatpush1.msra.mxu0 0.0
    %1071 = vmatprep.subr.mxu0 0.0
    %1072 = vmatpush1.msra.mxu0 0.0
    %1073 = vmatprep.subr.mxu0 0.0
    %1074 = vmatpush1.msra.mxu0 0.0
    %1075 = vmatprep.subr.mxu0 0.0
    %1076 = vmatpush1.msra.mxu0 0.0
    %1077 = vmatprep.subr.mxu0 0.0
    %1078 = vmatpush1.msra.mxu0 0.0
    %1079 = vmatprep.subr.mxu0 0.0
    %1080 = vmatpush1.msra.mxu0 0.0
    %1081 = vmatprep.subr.mxu0 0.0
    %1082 = vmatpush1.msra.mxu0 0.0
    %1083 = vmatprep.subr.mxu0 0.0
    %1084 = vmatpush1.msra.mxu0 0.0
    %1085 = vmatprep.subr.mxu0 0.0
    %1086 = vmatpush1.msra.mxu0 0.0
    %1087 = vmatprep.subr.mxu0 0.0
    %1088 = vmatpush1.msra.mxu0 0.0
    %1089 = vmatprep.subr.mxu0 0.0
    %1090 = vmatpush1.msra.mxu0 0.0
    %1091 = vmatprep.subr.mxu0 0.0
    %1092 = vmatpush1.msra.mxu0 0.0
    %1093 = vmatprep.subr.mxu0 0.0
    %1094 = vmatpush1.msra.mxu0 0.0
    %1095 = vmatprep.subr.mxu0 0.0
    %1096 = vmatpush1.msra.mxu0 0.0
    %1097 = vmatprep.mubr.f32.mxu0 0.0
    %1098 = vmatmul.mubr.f32.gmra.mrb[0].mxu0 %v722
    %v1099 = vpop.f32.mrb[0].mxu0
    %v1100 = vadd.f32 %v641, %v1099
    %v1101 = vpop.f32.mrb[0].mxu0
    %v1102 = vadd.f32 %v645, %v1101
    %1103 = vdwg.mxu0
    %1104 = vmatprep.subr.mxu0 %v747
    %1105 = vmatpush1.msra.mxu0 %v745
    %1106 = vmatprep.subr.mxu0 0.0
    %1107 = vmatpush1.msra.mxu0 0.0
    %1108 = vmatprep.subr.mxu0 0.0
    %1109 = vmatpush1.msra.mxu0 0.0
    %1110 = vmatprep.subr.mxu0 0.0
    %1111 = vmatpush1.msra.mxu0 0.0
    %1112 = vmatprep.subr.mxu0 0.0
    %1113 = vmatpush1.msra.mxu0 0.0
    %1114 = vmatprep.subr.mxu0 0.0
    %1115 = vmatpush1.msra.mxu0 0.0
    %1116 = vmatprep.subr.mxu0 0.0
    %1117 = vmatpush1.msra.mxu0 0.0
    %1118 = vmatprep.subr.mxu0 0.0
    %1119 = vmatpush1.msra.mxu0 0.0
    %1120 = vmatprep.subr.mxu0 0.0
    %1121 = vmatpush1.msra.mxu0 0.0
    %1122 = vmatprep.subr.mxu0 0.0
    %1123 = vmatpush1.msra.mxu0 0.0
    %1124 = vmatprep.subr.mxu0 0.0
    %1125 = vmatpush1.msra.mxu0 0.0
    %1126 = vmatprep.subr.mxu0 0.0
    %1127 = vmatpush1.msra.mxu0 0.0
    %1128 = vmatprep.subr.mxu0 0.0
    %1129 = vmatpush1.msra.mxu0 0.0
    %1130 = vmatprep.subr.mxu0 0.0
    %1131 = vmatpush1.msra.mxu0 0.0
    %1132 = vmatprep.subr.mxu0 0.0
    %1133 = vmatpush1.msra.mxu0 0.0
    %1134 = vmatprep.subr.mxu0 0.0
    %1135 = vmatpush1.msra.mxu0 0.0
    %1136 = vmatprep.subr.mxu0 0.0
    %1137 = vmatpush1.msra.mxu0 0.0
    %1138 = vmatprep.subr.mxu0 0.0
    %1139 = vmatpush1.msra.mxu0 0.0
    %1140 = vmatprep.subr.mxu0 0.0
    %1141 = vmatpush1.msra.mxu0 0.0
    %1142 = vmatprep.subr.mxu0 0.0
    %1143 = vmatpush1.msra.mxu0 0.0
    %1144 = vmatprep.subr.mxu0 0.0
    %1145 = vmatpush1.msra.mxu0 0.0
    %1146 = vmatprep.subr.mxu0 0.0
    %1147 = vmatpush1.msra.mxu0 0.0
    %1148 = vmatprep.subr.mxu0 0.0
    %1149 = vmatpush1.msra.mxu0 0.0
    %1150 = vmatprep.subr.mxu0 0.0
    %1151 = vmatpush1.msra.mxu0 0.0
    %1152 = vmatprep.subr.mxu0 0.0
    %1153 = vmatpush1.msra.mxu0 0.0
    %1154 = vmatprep.subr.mxu0 0.0
    %1155 = vmatpush1.msra.mxu0 0.0
    %1156 = vmatprep.subr.mxu0 0.0
    %1157 = vmatpush1.msra.mxu0 0.0
    %1158 = vmatprep.subr.mxu0 0.0
    %1159 = vmatpush1.msra.mxu0 0.0
    %1160 = vmatprep.subr.mxu0 0.0
    %1161 = vmatpush1.msra.mxu0 0.0
    %1162 = vmatprep.subr.mxu0 0.0
    %1163 = vmatpush1.msra.mxu0 0.0
    %1164 = vmatprep.subr.mxu0 0.0
    %1165 = vmatpush1.msra.mxu0 0.0
    %1166 = vmatprep.subr.mxu0 0.0
    %1167 = vmatpush1.msra.mxu0 0.0
    %1168 = vmatprep.mubr.f32.mxu0 0.0
    %1169 = vmatmul.mubr.f32.gmra.mrb[0].mxu0 %v722
    %v1170 = vpop.f32.mrb[0].mxu0
    %v1171 = vadd.f32 %v649, %v1170
    %v1172 = vpop.f32.mrb[0].mxu0
    %v1173 = vadd.f32 %v653, %v1172
    %1174 = vdwg.mxu0
    %v1175 = vxor.u32 %v816, 2147483648
    %v1176 = vxor.u32 %v818, 2147483648
    %v1177 = vxor.u32 %v887, 2147483648
    %v1178 = vmul.f32 %v1175, 1.442695
    %v1179 = vpow.pop %v1178
    %v1180 = vmul.f32 %v1176, 1.442695
    %v1181 = vpow.pop %v1180
    %v1182 = vmul.f32 %v1177, 1.442695
    %v1183 = vpow.pop %v1182
    %v1184 = vadd.f32 %v1179, 1.0
    %v1185 = vadd.f32 %v1181, 1.0
    %v1186 = vadd.f32 %v1183, 1.0
    %v1187 = vrcp.pop %v1184
    %v1188 = vmul.f32 1.0, %v1187
    %v1189 = vrcp.pop %v1185
    %v1190 = vmul.f32 1.0, %v1189
    %v1191 = vrcp.pop %v1186
    %v1192 = vmul.f32 1.0, %v1191
    %v1193 = vxor.u32 %v889, 2147483648
    %v1194 = vxor.u32 %v958, 2147483648
    %v1195 = vxor.u32 %v960, 2147483648
    %v1196 = vmul.f32 %v1193, 1.442695
    %v1197 = vpow.pop %v1196
    %v1198 = vmul.f32 %v1194, 1.442695
    %v1199 = vpow.pop %v1198
    %v1200 = vmul.f32 %v1195, 1.442695
    %v1201 = vpow.pop %v1200
    %v1202 = vadd.f32 %v1197, 1.0
    %v1203 = vadd.f32 %v1199, 1.0
    %v1204 = vadd.f32 %v1201, 1.0
    %v1205 = vrcp.pop %v1202
    %v1206 = vmul.f32 1.0, %v1205
    %v1207 = vrcp.pop %v1203
    %v1208 = vmul.f32 1.0, %v1207
    %v1209 = vrcp.pop %v1204
    %v1210 = vmul.f32 1.0, %v1209
    %v1211 = vtanh.pop %v1029
    %v1212 = vtanh.pop %v1031
    %v1213 = vtanh.pop %v1100
    %v1214 = vxor.u32 %v1102, 2147483648
    %v1215 = vxor.u32 %v1171, 2147483648
    %v1216 = vxor.u32 %v1173, 2147483648
    %v1217 = vmul.f32 %v1214, 1.442695
    %v1218 = vpow.pop %v1217
    %v1219 = vmul.f32 %v1215, 1.442695
    %v1220 = vpow.pop %v1219
    %v1221 = vmul.f32 %v1216, 1.442695
    %v1222 = vpow.pop %v1221
    %v1223 = vadd.f32 %v1218, 1.0
    %v1224 = vadd.f32 %v1220, 1.0
    %v1225 = vadd.f32 %v1222, 1.0
    %v1226 = vrcp.pop %v1223
    %v1227 = vmul.f32 1.0, %v1226
    %v1228 = vrcp.pop %v1224
    %v1229 = vmul.f32 1.0, %v1228
    %v1230 = vrcp.pop %v1225
    %v1231 = vmul.f32 1.0, %v1230
    %v1232 = vmul.f32 %v1206, 0.0
    %v1233 = vmul.f32 %v1208, 0.0
    %v1234 = vmul.f32 %v1210, 0.0
    %v1235 = vmul.f32 %v1188, %v1211
    %v1236 = vmul.f32 %v1190, %v1212
    %v1237 = vmul.f32 %v1192, %v1213
    %v1238 = vadd.f32 %v1232, %v1235
    %v1239 = vadd.f32 %v1233, %v1236
    %v1240 = vadd.f32 %v1234, %v1237
    %v1241 = vtanh.pop %v1238
    %v1242 = vtanh.pop %v1239
    %v1243 = vtanh.pop %v1240
    %v1244 = vmul.f32 %v1227, %v1241
    %v1245 = vmul.f32 %v1229, %v1242
    %v1246 = vmul.f32 %v1231, %v1243
    %1247 = vrot.lane.b32.xlu0 %v310, 126
    %v1248 = vpop.permute.xlu0 %1247
    %v1249 = vsel %vm720, %v1248, 0
    %1251 = vmatprep.subr.mxu0 %v727
    %1252 = vmatpush1.msra.mxu0 %v725
    %1253 = vmatprep.subr.mxu0 0.0
    %1254 = vmatpush1.msra.mxu0 0.0
    %1255 = vmatprep.subr.mxu0 0.0
    %1256 = vmatpush1.msra.mxu0 0.0
    %1257 = vmatprep.subr.mxu0 0.0
    %1258 = vmatpush1.msra.mxu0 0.0
    %1259 = vmatprep.subr.mxu0 0.0
    %1260 = vmatpush1.msra.mxu0 0.0
    %1261 = vmatprep.subr.mxu0 0.0
    %1262 = vmatpush1.msra.mxu0 0.0
    %1263 = vmatprep.subr.mxu0 0.0
    %1264 = vmatpush1.msra.mxu0 0.0
    %1265 = vmatprep.subr.mxu0 0.0
    %1266 = vmatpush1.msra.mxu0 0.0
    %1267 = vmatprep.subr.mxu0 0.0
    %1268 = vmatpush1.msra.mxu0 0.0
    %1269 = vmatprep.subr.mxu0 0.0
    %1270 = vmatpush1.msra.mxu0 0.0
    %1271 = vmatprep.subr.mxu0 0.0
    %1272 = vmatpush1.msra.mxu0 0.0
    %1273 = vmatprep.subr.mxu0 0.0
    %1274 = vmatpush1.msra.mxu0 0.0
    %1275 = vmatprep.subr.mxu0 0.0
    %1276 = vmatpush1.msra.mxu0 0.0
    %1277 = vmatprep.subr.mxu0 0.0
    %1278 = vmatpush1.msra.mxu0 0.0
    %1279 = vmatprep.subr.mxu0 0.0
    %1280 = vmatpush1.msra.mxu0 0.0
    %1281 = vmatprep.subr.mxu0 0.0
    %1282 = vmatpush1.msra.mxu0 0.0
    %1283 = vmatprep.subr.mxu0 0.0
    %1284 = vmatpush1.msra.mxu0 0.0
    %1285 = vmatprep.subr.mxu0 0.0
    %1286 = vmatpush1.msra.mxu0 0.0
    %1287 = vmatprep.subr.mxu0 0.0
    %1288 = vmatpush1.msra.mxu0 0.0
    %1289 = vmatprep.subr.mxu0 0.0
    %1290 = vmatpush1.msra.mxu0 0.0
    %1291 = vmatprep.subr.mxu0 0.0
    %1292 = vmatpush1.msra.mxu0 0.0
    %1293 = vmatprep.subr.mxu0 0.0
    %1294 = vmatpush1.msra.mxu0 0.0
    %1295 = vmatprep.subr.mxu0 0.0
    %1296 = vmatpush1.msra.mxu0 0.0
    %1297 = vmatprep.subr.mxu0 0.0
    %1298 = vmatpush1.msra.mxu0 0.0
    %1299 = vmatprep.subr.mxu0 0.0
    %1300 = vmatpush1.msra.mxu0 0.0
    %1301 = vmatprep.subr.mxu0 0.0
    %1302 = vmatpush1.msra.mxu0 0.0
    %1303 = vmatprep.subr.mxu0 0.0
    %1304 = vmatpush1.msra.mxu0 0.0
    %1305 = vmatprep.subr.mxu0 0.0
    %1306 = vmatpush1.msra.mxu0 0.0
    %1307 = vmatprep.subr.mxu0 0.0
    %1308 = vmatpush1.msra.mxu0 0.0
    %1309 = vmatprep.subr.mxu0 0.0
    %1310 = vmatpush1.msra.mxu0 0.0
    %1311 = vmatprep.subr.mxu0 0.0
    %1312 = vmatpush1.msra.mxu0 0.0
    %1313 = vmatprep.subr.mxu0 0.0
    %1314 = vmatpush1.msra.mxu0 0.0
    %1315 = vmatprep.mubr.f32.mxu0 0.0
    %1316 = vmatmul.mubr.f32.gmra.mrb[0].mxu0 %v1249
    %v1317 = vpop.f32.mrb[0].mxu0
    %v1318 = vadd.f32 %v609, %v1317
    %v1319 = vpop.f32.mrb[0].mxu0
    %v1320 = vadd.f32 %v613, %v1319
    %1321 = vdwg.mxu0
    %1322 = vmatprep.subr.mxu0 %v731
    %1323 = vmatpush1.msra.mxu0 %v729
    %1324 = vmatprep.subr.mxu0 0.0
    %1325 = vmatpush1.msra.mxu0 0.0
    %1326 = vmatprep.subr.mxu0 0.0
    %1327 = vmatpush1.msra.mxu0 0.0
    %1328 = vmatprep.subr.mxu0 0.0
    %1329 = vmatpush1.msra.mxu0 0.0
    %1330 = vmatprep.subr.mxu0 0.0
    %1331 = vmatpush1.msra.mxu0 0.0
    %1332 = vmatprep.subr.mxu0 0.0
    %1333 = vmatpush1.msra.mxu0 0.0
    %1334 = vmatprep.subr.mxu0 0.0
    %1335 = vmatpush1.msra.mxu0 0.0
    %1336 = vmatprep.subr.mxu0 0.0
    %1337 = vmatpush1.msra.mxu0 0.0
    %1338 = vmatprep.subr.mxu0 0.0
    %1339 = vmatpush1.msra.mxu0 0.0
    %1340 = vmatprep.subr.mxu0 0.0
    %1341 = vmatpush1.msra.mxu0 0.0
    %1342 = vmatprep.subr.mxu0 0.0
    %1343 = vmatpush1.msra.mxu0 0.0
    %1344 = vmatprep.subr.mxu0 0.0
    %1345 = vmatpush1.msra.mxu0 0.0
    %1346 = vmatprep.subr.mxu0 0.0
    %1347 = vmatpush1.msra.mxu0 0.0
    %1348 = vmatprep.subr.mxu0 0.0
    %1349 = vmatpush1.msra.mxu0 0.0
    %1350 = vmatprep.subr.mxu0 0.0
    %1351 = vmatpush1.msra.mxu0 0.0
    %1352 = vmatprep.subr.mxu0 0.0
    %1353 = vmatpush1.msra.mxu0 0.0
    %1354 = vmatprep.subr.mxu0 0.0
    %1355 = vmatpush1.msra.mxu0 0.0
    %1356 = vmatprep.subr.mxu0 0.0
    %1357 = vmatpush1.msra.mxu0 0.0
    %1358 = vmatprep.subr.mxu0 0.0
    %1359 = vmatpush1.msra.mxu0 0.0
    %1360 = vmatprep.subr.mxu0 0.0
    %1361 = vmatpush1.msra.mxu0 0.0
    %1362 = vmatprep.subr.mxu0 0.0
    %1363 = vmatpush1.msra.mxu0 0.0
    %1364 = vmatprep.subr.mxu0 0.0
    %1365 = vmatpush1.msra.mxu0 0.0
    %1366 = vmatprep.subr.mxu0 0.0
    %1367 = vmatpush1.msra.mxu0 0.0
    %1368 = vmatprep.subr.mxu0 0.0
    %1369 = vmatpush1.msra.mxu0 0.0
    %1370 = vmatprep.subr.mxu0 0.0
    %1371 = vmatpush1.msra.mxu0 0.0
    %1372 = vmatprep.subr.mxu0 0.0
    %1373 = vmatpush1.msra.mxu0 0.0
    %1374 = vmatprep.subr.mxu0 0.0
    %1375 = vmatpush1.msra.mxu0 0.0
    %1376 = vmatprep.subr.mxu0 0.0
    %1377 = vmatpush1.msra.mxu0 0.0
    %1378 = vmatprep.subr.mxu0 0.0
    %1379 = vmatpush1.msra.mxu0 0.0
    %1380 = vmatprep.subr.mxu0 0.0
    %1381 = vmatpush1.msra.mxu0 0.0
    %1382 = vmatprep.subr.mxu0 0.0
    %1383 = vmatpush1.msra.mxu0 0.0
    %1384 = vmatprep.subr.mxu0 0.0
    %1385 = vmatpush1.msra.mxu0 0.0
    %1386 = vmatprep.mubr.f32.mxu0 0.0
    %1387 = vmatmul.mubr.f32.gmra.mrb[0].mxu0 %v1249
    %v1388 = vpop.f32.mrb[0].mxu0
    %v1389 = vadd.f32 %v617, %v1388
    %v1390 = vpop.f32.mrb[0].mxu0
    %v1391 = vadd.f32 %v621, %v1390
    %1392 = vdwg.mxu0
    %1393 = vmatprep.subr.mxu0 %v735
    %1394 = vmatpush1.msra.mxu0 %v733
    %1395 = vmatprep.subr.mxu0 0.0
    %1396 = vmatpush1.msra.mxu0 0.0
    %1397 = vmatprep.subr.mxu0 0.0
    %1398 = vmatpush1.msra.mxu0 0.0
    %1399 = vmatprep.subr.mxu0 0.0
    %1400 = vmatpush1.msra.mxu0 0.0
    %1401 = vmatprep.subr.mxu0 0.0
    %1402 = vmatpush1.msra.mxu0 0.0
    %1403 = vmatprep.subr.mxu0 0.0
    %1404 = vmatpush1.msra.mxu0 0.0
    %1405 = vmatprep.subr.mxu0 0.0
    %1406 = vmatpush1.msra.mxu0 0.0
    %1407 = vmatprep.subr.mxu0 0.0
    %1408 = vmatpush1.msra.mxu0 0.0
    %1409 = vmatprep.subr.mxu0 0.0
    %1410 = vmatpush1.msra.mxu0 0.0
    %1411 = vmatprep.subr.mxu0 0.0
    %1412 = vmatpush1.msra.mxu0 0.0
    %1413 = vmatprep.subr.mxu0 0.0
    %1414 = vmatpush1.msra.mxu0 0.0
    %1415 = vmatprep.subr.mxu0 0.0
    %1416 = vmatpush1.msra.mxu0 0.0
    %1417 = vmatprep.subr.mxu0 0.0
    %1418 = vmatpush1.msra.mxu0 0.0
    %1419 = vmatprep.subr.mxu0 0.0
    %1420 = vmatpush1.msra.mxu0 0.0
    %1421 = vmatprep.subr.mxu0 0.0
    %1422 = vmatpush1.msra.mxu0 0.0
    %1423 = vmatprep.subr.mxu0 0.0
    %1424 = vmatpush1.msra.mxu0 0.0
    %1425 = vmatprep.subr.mxu0 0.0
    %1426 = vmatpush1.msra.mxu0 0.0
    %1427 = vmatprep.subr.mxu0 0.0
    %1428 = vmatpush1.msra.mxu0 0.0
    %1429 = vmatprep.subr.mxu0 0.0
    %1430 = vmatpush1.msra.mxu0 0.0
    %1431 = vmatprep.subr.mxu0 0.0
    %1432 = vmatpush1.msra.mxu0 0.0
    %1433 = vmatprep.subr.mxu0 0.0
    %1434 = vmatpush1.msra.mxu0 0.0
    %1435 = vmatprep.subr.mxu0 0.0
    %1436 = vmatpush1.msra.mxu0 0.0
    %1437 = vmatprep.subr.mxu0 0.0
    %1438 = vmatpush1.msra.mxu0 0.0
    %1439 = vmatprep.subr.mxu0 0.0
    %1440 = vmatpush1.msra.mxu0 0.0
    %1441 = vmatprep.subr.mxu0 0.0
    %1442 = vmatpush1.msra.mxu0 0.0
    %1443 = vmatprep.subr.mxu0 0.0
    %1444 = vmatpush1.msra.mxu0 0.0
    %1445 = vmatprep.subr.mxu0 0.0
    %1446 = vmatpush1.msra.mxu0 0.0
    %1447 = vmatprep.subr.mxu0 0.0
    %1448 = vmatpush1.msra.mxu0 0.0
    %1449 = vmatprep.subr.mxu0 0.0
    %1450 = vmatpush1.msra.mxu0 0.0
    %1451 = vmatprep.subr.mxu0 0.0
    %1452 = vmatpush1.msra.mxu0 0.0
    %1453 = vmatprep.subr.mxu0 0.0
    %1454 = vmatpush1.msra.mxu0 0.0
    %1455 = vmatprep.subr.mxu0 0.0
    %1456 = vmatpush1.msra.mxu0 0.0
    %1457 = vmatprep.mubr.f32.mxu0 0.0
    %1458 = vmatmul.mubr.f32.gmra.mrb[0].mxu0 %v1249
    %v1459 = vpop.f32.mrb[0].mxu0
    %v1460 = vadd.f32 %v625, %v1459
    %v1461 = vpop.f32.mrb[0].mxu0
    %v1462 = vadd.f32 %v629, %v1461
    %1463 = vdwg.mxu0
    %1464 = vmatprep.subr.mxu0 %v739
    %1465 = vmatpush1.msra.mxu0 %v737
    %1466 = vmatprep.subr.mxu0 0.0
    %1467 = vmatpush1.msra.mxu0 0.0
    %1468 = vmatprep.subr.mxu0 0.0
    %1469 = vmatpush1.msra.mxu0 0.0
    %1470 = vmatprep.subr.mxu0 0.0
    %1471 = vmatpush1.msra.mxu0 0.0
    %1472 = vmatprep.subr.mxu0 0.0
    %1473 = vmatpush1.msra.mxu0 0.0
    %1474 = vmatprep.subr.mxu0 0.0
    %1475 = vmatpush1.msra.mxu0 0.0
    %1476 = vmatprep.subr.mxu0 0.0
    %1477 = vmatpush1.msra.mxu0 0.0
    %1478 = vmatprep.subr.mxu0 0.0
    %1479 = vmatpush1.msra.mxu0 0.0
    %1480 = vmatprep.subr.mxu0 0.0
    %1481 = vmatpush1.msra.mxu0 0.0
    %1482 = vmatprep.subr.mxu0 0.0
    %1483 = vmatpush1.msra.mxu0 0.0
    %1484 = vmatprep.subr.mxu0 0.0
    %1485 = vmatpush1.msra.mxu0 0.0
    %1486 = vmatprep.subr.mxu0 0.0
    %1487 = vmatpush1.msra.mxu0 0.0
    %1488 = vmatprep.subr.mxu0 0.0
    %1489 = vmatpush1.msra.mxu0 0.0
    %1490 = vmatprep.subr.mxu0 0.0
    %1491 = vmatpush1.msra.mxu0 0.0
    %1492 = vmatprep.subr.mxu0 0.0
    %1493 = vmatpush1.msra.mxu0 0.0
    %1494 = vmatprep.subr.mxu0 0.0
    %1495 = vmatpush1.msra.mxu0 0.0
    %1496 = vmatprep.subr.mxu0 0.0
    %1497 = vmatpush1.msra.mxu0 0.0
    %1498 = vmatprep.subr.mxu0 0.0
    %1499 = vmatpush1.msra.mxu0 0.0
    %1500 = vmatprep.subr.mxu0 0.0
    %1501 = vmatpush1.msra.mxu0 0.0
    %1502 = vmatprep.subr.mxu0 0.0
    %1503 = vmatpush1.msra.mxu0 0.0
    %1504 = vmatprep.subr.mxu0 0.0
    %1505 = vmatpush1.msra.mxu0 0.0
    %1506 = vmatprep.subr.mxu0 0.0
    %1507 = vmatpush1.msra.mxu0 0.0
    %1508 = vmatprep.subr.mxu0 0.0
    %1509 = vmatpush1.msra.mxu0 0.0
    %1510 = vmatprep.subr.mxu0 0.0
    %1511 = vmatpush1.msra.mxu0 0.0
    %1512 = vmatprep.subr.mxu0 0.0
    %1513 = vmatpush1.msra.mxu0 0.0
    %1514 = vmatprep.subr.mxu0 0.0
    %1515 = vmatpush1.msra.mxu0 0.0
    %1516 = vmatprep.subr.mxu0 0.0
    %1517 = vmatpush1.msra.mxu0 0.0
    %1518 = vmatprep.subr.mxu0 0.0
    %1519 = vmatpush1.msra.mxu0 0.0
    %1520 = vmatprep.subr.mxu0 0.0
    %1521 = vmatpush1.msra.mxu0 0.0
    %1522 = vmatprep.subr.mxu0 0.0
    %1523 = vmatpush1.msra.mxu0 0.0
    %1524 = vmatprep.subr.mxu0 0.0
    %1525 = vmatpush1.msra.mxu0 0.0
    %1526 = vmatprep.subr.mxu0 0.0
    %1527 = vmatpush1.msra.mxu0 0.0
    %1528 = vmatprep.mubr.f32.mxu0 0.0
    %1529 = vmatmul.mubr.f32.gmra.mrb[0].mxu0 %v1249
    %v1530 = vpop.f32.mrb[0].mxu0
    %v1531 = vadd.f32 %v633, %v1530
    %v1532 = vpop.f32.mrb[0].mxu0
    %v1533 = vadd.f32 %v637, %v1532
    %1534 = vdwg.mxu0
    %1535 = vmatprep.subr.mxu0 %v743
    %1536 = vmatpush1.msra.mxu0 %v741
    %1537 = vmatprep.subr.mxu0 0.0
    %1538 = vmatpush1.msra.mxu0 0.0
    %1539 = vmatprep.subr.mxu0 0.0
    %1540 = vmatpush1.msra.mxu0 0.0
    %1541 = vmatprep.subr.mxu0 0.0
    %1542 = vmatpush1.msra.mxu0 0.0
    %1543 = vmatprep.subr.mxu0 0.0
    %1544 = vmatpush1.msra.mxu0 0.0
    %1545 = vmatprep.subr.mxu0 0.0
    %1546 = vmatpush1.msra.mxu0 0.0
    %1547 = vmatprep.subr.mxu0 0.0
    %1548 = vmatpush1.msra.mxu0 0.0
    %1549 = vmatprep.subr.mxu0 0.0
    %1550 = vmatpush1.msra.mxu0 0.0
    %1551 = vmatprep.subr.mxu0 0.0
    %1552 = vmatpush1.msra.mxu0 0.0
    %1553 = vmatprep.subr.mxu0 0.0
    %1554 = vmatpush1.msra.mxu0 0.0
    %1555 = vmatprep.subr.mxu0 0.0
    %1556 = vmatpush1.msra.mxu0 0.0
    %1557 = vmatprep.subr.mxu0 0.0
    %1558 = vmatpush1.msra.mxu0 0.0
    %1559 = vmatprep.subr.mxu0 0.0
    %1560 = vmatpush1.msra.mxu0 0.0
    %1561 = vmatprep.subr.mxu0 0.0
    %1562 = vmatpush1.msra.mxu0 0.0
    %1563 = vmatprep.subr.mxu0 0.0
    %1564 = vmatpush1.msra.mxu0 0.0
    %1565 = vmatprep.subr.mxu0 0.0
    %1566 = vmatpush1.msra.mxu0 0.0
    %1567 = vmatprep.subr.mxu0 0.0
    %1568 = vmatpush1.msra.mxu0 0.0
    %1569 = vmatprep.subr.mxu0 0.0
    %1570 = vmatpush1.msra.mxu0 0.0
    %1571 = vmatprep.subr.mxu0 0.0
    %1572 = vmatpush1.msra.mxu0 0.0
    %1573 = vmatprep.subr.mxu0 0.0
    %1574 = vmatpush1.msra.mxu0 0.0
    %1575 = vmatprep.subr.mxu0 0.0
    %1576 = vmatpush1.msra.mxu0 0.0
    %1577 = vmatprep.subr.mxu0 0.0
    %1578 = vmatpush1.msra.mxu0 0.0
    %1579 = vmatprep.subr.mxu0 0.0
    %1580 = vmatpush1.msra.mxu0 0.0
    %1581 = vmatprep.subr.mxu0 0.0
    %1582 = vmatpush1.msra.mxu0 0.0
    %1583 = vmatprep.subr.mxu0 0.0
    %1584 = vmatpush1.msra.mxu0 0.0
    %1585 = vmatprep.subr.mxu0 0.0
    %1586 = vmatpush1.msra.mxu0 0.0
    %1587 = vmatprep.subr.mxu0 0.0
    %1588 = vmatpush1.msra.mxu0 0.0
    %1589 = vmatprep.subr.mxu0 0.0
    %1590 = vmatpush1.msra.mxu0 0.0
    %1591 = vmatprep.subr.mxu0 0.0
    %1592 = vmatpush1.msra.mxu0 0.0
    %1593 = vmatprep.subr.mxu0 0.0
    %1594 = vmatpush1.msra.mxu0 0.0
    %1595 = vmatprep.subr.mxu0 0.0
    %1596 = vmatpush1.msra.mxu0 0.0
    %1597 = vmatprep.subr.mxu0 0.0
    %1598 = vmatpush1.msra.mxu0 0.0
    %1599 = vmatprep.mubr.f32.mxu0 0.0
    %1600 = vmatmul.mubr.f32.gmra.mrb[0].mxu0 %v1249
    %v1601 = vpop.f32.mrb[0].mxu0
    %v1602 = vadd.f32 %v641, %v1601
    %v1603 = vpop.f32.mrb[0].mxu0
    %v1604 = vadd.f32 %v645, %v1603
    %1605 = vdwg.mxu0
    %1606 = vmatprep.subr.mxu0 %v747
    %1607 = vmatpush1.msra.mxu0 %v745
    %1608 = vmatprep.subr.mxu0 0.0
    %1609 = vmatpush1.msra.mxu0 0.0
    %1610 = vmatprep.subr.mxu0 0.0
    %1611 = vmatpush1.msra.mxu0 0.0
    %1612 = vmatprep.subr.mxu0 0.0
    %1613 = vmatpush1.msra.mxu0 0.0
    %1614 = vmatprep.subr.mxu0 0.0
    %1615 = vmatpush1.msra.mxu0 0.0
    %1616 = vmatprep.subr.mxu0 0.0
    %1617 = vmatpush1.msra.mxu0 0.0
    %1618 = vmatprep.subr.mxu0 0.0
    %1619 = vmatpush1.msra.mxu0 0.0
    %1620 = vmatprep.subr.mxu0 0.0
    %1621 = vmatpush1.msra.mxu0 0.0
    %1622 = vmatprep.subr.mxu0 0.0
    %1623 = vmatpush1.msra.mxu0 0.0
    %1624 = vmatprep.subr.mxu0 0.0
    %1625 = vmatpush1.msra.mxu0 0.0
    %1626 = vmatprep.subr.mxu0 0.0
    %1627 = vmatpush1.msra.mxu0 0.0
    %1628 = vmatprep.subr.mxu0 0.0
    %1629 = vmatpush1.msra.mxu0 0.0
    %1630 = vmatprep.subr.mxu0 0.0
    %1631 = vmatpush1.msra.mxu0 0.0
    %1632 = vmatprep.subr.mxu0 0.0
    %1633 = vmatpush1.msra.mxu0 0.0
    %1634 = vmatprep.subr.mxu0 0.0
    %1635 = vmatpush1.msra.mxu0 0.0
    %1636 = vmatprep.subr.mxu0 0.0
    %1637 = vmatpush1.msra.mxu0 0.0
    %1638 = vmatprep.subr.mxu0 0.0
    %1639 = vmatpush1.msra.mxu0 0.0
    %1640 = vmatprep.subr.mxu0 0.0
    %1641 = vmatpush1.msra.mxu0 0.0
    %1642 = vmatprep.subr.mxu0 0.0
    %1643 = vmatpush1.msra.mxu0 0.0
    %1644 = vmatprep.subr.mxu0 0.0
    %1645 = vmatpush1.msra.mxu0 0.0
    %1646 = vmatprep.subr.mxu0 0.0
    %1647 = vmatpush1.msra.mxu0 0.0
    %1648 = vmatprep.subr.mxu0 0.0
    %1649 = vmatpush1.msra.mxu0 0.0
    %1650 = vmatprep.subr.mxu0 0.0
    %1651 = vmatpush1.msra.mxu0 0.0
    %1652 = vmatprep.subr.mxu0 0.0
    %1653 = vmatpush1.msra.mxu0 0.0
    %1654 = vmatprep.subr.mxu0 0.0
    %1655 = vmatpush1.msra.mxu0 0.0
    %1656 = vmatprep.subr.mxu0 0.0
    %1657 = vmatpush1.msra.mxu0 0.0
    %1658 = vmatprep.subr.mxu0 0.0
    %1659 = vmatpush1.msra.mxu0 0.0
    %1660 = vmatprep.subr.mxu0 0.0
    %1661 = vmatpush1.msra.mxu0 0.0
    %1662 = vmatprep.subr.mxu0 0.0
    %1663 = vmatpush1.msra.mxu0 0.0
    %1664 = vmatprep.subr.mxu0 0.0
    %1665 = vmatpush1.msra.mxu0 0.0
    %1666 = vmatprep.subr.mxu0 0.0
    %1667 = vmatpush1.msra.mxu0 0.0
    %1668 = vmatprep.subr.mxu0 0.0
    %1669 = vmatpush1.msra.mxu0 0.0
    %1670 = vmatprep.mubr.f32.mxu0 0.0
    %1671 = vmatmul.mubr.f32.gmra.mrb[0].mxu0 %v1249
    %v1672 = vpop.f32.mrb[0].mxu0
    %v1673 = vadd.f32 %v649, %v1672
    %v1674 = vpop.f32.mrb[0].mxu0
    %v1675 = vadd.f32 %v653, %v1674
    %1676 = vdwg.mxu0
    %v1677 = vpack.c.bf16 %v1244, %v1244
    %v1678 = vpack.c.bf16 %v1245, %v1245
    %v1679 = vpack.c.bf16 %v1246, %v1246
    %v1968 = vunpack.c.l.b16 %v314
    %v1969 = vunpack.c.h.b16 %v314
    %v1970 = vunpack.c.l.b16 %v315
    %v1971 = vunpack.c.h.b16 %v315
    %v1972 = vunpack.c.l.b16 %v316
    %v1973 = vunpack.c.h.b16 %v316
    %v1974 = vunpack.c.l.b16 %v317
    %v1975 = vunpack.c.h.b16 %v317
    %v1976 = vunpack.c.l.b16 %v318
    %v1977 = vunpack.c.h.b16 %v318
    %v1978 = vunpack.c.l.b16 %v319
    %v1979 = vunpack.c.h.b16 %v319
    %v1980 = vunpack.c.l.b16 %v320
    %v1981 = vunpack.c.h.b16 %v320
    %v1982 = vunpack.c.l.b16 %v321
    %v1983 = vunpack.c.h.b16 %v321
    %v1984 = vunpack.c.l.b16 %v322
    %v1985 = vunpack.c.h.b16 %v322
    %v1986 = vunpack.c.l.b16 %v323
    %v1987 = vunpack.c.h.b16 %v323
    %v1988 = vunpack.c.l.b16 %v324
    %v1989 = vunpack.c.h.b16 %v324
    %v1990 = vunpack.c.l.b16 %v325
    %v1991 = vunpack.c.h.b16 %v325
    %v1992 = vunpack.c.l.b16 %v326
    %v1993 = vunpack.c.h.b16 %v326
    %v1994 = vunpack.c.l.b16 %v327
    %v1995 = vunpack.c.h.b16 %v327
    %v1996 = vunpack.c.l.b16 %v328
    %v1997 = vunpack.c.h.b16 %v328
    %v1998 = vunpack.c.l.b16 %v329
    %v1999 = vunpack.c.h.b16 %v329
    %v2000 = vunpack.c.l.b16 %v330
    %v2001 = vunpack.c.h.b16 %v330
    %v2002 = vunpack.c.l.b16 %v331
    %v2003 = vunpack.c.h.b16 %v331
    %v2004 = vunpack.c.l.b16 %v332
    %v2005 = vunpack.c.h.b16 %v332
    %v2006 = vunpack.c.l.b16 %v333
    %v2007 = vunpack.c.h.b16 %v333
    %v2008 = vunpack.c.l.b16 %v334
    %v2009 = vunpack.c.h.b16 %v334
    %v2010 = vunpack.c.l.b16 %v335
    %v2011 = vunpack.c.h.b16 %v335
    %v2012 = vunpack.c.l.b16 %v336
    %v2013 = vunpack.c.h.b16 %v336
    %v2014 = vunpack.c.l.b16 %v337
    %v2015 = vunpack.c.h.b16 %v337
    %v2016 = vunpack.c.l.b16 %v338
    %v2017 = vunpack.c.h.b16 %v338
    %v2018 = vunpack.c.l.b16 %v339
    %v2019 = vunpack.c.h.b16 %v339
    %v2020 = vunpack.c.l.b16 %v340
    %v2021 = vunpack.c.h.b16 %v340
    %v2022 = vunpack.c.l.b16 %v341
    %v2023 = vunpack.c.h.b16 %v341
    %v2024 = vunpack.c.l.b16 %v342
    %v2025 = vunpack.c.h.b16 %v342
    %v2026 = vunpack.c.l.b16 %v343
    %v2027 = vunpack.c.h.b16 %v343
    %v2028 = vunpack.c.l.b16 %v344
    %v2029 = vunpack.c.h.b16 %v344
    %v2030 = vunpack.c.l.b16 %v345
    %v2031 = vunpack.c.h.b16 %v345
    %v2032 = vunpack.c.l.b16 %v346
    %v2033 = vunpack.c.h.b16 %v346
    %v2034 = vunpack.c.l.b16 %v347
    %v2035 = vunpack.c.h.b16 %v347
    %v2036 = vunpack.c.l.b16 %v348
    %v2037 = vunpack.c.h.b16 %v348
    %v2038 = vunpack.c.l.b16 %v349
    %v2039 = vunpack.c.h.b16 %v349
    %v2040 = vunpack.c.l.b16 %v350
    %v2041 = vunpack.c.h.b16 %v350
    %v2042 = vunpack.c.l.b16 %v351
    %v2043 = vunpack.c.h.b16 %v351
    %v2044 = vunpack.c.l.b16 %v352
    %v2045 = vunpack.c.h.b16 %v352
    %v2046 = vunpack.c.l.b16 %v353
    %v2047 = vunpack.c.h.b16 %v353
    %v2048 = vunpack.c.l.b16 %v354
    %v2049 = vunpack.c.h.b16 %v354
    %v2050 = vunpack.c.l.b16 %v355
    %v2051 = vunpack.c.h.b16 %v355
    %v2052 = vunpack.c.l.b16 %v356
    %v2053 = vunpack.c.h.b16 %v356
    %v2054 = vunpack.c.l.b16 %v357
    %v2055 = vunpack.c.h.b16 %v357
    %v2056 = vunpack.c.l.b16 %v358
    %v2057 = vunpack.c.h.b16 %v358
    %v2058 = vunpack.c.l.b16 %v359
    %v2059 = vunpack.c.h.b16 %v359
    %v2060 = vunpack.c.l.b16 %v360
    %v2061 = vunpack.c.h.b16 %v360
    %v2062 = vunpack.c.l.b16 %v361
    %v2063 = vunpack.c.h.b16 %v361
    %v2064 = vunpack.c.l.b16 %v362
    %v2065 = vunpack.c.h.b16 %v362
    %v2066 = vunpack.c.l.b16 %v363
    %v2067 = vunpack.c.h.b16 %v363
    %v2068 = vunpack.c.l.b16 %v364
    %v2069 = vunpack.c.h.b16 %v364
    %v2070 = vunpack.c.l.b16 %v365
    %v2071 = vunpack.c.h.b16 %v365
    %v2072 = vunpack.c.l.b16 %v366
    %v2073 = vunpack.c.h.b16 %v366
    %v2074 = vunpack.c.l.b16 %v367
    %v2075 = vunpack.c.h.b16 %v367
    %v2076 = vunpack.c.l.b16 %v368
    %v2077 = vunpack.c.h.b16 %v368
    %v2078 = vunpack.c.l.b16 %v369
    %v2079 = vunpack.c.h.b16 %v369
    %v2080 = vunpack.c.l.b16 %v370
    %v2081 = vunpack.c.h.b16 %v370
    %v2082 = vunpack.c.l.b16 %v371
    %v2083 = vunpack.c.h.b16 %v371
    %v2084 = vunpack.c.l.b16 %v372
    %v2085 = vunpack.c.h.b16 %v372
    %v2086 = vunpack.c.l.b16 %v373
    %v2087 = vunpack.c.h.b16 %v373
    %v2088 = vunpack.c.l.b16 %v374
    %v2089 = vunpack.c.h.b16 %v374
    %v2090 = vunpack.c.l.b16 %v375
    %v2091 = vunpack.c.h.b16 %v375
    %v2092 = vunpack.c.l.b16 %v376
    %v2093 = vunpack.c.h.b16 %v376
    %v2094 = vunpack.c.l.b16 %v377
    %v2095 = vunpack.c.h.b16 %v377
    %v2096 = vunpack.c.l.b16 %v378
    %v2097 = vunpack.c.h.b16 %v378
    %v2098 = vunpack.c.l.b16 %v379
    %v2099 = vunpack.c.h.b16 %v379
    %v2100 = vunpack.c.l.b16 %v380
    %v2101 = vunpack.c.h.b16 %v380
    %v2102 = vunpack.c.l.b16 %v381
    %v2103 = vunpack.c.h.b16 %v381
    %v2104 = vunpack.c.l.b16 %v382
    %v2105 = vunpack.c.h.b16 %v382
    %v2106 = vunpack.c.l.b16 %v383
    %v2107 = vunpack.c.h.b16 %v383
    %v2108 = vunpack.c.l.b16 %v384
    %v2109 = vunpack.c.h.b16 %v384
    %v2110 = vunpack.c.l.b16 %v385
    %v2111 = vunpack.c.h.b16 %v385
    %v2112 = vunpack.c.l.b16 %v386
    %v2113 = vunpack.c.h.b16 %v386
    %v2114 = vunpack.c.l.b16 %v387
    %v2115 = vunpack.c.h.b16 %v387
    %v2116 = vunpack.c.l.b16 %v388
    %v2117 = vunpack.c.h.b16 %v388
    %v2118 = vunpack.c.l.b16 %v389
    %v2119 = vunpack.c.h.b16 %v389
    %v2120 = vunpack.c.l.b16 %v390
    %v2121 = vunpack.c.h.b16 %v390
    %v2122 = vunpack.c.l.b16 %v391
    %v2123 = vunpack.c.h.b16 %v391
    %v2124 = vunpack.c.l.b16 %v392
    %v2125 = vunpack.c.h.b16 %v392
    %v2126 = vunpack.c.l.b16 %v393
    %v2127 = vunpack.c.h.b16 %v393
    %v2128 = vunpack.c.l.b16 %v394
    %v2129 = vunpack.c.h.b16 %v394
    %v2130 = vunpack.c.l.b16 %v395
    %v2131 = vunpack.c.h.b16 %v395
    %v2132 = vunpack.c.l.b16 %v396
    %v2133 = vunpack.c.h.b16 %v396
    %v2134 = vunpack.c.l.b16 %v397
    %v2135 = vunpack.c.h.b16 %v397
    %v2136 = vunpack.c.l.b16 %v398
    %v2137 = vunpack.c.h.b16 %v398
    %v2138 = vunpack.c.l.b16 %v399
    %v2139 = vunpack.c.h.b16 %v399
    %v2140 = vunpack.c.l.b16 %v400
    %v2141 = vunpack.c.h.b16 %v400
    %v2142 = vunpack.c.l.b16 %v401
    %v2143 = vunpack.c.h.b16 %v401
    %v2144 = vunpack.c.l.b16 %v402
    %v2145 = vunpack.c.h.b16 %v402
    %v2146 = vunpack.c.l.b16 %v403
    %v2147 = vunpack.c.h.b16 %v403
    %v2148 = vunpack.c.l.b16 %v404
    %v2149 = vunpack.c.h.b16 %v404
    %v2150 = vunpack.c.l.b16 %v405
    %v2151 = vunpack.c.h.b16 %v405
    %v2152 = vunpack.c.l.b16 %v406
    %v2153 = vunpack.c.h.b16 %v406
    %v2154 = vunpack.c.l.b16 %v407
    %v2155 = vunpack.c.h.b16 %v407
    %v2156 = vunpack.c.l.b16 %v408
    %v2157 = vunpack.c.h.b16 %v408
    %v2158 = vunpack.c.l.b16 %v409
    %v2159 = vunpack.c.h.b16 %v409
    %v2160 = vunpack.c.l.b16 %v410
    %v2161 = vunpack.c.h.b16 %v410
    %v2162 = vunpack.c.l.b16 %v411
    %v2163 = vunpack.c.h.b16 %v411
    %v2164 = vunpack.c.l.b16 %v412
    %v2165 = vunpack.c.h.b16 %v412
    %v2166 = vunpack.c.l.b16 %v413
    %v2167 = vunpack.c.h.b16 %v413
    %v2168 = vunpack.c.l.b16 %v414
    %v2169 = vunpack.c.h.b16 %v414
    %v2170 = vunpack.c.l.b16 %v415
    %v2171 = vunpack.c.h.b16 %v415
    %v2172 = vunpack.c.l.b16 %v416
    %v2173 = vunpack.c.h.b16 %v416
    %v2174 = vunpack.c.l.b16 %v417
    %v2175 = vunpack.c.h.b16 %v417
    %v2176 = vunpack.c.l.b16 %v418
    %v2177 = vunpack.c.h.b16 %v418
    %v2178 = vunpack.c.l.b16 %v419
    %v2179 = vunpack.c.h.b16 %v419
    %v2180 = vunpack.c.l.b16 %v420
    %v2181 = vunpack.c.h.b16 %v420
    %v2182 = vunpack.c.l.b16 %v421
    %v2183 = vunpack.c.h.b16 %v421
    %v2184 = vunpack.c.l.b16 %v422
    %v2185 = vunpack.c.h.b16 %v422
    %v2186 = vunpack.c.l.b16 %v423
    %v2187 = vunpack.c.h.b16 %v423
    %v2188 = vunpack.c.l.b16 %v424
    %v2189 = vunpack.c.h.b16 %v424
    %v2190 = vunpack.c.l.b16 %v425
    %v2191 = vunpack.c.h.b16 %v425
    %v2192 = vunpack.c.l.b16 %v426
    %v2193 = vunpack.c.h.b16 %v426
    %v2194 = vunpack.c.l.b16 %v427
    %v2195 = vunpack.c.h.b16 %v427
    %v2196 = vunpack.c.l.b16 %v428
    %v2197 = vunpack.c.h.b16 %v428
    %v2198 = vunpack.c.l.b16 %v429
    %v2199 = vunpack.c.h.b16 %v429
    %v2200 = vunpack.c.l.b16 %v430
    %v2201 = vunpack.c.h.b16 %v430
    %v2202 = vunpack.c.l.b16 %v431
    %v2203 = vunpack.c.h.b16 %v431
    %v2204 = vunpack.c.l.b16 %v432
    %v2205 = vunpack.c.h.b16 %v432
    %v2206 = vunpack.c.l.b16 %v433
    %v2207 = vunpack.c.h.b16 %v433
    %v2208 = vunpack.c.l.b16 %v434
    %v2209 = vunpack.c.h.b16 %v434
    %v2210 = vunpack.c.l.b16 %v435
    %v2211 = vunpack.c.h.b16 %v435
    %v2212 = vunpack.c.l.b16 %v436
    %v2213 = vunpack.c.h.b16 %v436
    %v2214 = vunpack.c.l.b16 %v437
    %v2215 = vunpack.c.h.b16 %v437
    %v2216 = vunpack.c.l.b16 %v438
    %v2217 = vunpack.c.h.b16 %v438
    %v2218 = vunpack.c.l.b16 %v439
    %v2219 = vunpack.c.h.b16 %v439
    %v2220 = vunpack.c.l.b16 %v440
    %v2221 = vunpack.c.h.b16 %v440
    %v2222 = vunpack.c.l.b16 %v441
    %v2223 = vunpack.c.h.b16 %v441
    %v2224 = vunpack.c.l.b16 %v442
    %v2225 = vunpack.c.h.b16 %v442
    %v2226 = vunpack.c.l.b16 %v443
    %v2227 = vunpack.c.h.b16 %v443
    %v2228 = vunpack.c.l.b16 %v444
    %v2229 = vunpack.c.h.b16 %v444
    %v2230 = vunpack.c.l.b16 %v445
    %v2231 = vunpack.c.h.b16 %v445
    %v2232 = vunpack.c.l.b16 %v446
    %v2233 = vunpack.c.h.b16 %v446
    %v2234 = vunpack.c.l.b16 %v447
    %v2235 = vunpack.c.h.b16 %v447
    %v2236 = vunpack.c.l.b16 %v448
    %v2237 = vunpack.c.h.b16 %v448
    %v2238 = vunpack.c.l.b16 %v449
    %v2239 = vunpack.c.h.b16 %v449
    %v2240 = vunpack.c.l.b16 %v450
    %v2241 = vunpack.c.h.b16 %v450
    %v2242 = vunpack.c.l.b16 %v451
    %v2243 = vunpack.c.h.b16 %v451
    %v2244 = vunpack.c.l.b16 %v452
    %v2245 = vunpack.c.h.b16 %v452
    %v2246 = vunpack.c.l.b16 %v453
    %v2247 = vunpack.c.h.b16 %v453
    %v2248 = vunpack.c.l.b16 %v454
    %v2249 = vunpack.c.h.b16 %v454
    %v2250 = vunpack.c.l.b16 %v455
    %v2251 = vunpack.c.h.b16 %v455
    %v2252 = vunpack.c.l.b16 %v456
    %v2253 = vunpack.c.h.b16 %v456
    %v2254 = vunpack.c.l.b16 %v457
    %v2255 = vunpack.c.h.b16 %v457
    %v2256 = vunpack.c.l.b16 %v458
    %v2257 = vunpack.c.h.b16 %v458
    %v2258 = vunpack.c.l.b16 %v459
    %v2259 = vunpack.c.h.b16 %v459
    %v2260 = vunpack.c.l.b16 %v460
    %v2261 = vunpack.c.h.b16 %v460
    %v2262 = vunpack.c.l.b16 %v461
    %v2263 = vunpack.c.h.b16 %v461
    %v2264 = vunpack.c.l.b16 %v462
    %v2265 = vunpack.c.h.b16 %v462
    %v2266 = vunpack.c.l.b16 %v463
    %v2267 = vunpack.c.h.b16 %v463
    %v2268 = vunpack.c.l.b16 %v464
    %v2269 = vunpack.c.h.b16 %v464
    %v2270 = vunpack.c.l.b16 %v465
    %v2271 = vunpack.c.h.b16 %v465
    %v2272 = vunpack.c.l.b16 %v466
    %v2273 = vunpack.c.h.b16 %v466
    %v2274 = vunpack.c.l.b16 %v467
    %v2275 = vunpack.c.h.b16 %v467
    %v2276 = vunpack.c.l.b16 %v468
    %v2277 = vunpack.c.h.b16 %v468
    %v2278 = vunpack.c.l.b16 %v469
    %v2279 = vunpack.c.h.b16 %v469
    %v2280 = vunpack.c.l.b16 %v470
    %v2281 = vunpack.c.h.b16 %v470
    %v2282 = vunpack.c.l.b16 %v471
    %v2283 = vunpack.c.h.b16 %v471
    %v2284 = vunpack.c.l.b16 %v472
    %v2285 = vunpack.c.h.b16 %v472
    %v2286 = vunpack.c.l.b16 %v473
    %v2287 = vunpack.c.h.b16 %v473
    %v2288 = vunpack.c.l.b16 %v474
    %v2289 = vunpack.c.h.b16 %v474
    %v2290 = vunpack.c.l.b16 %v475
    %v2291 = vunpack.c.h.b16 %v475
    %v2292 = vunpack.c.l.b16 %v476
    %v2293 = vunpack.c.h.b16 %v476
    %v2294 = vunpack.c.l.b16 %v477
    %v2295 = vunpack.c.h.b16 %v477
    %v2296 = vunpack.c.l.b16 %v478
    %v2297 = vunpack.c.h.b16 %v478
    %v2298 = vunpack.c.l.b16 %v479
    %v2299 = vunpack.c.h.b16 %v479
    %v2300 = vunpack.c.l.b16 %v480
    %v2301 = vunpack.c.h.b16 %v480
    %v2302 = vunpack.c.l.b16 %v481
    %v2303 = vunpack.c.h.b16 %v481
    %v2304 = vunpack.c.l.b16 %v482
    %v2305 = vunpack.c.h.b16 %v482
    %v2306 = vunpack.c.l.b16 %v483
    %v2307 = vunpack.c.h.b16 %v483
    %v2308 = vunpack.c.l.b16 %v484
    %v2309 = vunpack.c.h.b16 %v484
    %v2310 = vunpack.c.l.b16 %v485
    %v2311 = vunpack.c.h.b16 %v485
    %v2312 = vunpack.c.l.b16 %v486
    %v2313 = vunpack.c.h.b16 %v486
    %v2314 = vunpack.c.l.b16 %v487
    %v2315 = vunpack.c.h.b16 %v487
    %v2316 = vunpack.c.l.b16 %v488
    %v2317 = vunpack.c.h.b16 %v488
    %v2318 = vunpack.c.l.b16 %v489
    %v2319 = vunpack.c.h.b16 %v489
    %v2320 = vunpack.c.l.b16 %v490
    %v2321 = vunpack.c.h.b16 %v490
    %v2322 = vunpack.c.l.b16 %v491
    %v2323 = vunpack.c.h.b16 %v491
    %v2324 = vunpack.c.l.b16 %v492
    %v2325 = vunpack.c.h.b16 %v492
    %v2326 = vunpack.c.l.b16 %v493
    %v2327 = vunpack.c.h.b16 %v493
    %v2328 = vunpack.c.l.b16 %v494
    %v2329 = vunpack.c.h.b16 %v494
    %v2330 = vunpack.c.l.b16 %v495
    %v2331 = vunpack.c.h.b16 %v495
    %v2332 = vunpack.c.l.b16 %v496
    %v2333 = vunpack.c.h.b16 %v496
    %v2334 = vunpack.c.l.b16 %v497
    %v2335 = vunpack.c.h.b16 %v497
    %v2336 = vunpack.c.l.b16 %v498
    %v2337 = vunpack.c.h.b16 %v498
    %v2338 = vunpack.c.l.b16 %v499
    %v2339 = vunpack.c.h.b16 %v499
    %v2340 = vunpack.c.l.b16 %v500
    %v2341 = vunpack.c.h.b16 %v500
    %v2342 = vunpack.c.l.b16 %v501
    %v2343 = vunpack.c.h.b16 %v501
    %v2344 = vunpack.c.l.b16 %v502
    %v2345 = vunpack.c.h.b16 %v502
    %v2346 = vunpack.c.l.b16 %v503
    %v2347 = vunpack.c.h.b16 %v503
    %v2348 = vunpack.c.l.b16 %v504
    %v2349 = vunpack.c.h.b16 %v504
    %v2350 = vunpack.c.l.b16 %v505
    %v2351 = vunpack.c.h.b16 %v505
    %v2352 = vunpack.c.l.b16 %v506
    %v2353 = vunpack.c.h.b16 %v506
    %v2354 = vunpack.c.l.b16 %v507
    %v2355 = vunpack.c.h.b16 %v507
    %v2356 = vunpack.c.l.b16 %v508
    %v2357 = vunpack.c.h.b16 %v508
    %v2358 = vunpack.c.l.b16 %v509
    %v2359 = vunpack.c.h.b16 %v509
    %v2360 = vunpack.c.l.b16 %v510
    %v2361 = vunpack.c.h.b16 %v510
    %v2362 = vunpack.c.l.b16 %v511
    %v2363 = vunpack.c.h.b16 %v511
    %v2364 = vunpack.c.l.b16 %v512
    %v2365 = vunpack.c.h.b16 %v512
    %v2366 = vunpack.c.l.b16 %v513
    %v2367 = vunpack.c.h.b16 %v513
    %v2368 = vunpack.c.l.b16 %v514
    %v2369 = vunpack.c.h.b16 %v514
    %v2370 = vunpack.c.l.b16 %v515
    %v2371 = vunpack.c.h.b16 %v515
    %v2372 = vunpack.c.l.b16 %v516
    %v2373 = vunpack.c.h.b16 %v516
    %v2374 = vunpack.c.l.b16 %v517
    %v2375 = vunpack.c.h.b16 %v517
    %v2376 = vunpack.c.l.b16 %v518
    %v2377 = vunpack.c.h.b16 %v518
    %v2378 = vunpack.c.l.b16 %v519
    %v2379 = vunpack.c.h.b16 %v519
    %v2380 = vunpack.c.l.b16 %v520
    %v2381 = vunpack.c.h.b16 %v520
    %v2382 = vunpack.c.l.b16 %v521
    %v2383 = vunpack.c.h.b16 %v521
    %v2384 = vunpack.c.l.b16 %v522
    %v2385 = vunpack.c.h.b16 %v522
    %v2386 = vunpack.c.l.b16 %v523
    %v2387 = vunpack.c.h.b16 %v523
    %v2388 = vunpack.c.l.b16 %v524
    %v2389 = vunpack.c.h.b16 %v524
    %v2390 = vunpack.c.l.b16 %v525
    %v2391 = vunpack.c.h.b16 %v525
    %v2392 = vunpack.c.l.b16 %v526
    %v2393 = vunpack.c.h.b16 %v526
    %v2394 = vunpack.c.l.b16 %v527
    %v2395 = vunpack.c.h.b16 %v527
    %v2396 = vunpack.c.l.b16 %v528
    %v2397 = vunpack.c.h.b16 %v528
    %v2398 = vunpack.c.l.b16 %v529
    %v2399 = vunpack.c.h.b16 %v529
    %v2400 = vunpack.c.l.b16 %v530
    %v2401 = vunpack.c.h.b16 %v530
    %v2402 = vunpack.c.l.b16 %v531
    %v2403 = vunpack.c.h.b16 %v531
    %v2404 = vunpack.c.l.b16 %v532
    %v2405 = vunpack.c.h.b16 %v532
    %v2406 = vunpack.c.l.b16 %v533
    %v2407 = vunpack.c.h.b16 %v533
    %v2408 = vunpack.c.l.b16 %v534
    %v2409 = vunpack.c.h.b16 %v534
    %v2410 = vunpack.c.l.b16 %v535
    %v2411 = vunpack.c.h.b16 %v535
    %v2412 = vunpack.c.l.b16 %v536
    %v2413 = vunpack.c.h.b16 %v536
    %v2414 = vunpack.c.l.b16 %v537
    %v2415 = vunpack.c.h.b16 %v537
    %v2416 = vunpack.c.l.b16 %v538
    %v2417 = vunpack.c.h.b16 %v538
    %v2418 = vunpack.c.l.b16 %v539
    %v2419 = vunpack.c.h.b16 %v539
    %v2420 = vunpack.c.l.b16 %v540
    %v2421 = vunpack.c.h.b16 %v540
    %v2422 = vunpack.c.l.b16 %v541
    %v2423 = vunpack.c.h.b16 %v541
    %v2424 = vunpack.c.l.b16 %v542
    %v2425 = vunpack.c.h.b16 %v542
    %v2426 = vunpack.c.l.b16 %v543
    %v2427 = vunpack.c.h.b16 %v543
    %v2428 = vunpack.c.l.b16 %v544
    %v2429 = vunpack.c.h.b16 %v544
    %v2430 = vunpack.c.l.b16 %v545
    %v2431 = vunpack.c.h.b16 %v545
    %v2432 = vunpack.c.l.b16 %v546
    %v2433 = vunpack.c.h.b16 %v546
    %v2434 = vunpack.c.l.b16 %v547
    %v2435 = vunpack.c.h.b16 %v547
    %v2436 = vunpack.c.l.b16 %v548
    %v2437 = vunpack.c.h.b16 %v548
    %v2438 = vunpack.c.l.b16 %v549
    %v2439 = vunpack.c.h.b16 %v549
    %v2440 = vunpack.c.l.b16 %v550
    %v2441 = vunpack.c.h.b16 %v550
    %v2442 = vunpack.c.l.b16 %v551
    %v2443 = vunpack.c.h.b16 %v551
    %v2444 = vunpack.c.l.b16 %v552
    %v2445 = vunpack.c.h.b16 %v552
    %v2446 = vunpack.c.l.b16 %v553
    %v2447 = vunpack.c.h.b16 %v553
    %v2448 = vunpack.c.l.b16 %v554
    %v2449 = vunpack.c.h.b16 %v554
    %v2450 = vunpack.c.l.b16 %v555
    %v2451 = vunpack.c.h.b16 %v555
    %v2452 = vunpack.c.l.b16 %v556
    %v2453 = vunpack.c.h.b16 %v556
    %v2454 = vunpack.c.l.b16 %v557
    %v2455 = vunpack.c.h.b16 %v557
    %v2456 = vunpack.c.l.b16 %v558
    %v2457 = vunpack.c.h.b16 %v558
    %v2458 = vunpack.c.l.b16 %v559
    %v2459 = vunpack.c.h.b16 %v559
    %v2460 = vunpack.c.l.b16 %v560
    %v2461 = vunpack.c.h.b16 %v560
    %v2462 = vunpack.c.l.b16 %v561
    %v2463 = vunpack.c.h.b16 %v561
    %v2464 = vunpack.c.l.b16 %v562
    %v2465 = vunpack.c.h.b16 %v562
    %v2466 = vunpack.c.l.b16 %v563
    %v2467 = vunpack.c.h.b16 %v563
    %v2468 = vunpack.c.l.b16 %v564
    %v2469 = vunpack.c.h.b16 %v564
    %v2470 = vunpack.c.l.b16 %v565
    %v2471 = vunpack.c.h.b16 %v565
    %v2472 = vunpack.c.l.b16 %v566
    %v2473 = vunpack.c.h.b16 %v566
    %v2474 = vunpack.c.l.b16 %v567
    %v2475 = vunpack.c.h.b16 %v567
    %v2476 = vunpack.c.l.b16 %v568
    %v2477 = vunpack.c.h.b16 %v568
    %v2478 = vunpack.c.l.b16 %v569
    %v2479 = vunpack.c.h.b16 %v569
    %v2480 = vunpack.c.l.b16 %v570
    %v2481 = vunpack.c.h.b16 %v570
    %v2482 = vunpack.c.l.b16 %v571
    %v2483 = vunpack.c.h.b16 %v571
    %v2484 = vunpack.c.l.b16 %v572
    %v2485 = vunpack.c.h.b16 %v572
    %v2486 = vunpack.c.l.b16 %v573
    %v2487 = vunpack.c.h.b16 %v573
    %v2488 = vunpack.c.l.b16 %v574
    %v2489 = vunpack.c.h.b16 %v574
    %v2490 = vunpack.c.l.b16 %v575
    %v2491 = vunpack.c.h.b16 %v575
    %v2492 = vunpack.c.l.b16 %v576
    %v2493 = vunpack.c.h.b16 %v576
    %v2494 = vunpack.c.l.b16 %v577
    %v2495 = vunpack.c.h.b16 %v577
    %v2496 = vunpack.c.l.b16 %v578
    %v2497 = vunpack.c.h.b16 %v578
    %v2498 = vunpack.c.l.b16 %v579
    %v2499 = vunpack.c.h.b16 %v579
    %v2500 = vunpack.c.l.b16 %v580
    %v2501 = vunpack.c.h.b16 %v580
    %v2502 = vunpack.c.l.b16 %v581
    %v2503 = vunpack.c.h.b16 %v581
    %v2504 = vunpack.c.l.b16 %v582
    %v2505 = vunpack.c.h.b16 %v582
    %v2506 = vunpack.c.l.b16 %v583
    %v2507 = vunpack.c.h.b16 %v583
    %v2508 = vunpack.c.l.b16 %v584
    %v2509 = vunpack.c.h.b16 %v584
    %v2510 = vunpack.c.l.b16 %v585
    %v2511 = vunpack.c.h.b16 %v585
    %v2512 = vunpack.c.l.b16 %v586
    %v2513 = vunpack.c.h.b16 %v586
    %v2514 = vunpack.c.l.b16 %v587
    %v2515 = vunpack.c.h.b16 %v587
    %v2516 = vunpack.c.l.b16 %v588
    %v2517 = vunpack.c.h.b16 %v588
    %v2518 = vunpack.c.l.b16 %v589
    %v2519 = vunpack.c.h.b16 %v589
    %v2520 = vunpack.c.l.b16 %v590
    %v2521 = vunpack.c.h.b16 %v590
    %v2522 = vunpack.c.l.b16 %v591
    %v2523 = vunpack.c.h.b16 %v591
    %v2524 = vunpack.c.l.b16 %v592
    %v2525 = vunpack.c.h.b16 %v592
    %v2526 = vunpack.c.l.b16 %v593
    %v2527 = vunpack.c.h.b16 %v593
    %v2528 = vunpack.c.l.b16 %v594
    %v2529 = vunpack.c.h.b16 %v594
    %v2530 = vunpack.c.l.b16 %v595
    %v2531 = vunpack.c.h.b16 %v595
    %v2532 = vunpack.c.l.b16 %v596
    %v2533 = vunpack.c.h.b16 %v596
    %v2534 = vunpack.c.l.b16 %v597
    %v2535 = vunpack.c.h.b16 %v597
    %v2536 = vunpack.c.l.b16 %v598
    %v2537 = vunpack.c.h.b16 %v598
    %v2538 = vunpack.c.l.b16 %v599
    %v2539 = vunpack.c.h.b16 %v599
    %v2540 = vunpack.c.l.b16 %v600
    %v2541 = vunpack.c.h.b16 %v600
    %v2542 = vunpack.c.l.b16 %v601
    %v2543 = vunpack.c.h.b16 %v601
    %v2544 = vpack.c.b16 %v1980, %v1968
    %v2545 = vpack.c.b16 %v1981, %v1969
    %v2546 = vpack.c.b16 %v1982, %v1970
    %v2547 = vpack.c.b16 %v1983, %v1971
    %v2548 = vpack.c.b16 %v1984, %v1972
    %v2549 = vpack.c.b16 %v1985, %v1973
    %v2550 = vpack.c.b16 %v1986, %v1974
    %v2551 = vpack.c.b16 %v1987, %v1975
    %v2552 = vpack.c.b16 %v1988, %v1976
    %v2553 = vpack.c.b16 %v1989, %v1977
    %v2554 = vpack.c.b16 %v1990, %v1978
    %v2555 = vpack.c.b16 %v1991, %v1979
    %v2556 = vpack.c.b16 %v2004, %v1992
    %v2557 = vpack.c.b16 %v2005, %v1993
    %v2558 = vpack.c.b16 %v2006, %v1994
    %v2559 = vpack.c.b16 %v2007, %v1995
    %v2560 = vpack.c.b16 %v2008, %v1996
    %v2561 = vpack.c.b16 %v2009, %v1997
    %v2562 = vpack.c.b16 %v2010, %v1998
    %v2563 = vpack.c.b16 %v2011, %v1999
    %v2564 = vpack.c.b16 %v2012, %v2000
    %v2565 = vpack.c.b16 %v2013, %v2001
    %v2566 = vpack.c.b16 %v2014, %v2002
    %v2567 = vpack.c.b16 %v2015, %v2003
    %v2568 = vpack.c.b16 %v2028, %v2016
    %v2569 = vpack.c.b16 %v2029, %v2017
    %v2570 = vpack.c.b16 %v2030, %v2018
    %v2571 = vpack.c.b16 %v2031, %v2019
    %v2572 = vpack.c.b16 %v2032, %v2020
    %v2573 = vpack.c.b16 %v2033, %v2021
    %v2574 = vpack.c.b16 %v2034, %v2022
    %v2575 = vpack.c.b16 %v2035, %v2023
    %v2576 = vpack.c.b16 %v2036, %v2024
    %v2577 = vpack.c.b16 %v2037, %v2025
    %v2578 = vpack.c.b16 %v2038, %v2026
    %v2579 = vpack.c.b16 %v2039, %v2027
    %v2580 = vpack.c.b16 %v2052, %v2040
    %v2581 = vpack.c.b16 %v2053, %v2041
    %v2582 = vpack.c.b16 %v2054, %v2042
    %v2583 = vpack.c.b16 %v2055, %v2043
    %v2584 = vpack.c.b16 %v2056, %v2044
    %v2585 = vpack.c.b16 %v2057, %v2045
    %v2586 = vpack.c.b16 %v2058, %v2046
    %v2587 = vpack.c.b16 %v2059, %v2047
    %v2588 = vpack.c.b16 %v2060, %v2048
    %v2589 = vpack.c.b16 %v2061, %v2049
    %v2590 = vpack.c.b16 %v2062, %v2050
    %v2591 = vpack.c.b16 %v2063, %v2051
    %v2592 = vpack.c.b16 %v2076, %v2064
    %v2593 = vpack.c.b16 %v2077, %v2065
    %v2594 = vpack.c.b16 %v2078, %v2066
    %v2595 = vpack.c.b16 %v2079, %v2067
    %v2596 = vpack.c.b16 %v2080, %v2068
    %v2597 = vpack.c.b16 %v2081, %v2069
    %v2598 = vpack.c.b16 %v2082, %v2070
    %v2599 = vpack.c.b16 %v2083, %v2071
    %v2600 = vpack.c.b16 %v2084, %v2072
    %v2601 = vpack.c.b16 %v2085, %v2073
    %v2602 = vpack.c.b16 %v2086, %v2074
    %v2603 = vpack.c.b16 %v2087, %v2075
    %v2604 = vpack.c.b16 %v2100, %v2088
    %v2605 = vpack.c.b16 %v2101, %v2089
    %v2606 = vpack.c.b16 %v2102, %v2090
    %v2607 = vpack.c.b16 %v2103, %v2091
    %v2608 = vpack.c.b16 %v2104, %v2092
    %v2609 = vpack.c.b16 %v2105, %v2093
    %v2610 = vpack.c.b16 %v2106, %v2094
    %v2611 = vpack.c.b16 %v2107, %v2095
    %v2612 = vpack.c.b16 %v2108, %v2096
    %v2613 = vpack.c.b16 %v2109, %v2097
    %v2614 = vpack.c.b16 %v2110, %v2098
    %v2615 = vpack.c.b16 %v2111, %v2099
    %v2616 = vpack.c.b16 %v2124, %v2112
    %v2617 = vpack.c.b16 %v2125, %v2113
    %v2618 = vpack.c.b16 %v2126, %v2114
    %v2619 = vpack.c.b16 %v2127, %v2115
    %v2620 = vpack.c.b16 %v2128, %v2116
    %v2621 = vpack.c.b16 %v2129, %v2117
    %v2622 = vpack.c.b16 %v2130, %v2118
    %v2623 = vpack.c.b16 %v2131, %v2119
    %v2624 = vpack.c.b16 %v2132, %v2120
    %v2625 = vpack.c.b16 %v2133, %v2121
    %v2626 = vpack.c.b16 %v2134, %v2122
    %v2627 = vpack.c.b16 %v2135, %v2123
    %v2628 = vpack.c.b16 %v2148, %v2136
    %v2629 = vpack.c.b16 %v2149, %v2137
    %v2630 = vpack.c.b16 %v2150, %v2138
    %v2631 = vpack.c.b16 %v2151, %v2139
    %v2632 = vpack.c.b16 %v2152, %v2140
    %v2633 = vpack.c.b16 %v2153, %v2141
    %v2634 = vpack.c.b16 %v2154, %v2142
    %v2635 = vpack.c.b16 %v2155, %v2143
    %v2636 = vpack.c.b16 %v2156, %v2144
    %v2637 = vpack.c.b16 %v2157, %v2145
    %v2638 = vpack.c.b16 %v2158, %v2146
    %v2639 = vpack.c.b16 %v2159, %v2147
    %v2640 = vpack.c.b16 %v2172, %v2160
    %v2641 = vpack.c.b16 %v2173, %v2161
    %v2642 = vpack.c.b16 %v2174, %v2162
    %v2643 = vpack.c.b16 %v2175, %v2163
    %v2644 = vpack.c.b16 %v2176, %v2164
    %v2645 = vpack.c.b16 %v2177, %v2165
    %v2646 = vpack.c.b16 %v2178, %v2166
    %v2647 = vpack.c.b16 %v2179, %v2167
    %v2648 = vpack.c.b16 %v2180, %v2168
    %v2649 = vpack.c.b16 %v2181, %v2169
    %v2650 = vpack.c.b16 %v2182, %v2170
    %v2651 = vpack.c.b16 %v2183, %v2171
    %v2652 = vpack.c.b16 %v2196, %v2184
    %v2653 = vpack.c.b16 %v2197, %v2185
    %v2654 = vpack.c.b16 %v2198, %v2186
    %v2655 = vpack.c.b16 %v2199, %v2187
    %v2656 = vpack.c.b16 %v2200, %v2188
    %v2657 = vpack.c.b16 %v2201, %v2189
    %v2658 = vpack.c.b16 %v2202, %v2190
    %v2659 = vpack.c.b16 %v2203, %v2191
    %v2660 = vpack.c.b16 %v2204, %v2192
    %v2661 = vpack.c.b16 %v2205, %v2193
    %v2662 = vpack.c.b16 %v2206, %v2194
    %v2663 = vpack.c.b16 %v2207, %v2195
    %v2664 = vpack.c.b16 %v2220, %v2208
    %v2665 = vpack.c.b16 %v2221, %v2209
    %v2666 = vpack.c.b16 %v2222, %v2210
    %v2667 = vpack.c.b16 %v2223, %v2211
    %v2668 = vpack.c.b16 %v2224, %v2212
    %v2669 = vpack.c.b16 %v2225, %v2213
    %v2670 = vpack.c.b16 %v2226, %v2214
    %v2671 = vpack.c.b16 %v2227, %v2215
    %v2672 = vpack.c.b16 %v2228, %v2216
    %v2673 = vpack.c.b16 %v2229, %v2217
    %v2674 = vpack.c.b16 %v2230, %v2218
    %v2675 = vpack.c.b16 %v2231, %v2219
    %v2676 = vpack.c.b16 %v2244, %v2232
    %v2677 = vpack.c.b16 %v2245, %v2233
    %v2678 = vpack.c.b16 %v2246, %v2234
    %v2679 = vpack.c.b16 %v2247, %v2235
    %v2680 = vpack.c.b16 %v2248, %v2236
    %v2681 = vpack.c.b16 %v2249, %v2237
    %v2682 = vpack.c.b16 %v2250, %v2238
    %v2683 = vpack.c.b16 %v2251, %v2239
    %v2684 = vpack.c.b16 %v2252, %v2240
    %v2685 = vpack.c.b16 %v2253, %v2241
    %v2686 = vpack.c.b16 %v2254, %v2242
    %v2687 = vpack.c.b16 %v2255, %v2243
    %v2688 = vpack.c.b16 %v2268, %v2256
    %v2689 = vpack.c.b16 %v2269, %v2257
    %v2690 = vpack.c.b16 %v2270, %v2258
    %v2691 = vpack.c.b16 %v2271, %v2259
    %v2692 = vpack.c.b16 %v2272, %v2260
    %v2693 = vpack.c.b16 %v2273, %v2261
    %v2694 = vpack.c.b16 %v2274, %v2262
    %v2695 = vpack.c.b16 %v2275, %v2263
    %v2696 = vpack.c.b16 %v2276, %v2264
    %v2697 = vpack.c.b16 %v2277, %v2265
    %v2698 = vpack.c.b16 %v2278, %v2266
    %v2699 = vpack.c.b16 %v2279, %v2267
    %v2700 = vpack.c.b16 %v2292, %v2280
    %v2701 = vpack.c.b16 %v2293, %v2281
    %v2702 = vpack.c.b16 %v2294, %v2282
    %v2703 = vpack.c.b16 %v2295, %v2283
    %v2704 = vpack.c.b16 %v2296, %v2284
    %v2705 = vpack.c.b16 %v2297, %v2285
    %v2706 = vpack.c.b16 %v2298, %v2286
    %v2707 = vpack.c.b16 %v2299, %v2287
    %v2708 = vpack.c.b16 %v2300, %v2288
    %v2709 = vpack.c.b16 %v2301, %v2289
    %v2710 = vpack.c.b16 %v2302, %v2290
    %v2711 = vpack.c.b16 %v2303, %v2291
    %v2712 = vpack.c.b16 %v2316, %v2304
    %v2713 = vpack.c.b16 %v2317, %v2305
    %v2714 = vpack.c.b16 %v2318, %v2306
    %v2715 = vpack.c.b16 %v2319, %v2307
    %v2716 = vpack.c.b16 %v2320, %v2308
    %v2717 = vpack.c.b16 %v2321, %v2309
    %v2718 = vpack.c.b16 %v2322, %v2310
    %v2719 = vpack.c.b16 %v2323, %v2311
    %v2720 = vpack.c.b16 %v2324, %v2312
    %v2721 = vpack.c.b16 %v2325, %v2313
    %v2722 = vpack.c.b16 %v2326, %v2314
    %v2723 = vpack.c.b16 %v2327, %v2315
    %v2724 = vpack.c.b16 %v2340, %v2328
    %v2725 = vpack.c.b16 %v2341, %v2329
    %v2726 = vpack.c.b16 %v2342, %v2330
    %v2727 = vpack.c.b16 %v2343, %v2331
    %v2728 = vpack.c.b16 %v2344, %v2332
    %v2729 = vpack.c.b16 %v2345, %v2333
    %v2730 = vpack.c.b16 %v2346, %v2334
    %v2731 = vpack.c.b16 %v2347, %v2335
    %v2732 = vpack.c.b16 %v2348, %v2336
    %v2733 = vpack.c.b16 %v2349, %v2337
    %v2734 = vpack.c.b16 %v2350, %v2338
    %v2735 = vpack.c.b16 %v2351, %v2339
    %v2736 = vpack.c.b16 %v2364, %v2352
    %v2737 = vpack.c.b16 %v2365, %v2353
    %v2738 = vpack.c.b16 %v2366, %v2354
    %v2739 = vpack.c.b16 %v2367, %v2355
    %v2740 = vpack.c.b16 %v2368, %v2356
    %v2741 = vpack.c.b16 %v2369, %v2357
    %v2742 = vpack.c.b16 %v2370, %v2358
    %v2743 = vpack.c.b16 %v2371, %v2359
    %v2744 = vpack.c.b16 %v2372, %v2360
    %v2745 = vpack.c.b16 %v2373, %v2361
    %v2746 = vpack.c.b16 %v2374, %v2362
    %v2747 = vpack.c.b16 %v2375, %v2363
    %v2748 = vpack.c.b16 %v2388, %v2376
    %v2749 = vpack.c.b16 %v2389, %v2377
    %v2750 = vpack.c.b16 %v2390, %v2378
    %v2751 = vpack.c.b16 %v2391, %v2379
    %v2752 = vpack.c.b16 %v2392, %v2380
    %v2753 = vpack.c.b16 %v2393, %v2381
    %v2754 = vpack.c.b16 %v2394, %v2382
    %v2755 = vpack.c.b16 %v2395, %v2383
    %v2756 = vpack.c.b16 %v2396, %v2384
    %v2757 = vpack.c.b16 %v2397, %v2385
    %v2758 = vpack.c.b16 %v2398, %v2386
    %v2759 = vpack.c.b16 %v2399, %v2387
    %v2760 = vpack.c.b16 %v2412, %v2400
    %v2761 = vpack.c.b16 %v2413, %v2401
    %v2762 = vpack.c.b16 %v2414, %v2402
    %v2763 = vpack.c.b16 %v2415, %v2403
    %v2764 = vpack.c.b16 %v2416, %v2404
    %v2765 = vpack.c.b16 %v2417, %v2405
    %v2766 = vpack.c.b16 %v2418, %v2406
    %v2767 = vpack.c.b16 %v2419, %v2407
    %v2768 = vpack.c.b16 %v2420, %v2408
    %v2769 = vpack.c.b16 %v2421, %v2409
    %v2770 = vpack.c.b16 %v2422, %v2410
    %v2771 = vpack.c.b16 %v2423, %v2411
    %v2772 = vpack.c.b16 %v2436, %v2424
    %v2773 = vpack.c.b16 %v2437, %v2425
    %v2774 = vpack.c.b16 %v2438, %v2426
    %v2775 = vpack.c.b16 %v2439, %v2427
    %v2776 = vpack.c.b16 %v2440, %v2428
    %v2777 = vpack.c.b16 %v2441, %v2429
    %v2778 = vpack.c.b16 %v2442, %v2430
    %v2779 = vpack.c.b16 %v2443, %v2431
    %v2780 = vpack.c.b16 %v2444, %v2432
    %v2781 = vpack.c.b16 %v2445, %v2433
    %v2782 = vpack.c.b16 %v2446, %v2434
    %v2783 = vpack.c.b16 %v2447, %v2435
    %v2784 = vpack.c.b16 %v2460, %v2448
    %v2785 = vpack.c.b16 %v2461, %v2449
    %v2786 = vpack.c.b16 %v2462, %v2450
    %v2787 = vpack.c.b16 %v2463, %v2451
    %v2788 = vpack.c.b16 %v2464, %v2452
    %v2789 = vpack.c.b16 %v2465, %v2453
    %v2790 = vpack.c.b16 %v2466, %v2454
    %v2791 = vpack.c.b16 %v2467, %v2455
    %v2792 = vpack.c.b16 %v2468, %v2456
    %v2793 = vpack.c.b16 %v2469, %v2457
    %v2794 = vpack.c.b16 %v2470, %v2458
    %v2795 = vpack.c.b16 %v2471, %v2459
    %v2796 = vpack.c.b16 %v2484, %v2472
    %v2797 = vpack.c.b16 %v2485, %v2473
    %v2798 = vpack.c.b16 %v2486, %v2474
    %v2799 = vpack.c.b16 %v2487, %v2475
    %v2800 = vpack.c.b16 %v2488, %v2476
    %v2801 = vpack.c.b16 %v2489, %v2477
    %v2802 = vpack.c.b16 %v2490, %v2478
    %v2803 = vpack.c.b16 %v2491, %v2479
    %v2804 = vpack.c.b16 %v2492, %v2480
    %v2805 = vpack.c.b16 %v2493, %v2481
    %v2806 = vpack.c.b16 %v2494, %v2482
    %v2807 = vpack.c.b16 %v2495, %v2483
    %v2808 = vpack.c.b16 %v2508, %v2496
    %v2809 = vpack.c.b16 %v2509, %v2497
    %v2810 = vpack.c.b16 %v2510, %v2498
    %v2811 = vpack.c.b16 %v2511, %v2499
    %v2812 = vpack.c.b16 %v2512, %v2500
    %v2813 = vpack.c.b16 %v2513, %v2501
    %v2814 = vpack.c.b16 %v2514, %v2502
    %v2815 = vpack.c.b16 %v2515, %v2503
    %v2816 = vpack.c.b16 %v2516, %v2504
    %v2817 = vpack.c.b16 %v2517, %v2505
    %v2818 = vpack.c.b16 %v2518, %v2506
    %v2819 = vpack.c.b16 %v2519, %v2507
    %v2820 = vpack.c.b16 %v2532, %v2520
    %v2821 = vpack.c.b16 %v2533, %v2521
    %v2822 = vpack.c.b16 %v2534, %v2522
    %v2823 = vpack.c.b16 %v2535, %v2523
    %v2824 = vpack.c.b16 %v2536, %v2524
    %v2825 = vpack.c.b16 %v2537, %v2525
    %v2826 = vpack.c.b16 %v2538, %v2526
    %v2827 = vpack.c.b16 %v2539, %v2527
    %v2828 = vpack.c.b16 %v2540, %v2528
    %v2829 = vpack.c.b16 %v2541, %v2529
    %v2830 = vpack.c.b16 %v2542, %v2530
    %v2831 = vpack.c.b16 %v2543, %v2531
    %3120 = vmatprep.subr.bf16.mxu0 %v2545
    %3121 = vmatpush1.bf16.msra.mxu0 %v2544
    %3122 = vmatprep.subr.bf16.mxu0 %v2557
    %3123 = vmatpush1.bf16.msra.mxu0 %v2556
    %3124 = vmatprep.subr.bf16.mxu0 %v2569
    %3125 = vmatpush1.bf16.msra.mxu0 %v2568
    %3126 = vmatprep.subr.bf16.mxu0 %v2581
    %3127 = vmatpush1.bf16.msra.mxu0 %v2580
    %3128 = vmatprep.subr.bf16.mxu0 %v2593
    %3129 = vmatpush1.bf16.msra.mxu0 %v2592
    %3130 = vmatprep.subr.bf16.mxu0 %v2605
    %3131 = vmatpush1.bf16.msra.mxu0 %v2604
    %3132 = vmatprep.subr.bf16.mxu0 %v2617
    %3133 = vmatpush1.bf16.msra.mxu0 %v2616
    %3134 = vmatprep.subr.bf16.mxu0 %v2629
    %3135 = vmatpush1.bf16.msra.mxu0 %v2628
    %3136 = vmatprep.subr.bf16.mxu0 %v2641
    %3137 = vmatpush1.bf16.msra.mxu0 %v2640
    %3138 = vmatprep.subr.bf16.mxu0 %v2653
    %3139 = vmatpush1.bf16.msra.mxu0 %v2652
    %3140 = vmatprep.subr.bf16.mxu0 %v2665
    %3141 = vmatpush1.bf16.msra.mxu0 %v2664
    %3142 = vmatprep.subr.bf16.mxu0 %v2677
    %3143 = vmatpush1.bf16.msra.mxu0 %v2676
    %3144 = vmatprep.subr.bf16.mxu0 %v2689
    %3145 = vmatpush1.bf16.msra.mxu0 %v2688
    %3146 = vmatprep.subr.bf16.mxu0 %v2701
    %3147 = vmatpush1.bf16.msra.mxu0 %v2700
    %3148 = vmatprep.subr.bf16.mxu0 %v2713
    %3149 = vmatpush1.bf16.msra.mxu0 %v2712
    %3150 = vmatprep.subr.bf16.mxu0 %v2725
    %3151 = vmatpush1.bf16.msra.mxu0 %v2724
    %3152 = vmatprep.mubr.bf16.mxu0 %v1678
    %3153 = vmatmul.mubr.bf16.gmra.mrb[0].mxu0 %v1677
    %v3154 = vpop.f32.mrb[0].mxu0
    %v3155 = vadd.f32 0.0, %v3154
    %v3156 = vpop.f32.mrb[0].mxu0
    %v3157 = vadd.f32 0.0, %v3156
    %v3158 = vpop.f32.mrb[0].mxu0
    %v3159 = vpop.f32.mrb[0].mxu0
    %3160 = vdwg.mxu0
    %3161 = vmatprep.subr.bf16.mxu0 %v2737
    %3162 = vmatpush1.bf16.msra.mxu0 %v2736
    %3163 = vmatprep.subr.bf16.mxu0 %v2749
    %3164 = vmatpush1.bf16.msra.mxu0 %v2748
    %3165 = vmatprep.subr.bf16.mxu0 %v2761
    %3166 = vmatpush1.bf16.msra.mxu0 %v2760
    %3167 = vmatprep.subr.bf16.mxu0 %v2773
    %3168 = vmatpush1.bf16.msra.mxu0 %v2772
    %3169 = vmatprep.subr.bf16.mxu0 %v2785
    %3170 = vmatpush1.bf16.msra.mxu0 %v2784
    %3171 = vmatprep.subr.bf16.mxu0 %v2797
    %3172 = vmatpush1.bf16.msra.mxu0 %v2796
    %3173 = vmatprep.subr.bf16.mxu0 %v2809
    %3174 = vmatpush1.bf16.msra.mxu0 %v2808
    %3175 = vmatprep.subr.bf16.mxu0 %v2821
    %3176 = vmatpush1.bf16.msra.mxu0 %v2820
    %3177 = vmatprep.subr.bf16.mxu0 0
    %3178 = vmatpush1.bf16.msra.mxu0 0
    %3179 = vmatprep.subr.bf16.mxu0 0
    %3180 = vmatpush1.bf16.msra.mxu0 0
    %3181 = vmatprep.subr.bf16.mxu0 0
    %3182 = vmatpush1.bf16.msra.mxu0 0
    %3183 = vmatprep.subr.bf16.mxu0 0
    %3184 = vmatpush1.bf16.msra.mxu0 0
    %3185 = vmatprep.subr.bf16.mxu0 0
    %3186 = vmatpush1.bf16.msra.mxu0 0
    %3187 = vmatprep.subr.bf16.mxu0 0
    %3188 = vmatpush1.bf16.msra.mxu0 0
    %3189 = vmatprep.subr.bf16.mxu0 0
    %3190 = vmatpush1.bf16.msra.mxu0 0
    %3191 = vmatprep.subr.bf16.mxu0 0
    %3192 = vmatpush1.bf16.msra.mxu0 0
    %3193 = vmatprep.mubr.bf16.mxu0 0
    %3194 = vmatmul.mubr.bf16.gmra.mrb[0].mxu0 %v1679
    %v3195 = vpop.f32.mrb[0].mxu0
    %v3196 = vadd.f32 %v3155, %v3195
    %v3197 = vpop.f32.mrb[0].mxu0
    %v3198 = vadd.f32 %v3157, %v3197
    %v3199 = vpop.f32.mrb[0].mxu0
    %v3200 = vpop.f32.mrb[0].mxu0
    %3201 = vdwg.mxu0
    %3202 = vmatprep.subr.bf16.mxu0 %v2547
    %3203 = vmatpush1.bf16.msra.mxu0 %v2546
    %3204 = vmatprep.subr.bf16.mxu0 %v2559
    %3205 = vmatpush1.bf16.msra.mxu0 %v2558
    %3206 = vmatprep.subr.bf16.mxu0 %v2571
    %3207 = vmatpush1.bf16.msra.mxu0 %v2570
    %3208 = vmatprep.subr.bf16.mxu0 %v2583
    %3209 = vmatpush1.bf16.msra.mxu0 %v2582
    %3210 = vmatprep.subr.bf16.mxu0 %v2595
    %3211 = vmatpush1.bf16.msra.mxu0 %v2594
    %3212 = vmatprep.subr.bf16.mxu0 %v2607
    %3213 = vmatpush1.bf16.msra.mxu0 %v2606
    %3214 = vmatprep.subr.bf16.mxu0 %v2619
    %3215 = vmatpush1.bf16.msra.mxu0 %v2618
    %3216 = vmatprep.subr.bf16.mxu0 %v2631
    %3217 = vmatpush1.bf16.msra.mxu0 %v2630
    %3218 = vmatprep.subr.bf16.mxu0 %v2643
    %3219 = vmatpush1.bf16.msra.mxu0 %v2642
    %3220 = vmatprep.subr.bf16.mxu0 %v2655
    %3221 = vmatpush1.bf16.msra.mxu0 %v2654
    %3222 = vmatprep.subr.bf16.mxu0 %v2667
    %3223 = vmatpush1.bf16.msra.mxu0 %v2666
    %3224 = vmatprep.subr.bf16.mxu0 %v2679
    %3225 = vmatpush1.bf16.msra.mxu0 %v2678
    %3226 = vmatprep.subr.bf16.mxu0 %v2691
    %3227 = vmatpush1.bf16.msra.mxu0 %v2690
    %3228 = vmatprep.subr.bf16.mxu0 %v2703
    %3229 = vmatpush1.bf16.msra.mxu0 %v2702
    %3230 = vmatprep.subr.bf16.mxu0 %v2715
    %3231 = vmatpush1.bf16.msra.mxu0 %v2714
    %3232 = vmatprep.subr.bf16.mxu0 %v2727
    %3233 = vmatpush1.bf16.msra.mxu0 %v2726
    %3234 = vmatprep.mubr.bf16.mxu0 %v1678
    %3235 = vmatmul.mubr.bf16.gmra.mrb[0].mxu0 %v1677
    %v3236 = vpop.f32.mrb[0].mxu0
    %v3237 = vadd.f32 0.0, %v3236
    %v3238 = vpop.f32.mrb[0].mxu0
    %v3239 = vadd.f32 0.0, %v3238
    %v3240 = vpop.f32.mrb[0].mxu0
    %v3241 = vpop.f32.mrb[0].mxu0
    %3242 = vdwg.mxu0
    %3243 = vmatprep.subr.bf16.mxu0 %v2739
    %3244 = vmatpush1.bf16.msra.mxu0 %v2738
    %3245 = vmatprep.subr.bf16.mxu0 %v2751
    %3246 = vmatpush1.bf16.msra.mxu0 %v2750
    %3247 = vmatprep.subr.bf16.mxu0 %v2763
    %3248 = vmatpush1.bf16.msra.mxu0 %v2762
    %3249 = vmatprep.subr.bf16.mxu0 %v2775
    %3250 = vmatpush1.bf16.msra.mxu0 %v2774
    %3251 = vmatprep.subr.bf16.mxu0 %v2787
    %3252 = vmatpush1.bf16.msra.mxu0 %v2786
    %3253 = vmatprep.subr.bf16.mxu0 %v2799
    %3254 = vmatpush1.bf16.msra.mxu0 %v2798
    %3255 = vmatprep.subr.bf16.mxu0 %v2811
    %3256 = vmatpush1.bf16.msra.mxu0 %v2810
    %3257 = vmatprep.subr.bf16.mxu0 %v2823
    %3258 = vmatpush1.bf16.msra.mxu0 %v2822
    %3259 = vmatprep.subr.bf16.mxu0 0
    %3260 = vmatpush1.bf16.msra.mxu0 0
    %3261 = vmatprep.subr.bf16.mxu0 0
    %3262 = vmatpush1.bf16.msra.mxu0 0
    %3263 = vmatprep.subr.bf16.mxu0 0
    %3264 = vmatpush1.bf16.msra.mxu0 0
    %3265 = vmatprep.subr.bf16.mxu0 0
    %3266 = vmatpush1.bf16.msra.mxu0 0
    %3267 = vmatprep.subr.bf16.mxu0 0
    %3268 = vmatpush1.bf16.msra.mxu0 0
    %3269 = vmatprep.subr.bf16.mxu0 0
    %3270 = vmatpush1.bf16.msra.mxu0 0
    %3271 = vmatprep.subr.bf16.mxu0 0
    %3272 = vmatpush1.bf16.msra.mxu0 0
    %3273 = vmatprep.subr.bf16.mxu0 0
    %3274 = vmatpush1.bf16.msra.mxu0 0
    %3275 = vmatprep.mubr.bf16.mxu0 0
    %3276 = vmatmul.mubr.bf16.gmra.mrb[0].mxu0 %v1679
    %v3277 = vpop.f32.mrb[0].mxu0
    %v3278 = vadd.f32 %v3237, %v3277
    %v3279 = vpop.f32.mrb[0].mxu0
    %v3280 = vadd.f32 %v3239, %v3279
    %v3281 = vpop.f32.mrb[0].mxu0
    %v3282 = vpop.f32.mrb[0].mxu0
    %3283 = vdwg.mxu0
    %3284 = vmatprep.subr.bf16.mxu0 %v2549
    %3285 = vmatpush1.bf16.msra.mxu0 %v2548
    %3286 = vmatprep.subr.bf16.mxu0 %v2561
    %3287 = vmatpush1.bf16.msra.mxu0 %v2560
    %3288 = vmatprep.subr.bf16.mxu0 %v2573
    %3289 = vmatpush1.bf16.msra.mxu0 %v2572
    %3290 = vmatprep.subr.bf16.mxu0 %v2585
    %3291 = vmatpush1.bf16.msra.mxu0 %v2584
    %3292 = vmatprep.subr.bf16.mxu0 %v2597
    %3293 = vmatpush1.bf16.msra.mxu0 %v2596
    %3294 = vmatprep.subr.bf16.mxu0 %v2609
    %3295 = vmatpush1.bf16.msra.mxu0 %v2608
    %3296 = vmatprep.subr.bf16.mxu0 %v2621
    %3297 = vmatpush1.bf16.msra.mxu0 %v2620
    %3298 = vmatprep.subr.bf16.mxu0 %v2633
    %3299 = vmatpush1.bf16.msra.mxu0 %v2632
    %3300 = vmatprep.subr.bf16.mxu0 %v2645
    %3301 = vmatpush1.bf16.msra.mxu0 %v2644
    %3302 = vmatprep.subr.bf16.mxu0 %v2657
    %3303 = vmatpush1.bf16.msra.mxu0 %v2656
    %3304 = vmatprep.subr.bf16.mxu0 %v2669
    %3305 = vmatpush1.bf16.msra.mxu0 %v2668
    %3306 = vmatprep.subr.bf16.mxu0 %v2681
    %3307 = vmatpush1.bf16.msra.mxu0 %v2680
    %3308 = vmatprep.subr.bf16.mxu0 %v2693
    %3309 = vmatpush1.bf16.msra.mxu0 %v2692
    %3310 = vmatprep.subr.bf16.mxu0 %v2705
    %3311 = vmatpush1.bf16.msra.mxu0 %v2704
    %3312 = vmatprep.subr.bf16.mxu0 %v2717
    %3313 = vmatpush1.bf16.msra.mxu0 %v2716
    %3314 = vmatprep.subr.bf16.mxu0 %v2729
    %3315 = vmatpush1.bf16.msra.mxu0 %v2728
    %3316 = vmatprep.mubr.bf16.mxu0 %v1678
    %3317 = vmatmul.mubr.bf16.gmra.mrb[0].mxu0 %v1677
    %v3318 = vpop.f32.mrb[0].mxu0
    %v3319 = vadd.f32 0.0, %v3318
    %v3320 = vpop.f32.mrb[0].mxu0
    %v3321 = vadd.f32 0.0, %v3320
    %v3322 = vpop.f32.mrb[0].mxu0
    %v3323 = vpop.f32.mrb[0].mxu0
    %3324 = vdwg.mxu0
    %3325 = vmatprep.subr.bf16.mxu0 %v2741
    %3326 = vmatpush1.bf16.msra.mxu0 %v2740
    %3327 = vmatprep.subr.bf16.mxu0 %v2753
    %3328 = vmatpush1.bf16.msra.mxu0 %v2752
    %3329 = vmatprep.subr.bf16.mxu0 %v2765
    %3330 = vmatpush1.bf16.msra.mxu0 %v2764
    %3331 = vmatprep.subr.bf16.mxu0 %v2777
    %3332 = vmatpush1.bf16.msra.mxu0 %v2776
    %3333 = vmatprep.subr.bf16.mxu0 %v2789
    %3334 = vmatpush1.bf16.msra.mxu0 %v2788
    %3335 = vmatprep.subr.bf16.mxu0 %v2801
    %3336 = vmatpush1.bf16.msra.mxu0 %v2800
    %3337 = vmatprep.subr.bf16.mxu0 %v2813
    %3338 = vmatpush1.bf16.msra.mxu0 %v2812
    %3339 = vmatprep.subr.bf16.mxu0 %v2825
    %3340 = vmatpush1.bf16.msra.mxu0 %v2824
    %3341 = vmatprep.subr.bf16.mxu0 0
    %3342 = vmatpush1.bf16.msra.mxu0 0
    %3343 = vmatprep.subr.bf16.mxu0 0
    %3344 = vmatpush1.bf16.msra.mxu0 0
    %3345 = vmatprep.subr.bf16.mxu0 0
    %3346 = vmatpush1.bf16.msra.mxu0 0
    %3347 = vmatprep.subr.bf16.mxu0 0
    %3348 = vmatpush1.bf16.msra.mxu0 0
    %3349 = vmatprep.subr.bf16.mxu0 0
    %3350 = vmatpush1.bf16.msra.mxu0 0
    %3351 = vmatprep.subr.bf16.mxu0 0
    %3352 = vmatpush1.bf16.msra.mxu0 0
    %3353 = vmatprep.subr.bf16.mxu0 0
    %3354 = vmatpush1.bf16.msra.mxu0 0
    %3355 = vmatprep.subr.bf16.mxu0 0
    %3356 = vmatpush1.bf16.msra.mxu0 0
    %3357 = vmatprep.mubr.bf16.mxu0 0
    %3358 = vmatmul.mubr.bf16.gmra.mrb[0].mxu0 %v1679
    %v3359 = vpop.f32.mrb[0].mxu0
    %v3360 = vadd.f32 %v3319, %v3359
    %v3361 = vpop.f32.mrb[0].mxu0
    %v3362 = vadd.f32 %v3321, %v3361
    %v3363 = vpop.f32.mrb[0].mxu0
    %v3364 = vpop.f32.mrb[0].mxu0
    %3365 = vdwg.mxu0
    %3366 = vmatprep.subr.bf16.mxu0 %v2551
    %3367 = vmatpush1.bf16.msra.mxu0 %v2550
    %3368 = vmatprep.subr.bf16.mxu0 %v2563
    %3369 = vmatpush1.bf16.msra.mxu0 %v2562
    %3370 = vmatprep.subr.bf16.mxu0 %v2575
    %3371 = vmatpush1.bf16.msra.mxu0 %v2574
    %3372 = vmatprep.subr.bf16.mxu0 %v2587
    %3373 = vmatpush1.bf16.msra.mxu0 %v2586
    %3374 = vmatprep.subr.bf16.mxu0 %v2599
    %3375 = vmatpush1.bf16.msra.mxu0 %v2598
    %3376 = vmatprep.subr.bf16.mxu0 %v2611
    %3377 = vmatpush1.bf16.msra.mxu0 %v2610
    %3378 = vmatprep.subr.bf16.mxu0 %v2623
    %3379 = vmatpush1.bf16.msra.mxu0 %v2622
    %3380 = vmatprep.subr.bf16.mxu0 %v2635
    %3381 = vmatpush1.bf16.msra.mxu0 %v2634
    %3382 = vmatprep.subr.bf16.mxu0 %v2647
    %3383 = vmatpush1.bf16.msra.mxu0 %v2646
    %3384 = vmatprep.subr.bf16.mxu0 %v2659
    %3385 = vmatpush1.bf16.msra.mxu0 %v2658
    %3386 = vmatprep.subr.bf16.mxu0 %v2671
    %3387 = vmatpush1.bf16.msra.mxu0 %v2670
    %3388 = vmatprep.subr.bf16.mxu0 %v2683
    %3389 = vmatpush1.bf16.msra.mxu0 %v2682
    %3390 = vmatprep.subr.bf16.mxu0 %v2695
    %3391 = vmatpush1.bf16.msra.mxu0 %v2694
    %3392 = vmatprep.subr.bf16.mxu0 %v2707
    %3393 = vmatpush1.bf16.msra.mxu0 %v2706
    %3394 = vmatprep.subr.bf16.mxu0 %v2719
    %3395 = vmatpush1.bf16.msra.mxu0 %v2718
    %3396 = vmatprep.subr.bf16.mxu0 %v2731
    %3397 = vmatpush1.bf16.msra.mxu0 %v2730
    %3398 = vmatprep.mubr.bf16.mxu0 %v1678
    %3399 = vmatmul.mubr.bf16.gmra.mrb[0].mxu0 %v1677
    %v3400 = vpop.f32.mrb[0].mxu0
    %v3401 = vadd.f32 0.0, %v3400
    %v3402 = vpop.f32.mrb[0].mxu0
    %v3403 = vadd.f32 0.0, %v3402
    %v3404 = vpop.f32.mrb[0].mxu0
    %v3405 = vpop.f32.mrb[0].mxu0
    %3406 = vdwg.mxu0
    %3407 = vmatprep.subr.bf16.mxu0 %v2743
    %3408 = vmatpush1.bf16.msra.mxu0 %v2742
    %3409 = vmatprep.subr.bf16.mxu0 %v2755
    %3410 = vmatpush1.bf16.msra.mxu0 %v2754
    %3411 = vmatprep.subr.bf16.mxu0 %v2767
    %3412 = vmatpush1.bf16.msra.mxu0 %v2766
    %3413 = vmatprep.subr.bf16.mxu0 %v2779
    %3414 = vmatpush1.bf16.msra.mxu0 %v2778
    %3415 = vmatprep.subr.bf16.mxu0 %v2791
    %3416 = vmatpush1.bf16.msra.mxu0 %v2790
    %3417 = vmatprep.subr.bf16.mxu0 %v2803
    %3418 = vmatpush1.bf16.msra.mxu0 %v2802
    %3419 = vmatprep.subr.bf16.mxu0 %v2815
    %3420 = vmatpush1.bf16.msra.mxu0 %v2814
    %3421 = vmatprep.subr.bf16.mxu0 %v2827
    %3422 = vmatpush1.bf16.msra.mxu0 %v2826
    %3423 = vmatprep.subr.bf16.mxu0 0
    %3424 = vmatpush1.bf16.msra.mxu0 0
    %3425 = vmatprep.subr.bf16.mxu0 0
    %3426 = vmatpush1.bf16.msra.mxu0 0
    %3427 = vmatprep.subr.bf16.mxu0 0
    %3428 = vmatpush1.bf16.msra.mxu0 0
    %3429 = vmatprep.subr.bf16.mxu0 0
    %3430 = vmatpush1.bf16.msra.mxu0 0
    %3431 = vmatprep.subr.bf16.mxu0 0
    %3432 = vmatpush1.bf16.msra.mxu0 0
    %3433 = vmatprep.subr.bf16.mxu0 0
    %3434 = vmatpush1.bf16.msra.mxu0 0
    %3435 = vmatprep.subr.bf16.mxu0 0
    %3436 = vmatpush1.bf16.msra.mxu0 0
    %3437 = vmatprep.subr.bf16.mxu0 0
    %3438 = vmatpush1.bf16.msra.mxu0 0
    %3439 = vmatprep.mubr.bf16.mxu0 0
    %3440 = vmatmul.mubr.bf16.gmra.mrb[0].mxu0 %v1679
    %v3441 = vpop.f32.mrb[0].mxu0
    %v3442 = vadd.f32 %v3401, %v3441
    %v3443 = vpop.f32.mrb[0].mxu0
    %v3444 = vadd.f32 %v3403, %v3443
    %v3445 = vpop.f32.mrb[0].mxu0
    %v3446 = vpop.f32.mrb[0].mxu0
    %3447 = vdwg.mxu0
    %3448 = vmatprep.subr.bf16.mxu0 %v2553
    %3449 = vmatpush1.bf16.msra.mxu0 %v2552
    %3450 = vmatprep.subr.bf16.mxu0 %v2565
    %3451 = vmatpush1.bf16.msra.mxu0 %v2564
    %3452 = vmatprep.subr.bf16.mxu0 %v2577
    %3453 = vmatpush1.bf16.msra.mxu0 %v2576
    %3454 = vmatprep.subr.bf16.mxu0 %v2589
    %3455 = vmatpush1.bf16.msra.mxu0 %v2588
    %3456 = vmatprep.subr.bf16.mxu0 %v2601
    %3457 = vmatpush1.bf16.msra.mxu0 %v2600
    %3458 = vmatprep.subr.bf16.mxu0 %v2613
    %3459 = vmatpush1.bf16.msra.mxu0 %v2612
    %3460 = vmatprep.subr.bf16.mxu0 %v2625
    %3461 = vmatpush1.bf16.msra.mxu0 %v2624
    %3462 = vmatprep.subr.bf16.mxu0 %v2637
    %3463 = vmatpush1.bf16.msra.mxu0 %v2636
    %3464 = vmatprep.subr.bf16.mxu0 %v2649
    %3465 = vmatpush1.bf16.msra.mxu0 %v2648
    %3466 = vmatprep.subr.bf16.mxu0 %v2661
    %3467 = vmatpush1.bf16.msra.mxu0 %v2660
    %3468 = vmatprep.subr.bf16.mxu0 %v2673
    %3469 = vmatpush1.bf16.msra.mxu0 %v2672
    %3470 = vmatprep.subr.bf16.mxu0 %v2685
    %3471 = vmatpush1.bf16.msra.mxu0 %v2684
    %3472 = vmatprep.subr.bf16.mxu0 %v2697
    %3473 = vmatpush1.bf16.msra.mxu0 %v2696
    %3474 = vmatprep.subr.bf16.mxu0 %v2709
    %3475 = vmatpush1.bf16.msra.mxu0 %v2708
    %3476 = vmatprep.subr.bf16.mxu0 %v2721
    %3477 = vmatpush1.bf16.msra.mxu0 %v2720
    %3478 = vmatprep.subr.bf16.mxu0 %v2733
    %3479 = vmatpush1.bf16.msra.mxu0 %v2732
    %3480 = vmatprep.mubr.bf16.mxu0 %v1678
    %3481 = vmatmul.mubr.bf16.gmra.mrb[0].mxu0 %v1677
    %v3482 = vpop.f32.mrb[0].mxu0
    %v3483 = vadd.f32 0.0, %v3482
    %v3484 = vpop.f32.mrb[0].mxu0
    %v3485 = vadd.f32 0.0, %v3484
    %v3486 = vpop.f32.mrb[0].mxu0
    %v3487 = vpop.f32.mrb[0].mxu0
    %3488 = vdwg.mxu0
    %3489 = vmatprep.subr.bf16.mxu0 %v2745
    %3490 = vmatpush1.bf16.msra.mxu0 %v2744
    %3491 = vmatprep.subr.bf16.mxu0 %v2757
    %3492 = vmatpush1.bf16.msra.mxu0 %v2756
    %3493 = vmatprep.subr.bf16.mxu0 %v2769
    %3494 = vmatpush1.bf16.msra.mxu0 %v2768
    %3495 = vmatprep.subr.bf16.mxu0 %v2781
    %3496 = vmatpush1.bf16.msra.mxu0 %v2780
    %3497 = vmatprep.subr.bf16.mxu0 %v2793
    %3498 = vmatpush1.bf16.msra.mxu0 %v2792
    %3499 = vmatprep.subr.bf16.mxu0 %v2805
    %3500 = vmatpush1.bf16.msra.mxu0 %v2804
    %3501 = vmatprep.subr.bf16.mxu0 %v2817
    %3502 = vmatpush1.bf16.msra.mxu0 %v2816
    %3503 = vmatprep.subr.bf16.mxu0 %v2829
    %3504 = vmatpush1.bf16.msra.mxu0 %v2828
    %3505 = vmatprep.subr.bf16.mxu0 0
    %3506 = vmatpush1.bf16.msra.mxu0 0
    %3507 = vmatprep.subr.bf16.mxu0 0
    %3508 = vmatpush1.bf16.msra.mxu0 0
    %3509 = vmatprep.subr.bf16.mxu0 0
    %3510 = vmatpush1.bf16.msra.mxu0 0
    %3511 = vmatprep.subr.bf16.mxu0 0
    %3512 = vmatpush1.bf16.msra.mxu0 0
    %3513 = vmatprep.subr.bf16.mxu0 0
    %3514 = vmatpush1.bf16.msra.mxu0 0
    %3515 = vmatprep.subr.bf16.mxu0 0
    %3516 = vmatpush1.bf16.msra.mxu0 0
    %3517 = vmatprep.subr.bf16.mxu0 0
    %3518 = vmatpush1.bf16.msra.mxu0 0
    %3519 = vmatprep.subr.bf16.mxu0 0
    %3520 = vmatpush1.bf16.msra.mxu0 0
    %3521 = vmatprep.mubr.bf16.mxu0 0
    %3522 = vmatmul.mubr.bf16.gmra.mrb[0].mxu0 %v1679
    %v3523 = vpop.f32.mrb[0].mxu0
    %v3524 = vadd.f32 %v3483, %v3523
    %v3525 = vpop.f32.mrb[0].mxu0
    %v3526 = vadd.f32 %v3485, %v3525
    %v3527 = vpop.f32.mrb[0].mxu0
    %v3528 = vpop.f32.mrb[0].mxu0
    %3529 = vdwg.mxu0
    %3530 = vmatprep.subr.bf16.mxu0 %v2555
    %3531 = vmatpush1.bf16.msra.mxu0 %v2554
    %3532 = vmatprep.subr.bf16.mxu0 %v2567
    %3533 = vmatpush1.bf16.msra.mxu0 %v2566
    %3534 = vmatprep.subr.bf16.mxu0 %v2579
    %3535 = vmatpush1.bf16.msra.mxu0 %v2578
    %3536 = vmatprep.subr.bf16.mxu0 %v2591
    %3537 = vmatpush1.bf16.msra.mxu0 %v2590
    %3538 = vmatprep.subr.bf16.mxu0 %v2603
    %3539 = vmatpush1.bf16.msra.mxu0 %v2602
    %3540 = vmatprep.subr.bf16.mxu0 %v2615
    %3541 = vmatpush1.bf16.msra.mxu0 %v2614
    %3542 = vmatprep.subr.bf16.mxu0 %v2627
    %3543 = vmatpush1.bf16.msra.mxu0 %v2626
    %3544 = vmatprep.subr.bf16.mxu0 %v2639
    %3545 = vmatpush1.bf16.msra.mxu0 %v2638
    %3546 = vmatprep.subr.bf16.mxu0 %v2651
    %3547 = vmatpush1.bf16.msra.mxu0 %v2650
    %3548 = vmatprep.subr.bf16.mxu0 %v2663
    %3549 = vmatpush1.bf16.msra.mxu0 %v2662
    %3550 = vmatprep.subr.bf16.mxu0 %v2675
    %3551 = vmatpush1.bf16.msra.mxu0 %v2674
    %3552 = vmatprep.subr.bf16.mxu0 %v2687
    %3553 = vmatpush1.bf16.msra.mxu0 %v2686
    %3554 = vmatprep.subr.bf16.mxu0 %v2699
    %3555 = vmatpush1.bf16.msra.mxu0 %v2698
    %3556 = vmatprep.subr.bf16.mxu0 %v2711
    %3557 = vmatpush1.bf16.msra.mxu0 %v2710
    %3558 = vmatprep.subr.bf16.mxu0 %v2723
    %3559 = vmatpush1.bf16.msra.mxu0 %v2722
    %3560 = vmatprep.subr.bf16.mxu0 %v2735
    %3561 = vmatpush1.bf16.msra.mxu0 %v2734
    %3562 = vmatprep.mubr.bf16.mxu0 %v1678
    %3563 = vmatmul.mubr.bf16.gmra.mrb[0].mxu0 %v1677
    %v3564 = vpop.f32.mrb[0].mxu0
    %v3565 = vadd.f32 0.0, %v3564
    %v3566 = vpop.f32.mrb[0].mxu0
    %v3567 = vadd.f32 0.0, %v3566
    %v3568 = vpop.f32.mrb[0].mxu0
    %v3569 = vpop.f32.mrb[0].mxu0
    %3570 = vdwg.mxu0
    %3571 = vmatprep.subr.bf16.mxu0 %v2747
    %3572 = vmatpush1.bf16.msra.mxu0 %v2746
    %3573 = vmatprep.subr.bf16.mxu0 %v2759
    %3574 = vmatpush1.bf16.msra.mxu0 %v2758
    %3575 = vmatprep.subr.bf16.mxu0 %v2771
    %3576 = vmatpush1.bf16.msra.mxu0 %v2770
    %3577 = vmatprep.subr.bf16.mxu0 %v2783
    %3578 = vmatpush1.bf16.msra.mxu0 %v2782
    %3579 = vmatprep.subr.bf16.mxu0 %v2795
    %3580 = vmatpush1.bf16.msra.mxu0 %v2794
    %3581 = vmatprep.subr.bf16.mxu0 %v2807
    %3582 = vmatpush1.bf16.msra.mxu0 %v2806
    %3583 = vmatprep.subr.bf16.mxu0 %v2819
    %3584 = vmatpush1.bf16.msra.mxu0 %v2818
    %3585 = vmatprep.subr.bf16.mxu0 %v2831
    %3586 = vmatpush1.bf16.msra.mxu0 %v2830
    %3587 = vmatprep.subr.bf16.mxu0 0
    %3588 = vmatpush1.bf16.msra.mxu0 0
    %3589 = vmatprep.subr.bf16.mxu0 0
    %3590 = vmatpush1.bf16.msra.mxu0 0
    %3591 = vmatprep.subr.bf16.mxu0 0
    %3592 = vmatpush1.bf16.msra.mxu0 0
    %3593 = vmatprep.subr.bf16.mxu0 0
    %3594 = vmatpush1.bf16.msra.mxu0 0
    %3595 = vmatprep.subr.bf16.mxu0 0
    %3596 = vmatpush1.bf16.msra.mxu0 0
    %3597 = vmatprep.subr.bf16.mxu0 0
    %3598 = vmatpush1.bf16.msra.mxu0 0
    %3599 = vmatprep.subr.bf16.mxu0 0
    %3600 = vmatpush1.bf16.msra.mxu0 0
    %3601 = vmatprep.subr.bf16.mxu0 0
    %3602 = vmatpush1.bf16.msra.mxu0 0
    %3603 = vmatprep.mubr.bf16.mxu0 0
    %3604 = vmatmul.mubr.bf16.gmra.mrb[0].mxu0 %v1679
    %v3605 = vpop.f32.mrb[0].mxu0
    %v3606 = vadd.f32 %v3565, %v3605
    %v3607 = vpop.f32.mrb[0].mxu0
    %v3608 = vadd.f32 %v3567, %v3607
    %v3609 = vpop.f32.mrb[0].mxu0
    %v3610 = vpop.f32.mrb[0].mxu0
    %3611 = vdwg.mxu0
    %v3612 = vadd.f32 %v1318, %v3196
    %v3613 = vadd.f32 %v1320, %v3198
    %v3614 = vadd.f32 %v1389, %v3278
    %v3615 = vadd.f32 %v1391, %v3280
    %v3616 = vadd.f32 %v1460, %v3360
    %v3617 = vadd.f32 %v1462, %v3362
    %v3618 = vadd.f32 %v1531, %v3442
    %v3619 = vadd.f32 %v1533, %v3444
    %v3620 = vadd.f32 %v1602, %v3524
    %v3621 = vadd.f32 %v1604, %v3526
    %v3622 = vadd.f32 %v1673, %v3606
    %v3623 = vadd.f32 %v1675, %v3608
    %v3624 = vxor.u32 %v3612, 2147483648
    %v3625 = vxor.u32 %v3613, 2147483648
    %v3626 = vxor.u32 %v3614, 2147483648
    %v3627 = vmul.f32 %v3624, 1.442695
    %v3628 = vpow.pop %v3627
    %v3629 = vmul.f32 %v3625, 1.442695
    %v3630 = vpow.pop %v3629
    %v3631 = vmul.f32 %v3626, 1.442695
    %v3632 = vpow.pop %v3631
    %v3633 = vadd.f32 %v3628, 1.0
    %v3634 = vadd.f32 %v3630, 1.0
    %v3635 = vadd.f32 %v3632, 1.0
    %v3636 = vrcp.pop %v3633
    %v3637 = vmul.f32 1.0, %v3636
    %v3638 = vrcp.pop %v3634
    %v3639 = vmul.f32 1.0, %v3638
    %v3640 = vrcp.pop %v3635
    %v3641 = vmul.f32 1.0, %v3640
    %v3642 = vxor.u32 %v3615, 2147483648
    %v3643 = vxor.u32 %v3616, 2147483648
    %v3644 = vxor.u32 %v3617, 2147483648
    %v3645 = vmul.f32 %v3642, 1.442695
    %v3646 = vpow.pop %v3645
    %v3647 = vmul.f32 %v3643, 1.442695
    %v3648 = vpow.pop %v3647
    %v3649 = vmul.f32 %v3644, 1.442695
    %v3650 = vpow.pop %v3649
    %v3651 = vadd.f32 %v3646, 1.0
    %v3652 = vadd.f32 %v3648, 1.0
    %v3653 = vadd.f32 %v3650, 1.0
    %v3654 = vrcp.pop %v3651
    %v3655 = vmul.f32 1.0, %v3654
    %v3656 = vrcp.pop %v3652
    %v3657 = vmul.f32 1.0, %v3656
    %v3658 = vrcp.pop %v3653
    %v3659 = vmul.f32 1.0, %v3658
    %v3660 = vtanh.pop %v3618
    %v3661 = vtanh.pop %v3619
    %v3662 = vtanh.pop %v3620
    %v3663 = vxor.u32 %v3621, 2147483648
    %v3664 = vxor.u32 %v3622, 2147483648
    %v3665 = vxor.u32 %v3623, 2147483648
    %v3666 = vmul.f32 %v3663, 1.442695
    %v3667 = vpow.pop %v3666
    %v3668 = vmul.f32 %v3664, 1.442695
    %v3669 = vpow.pop %v3668
    %v3670 = vmul.f32 %v3665, 1.442695
    %v3671 = vpow.pop %v3670
    %v3672 = vadd.f32 %v3667, 1.0
    %v3673 = vadd.f32 %v3669, 1.0
    %v3674 = vadd.f32 %v3671, 1.0
    %v3675 = vrcp.pop %v3672
    %v3676 = vmul.f32 1.0, %v3675
    %v3677 = vrcp.pop %v3673
    %v3678 = vmul.f32 1.0, %v3677
    %v3679 = vrcp.pop %v3674
    %v3680 = vmul.f32 1.0, %v3679
    %v3681 = vmul.f32 %v3655, %v1238
    %v3682 = vmul.f32 %v3657, %v1239
    %v3683 = vmul.f32 %v3659, %v1240
    %v3684 = vmul.f32 %v3637, %v3660
    %v3685 = vmul.f32 %v3639, %v3661
    %v3686 = vmul.f32 %v3641, %v3662
    %v3687 = vadd.f32 %v3681, %v3684
    %v3688 = vadd.f32 %v3682, %v3685
    %v3689 = vadd.f32 %v3683, %v3686
    %v3690 = vtanh.pop %v3687
    %v3691 = vtanh.pop %v3688
    %v3692 = vtanh.pop %v3689
    %v3693 = vmul.f32 %v3676, %v3690
    %v3694 = vmul.f32 %v3678, %v3691
    %v3695 = vmul.f32 %v3680, %v3692
    %3696 = vrot.lane.b32.xlu0 %v310, 124
    %v3697 = vpop.permute.xlu0 %3696
    %v3698 = vsel %vm720, %v3697, 0
    %3700 = vmatprep.subr.mxu0 %v727
    %3701 = vmatpush1.msra.mxu0 %v725
    %3702 = vmatprep.subr.mxu0 0.0
    %3703 = vmatpush1.msra.mxu0 0.0
    %3704 = vmatprep.subr.mxu0 0.0
    %3705 = vmatpush1.msra.mxu0 0.0
    %3706 = vmatprep.subr.mxu0 0.0
    %3707 = vmatpush1.msra.mxu0 0.0
    %3708 = vmatprep.subr.mxu0 0.0
    %3709 = vmatpush1.msra.mxu0 0.0
    %3710 = vmatprep.subr.mxu0 0.0
    %3711 = vmatpush1.msra.mxu0 0.0
    %3712 = vmatprep.subr.mxu0 0.0
    %3713 = vmatpush1.msra.mxu0 0.0
    %3714 = vmatprep.subr.mxu0 0.0
    %3715 = vmatpush1.msra.mxu0 0.0
    %3716 = vmatprep.subr.mxu0 0.0
    %3717 = vmatpush1.msra.mxu0 0.0
    %3718 = vmatprep.subr.mxu0 0.0
    %3719 = vmatpush1.msra.mxu0 0.0
    %3720 = vmatprep.subr.mxu0 0.0
    %3721 = vmatpush1.msra.mxu0 0.0
    %3722 = vmatprep.subr.mxu0 0.0
    %3723 = vmatpush1.msra.mxu0 0.0
    %3724 = vmatprep.subr.mxu0 0.0
    %3725 = vmatpush1.msra.mxu0 0.0
    %3726 = vmatprep.subr.mxu0 0.0
    %3727 = vmatpush1.msra.mxu0 0.0
    %3728 = vmatprep.subr.mxu0 0.0
    %3729 = vmatpush1.msra.mxu0 0.0
    %3730 = vmatprep.subr.mxu0 0.0
    %3731 = vmatpush1.msra.mxu0 0.0
    %3732 = vmatprep.subr.mxu0 0.0
    %3733 = vmatpush1.msra.mxu0 0.0
    %3734 = vmatprep.subr.mxu0 0.0
    %3735 = vmatpush1.msra.mxu0 0.0
    %3736 = vmatprep.subr.mxu0 0.0
    %3737 = vmatpush1.msra.mxu0 0.0
    %3738 = vmatprep.subr.mxu0 0.0
    %3739 = vmatpush1.msra.mxu0 0.0
    %3740 = vmatprep.subr.mxu0 0.0
    %3741 = vmatpush1.msra.mxu0 0.0
    %3742 = vmatprep.subr.mxu0 0.0
    %3743 = vmatpush1.msra.mxu0 0.0
    %3744 = vmatprep.subr.mxu0 0.0
    %3745 = vmatpush1.msra.mxu0 0.0
    %3746 = vmatprep.subr.mxu0 0.0
    %3747 = vmatpush1.msra.mxu0 0.0
    %3748 = vmatprep.subr.mxu0 0.0
    %3749 = vmatpush1.msra.mxu0 0.0
    %3750 = vmatprep.subr.mxu0 0.0
    %3751 = vmatpush1.msra.mxu0 0.0
    %3752 = vmatprep.subr.mxu0 0.0
    %3753 = vmatpush1.msra.mxu0 0.0
    %3754 = vmatprep.subr.mxu0 0.0
    %3755 = vmatpush1.msra.mxu0 0.0
    %3756 = vmatprep.subr.mxu0 0.0
    %3757 = vmatpush1.msra.mxu0 0.0
    %3758 = vmatprep.subr.mxu0 0.0
    %3759 = vmatpush1.msra.mxu0 0.0
    %3760 = vmatprep.subr.mxu0 0.0
    %3761 = vmatpush1.msra.mxu0 0.0
    %3762 = vmatprep.subr.mxu0 0.0
    %3763 = vmatpush1.msra.mxu0 0.0
    %3764 = vmatprep.mubr.f32.mxu0 0.0
    %3765 = vmatmul.mubr.f32.gmra.mrb[0].mxu0 %v3698
    %v3766 = vpop.f32.mrb[0].mxu0
    %v3767 = vadd.f32 %v609, %v3766
    %v3768 = vpop.f32.mrb[0].mxu0
    %v3769 = vadd.f32 %v613, %v3768
    %3770 = vdwg.mxu0
    %3771 = vmatprep.subr.mxu0 %v731
    %3772 = vmatpush1.msra.mxu0 %v729
    %3773 = vmatprep.subr.mxu0 0.0
    %3774 = vmatpush1.msra.mxu0 0.0
    %3775 = vmatprep.subr.mxu0 0.0
    %3776 = vmatpush1.msra.mxu0 0.0
    %3777 = vmatprep.subr.mxu0 0.0
    %3778 = vmatpush1.msra.mxu0 0.0
    %3779 = vmatprep.subr.mxu0 0.0
    %3780 = vmatpush1.msra.mxu0 0.0
    %3781 = vmatprep.subr.mxu0 0.0
    %3782 = vmatpush1.msra.mxu0 0.0
    %3783 = vmatprep.subr.mxu0 0.0
    %3784 = vmatpush1.msra.mxu0 0.0
    %3785 = vmatprep.subr.mxu0 0.0
    %3786 = vmatpush1.msra.mxu0 0.0
    %3787 = vmatprep.subr.mxu0 0.0
    %3788 = vmatpush1.msra.mxu0 0.0
    %3789 = vmatprep.subr.mxu0 0.0
    %3790 = vmatpush1.msra.mxu0 0.0
    %3791 = vmatprep.subr.mxu0 0.0
    %3792 = vmatpush1.msra.mxu0 0.0
    %3793 = vmatprep.subr.mxu0 0.0
    %3794 = vmatpush1.msra.mxu0 0.0
    %3795 = vmatprep.subr.mxu0 0.0
    %3796 = vmatpush1.msra.mxu0 0.0
    %3797 = vmatprep.subr.mxu0 0.0
    %3798 = vmatpush1.msra.mxu0 0.0
    %3799 = vmatprep.subr.mxu0 0.0
    %3800 = vmatpush1.msra.mxu0 0.0
    %3801 = vmatprep.subr.mxu0 0.0
    %3802 = vmatpush1.msra.mxu0 0.0
    %3803 = vmatprep.subr.mxu0 0.0
    %3804 = vmatpush1.msra.mxu0 0.0
    %3805 = vmatprep.subr.mxu0 0.0
    %3806 = vmatpush1.msra.mxu0 0.0
    %3807 = vmatprep.subr.mxu0 0.0
    %3808 = vmatpush1.msra.mxu0 0.0
    %3809 = vmatprep.subr.mxu0 0.0
    %3810 = vmatpush1.msra.mxu0 0.0
    %3811 = vmatprep.subr.mxu0 0.0
    %3812 = vmatpush1.msra.mxu0 0.0
    %3813 = vmatprep.subr.mxu0 0.0
    %3814 = vmatpush1.msra.mxu0 0.0
    %3815 = vmatprep.subr.mxu0 0.0
    %3816 = vmatpush1.msra.mxu0 0.0
    %3817 = vmatprep.subr.mxu0 0.0
    %3818 = vmatpush1.msra.mxu0 0.0
    %3819 = vmatprep.subr.mxu0 0.0
    %3820 = vmatpush1.msra.mxu0 0.0
    %3821 = vmatprep.subr.mxu0 0.0
    %3822 = vmatpush1.msra.mxu0 0.0
    %3823 = vmatprep.subr.mxu0 0.0
    %3824 = vmatpush1.msra.mxu0 0.0
    %3825 = vmatprep.subr.mxu0 0.0
    %3826 = vmatpush1.msra.mxu0 0.0
    %3827 = vmatprep.subr.mxu0 0.0
    %3828 = vmatpush1.msra.mxu0 0.0
    %3829 = vmatprep.subr.mxu0 0.0
    %3830 = vmatpush1.msra.mxu0 0.0
    %3831 = vmatprep.subr.mxu0 0.0
    %3832 = vmatpush1.msra.mxu0 0.0
    %3833 = vmatprep.subr.mxu0 0.0
    %3834 = vmatpush1.msra.mxu0 0.0
    %3835 = vmatprep.mubr.f32.mxu0 0.0
    %3836 = vmatmul.mubr.f32.gmra.mrb[0].mxu0 %v3698
    %v3837 = vpop.f32.mrb[0].mxu0
    %v3838 = vadd.f32 %v617, %v3837
    %v3839 = vpop.f32.mrb[0].mxu0
    %v3840 = vadd.f32 %v621, %v3839
    %3841 = vdwg.mxu0
    %3842 = vmatprep.subr.mxu0 %v735
    %3843 = vmatpush1.msra.mxu0 %v733
    %3844 = vmatprep.subr.mxu0 0.0
    %3845 = vmatpush1.msra.mxu0 0.0
    %3846 = vmatprep.subr.mxu0 0.0
    %3847 = vmatpush1.msra.mxu0 0.0
    %3848 = vmatprep.subr.mxu0 0.0
    %3849 = vmatpush1.msra.mxu0 0.0
    %3850 = vmatprep.subr.mxu0 0.0
    %3851 = vmatpush1.msra.mxu0 0.0
    %3852 = vmatprep.subr.mxu0 0.0
    %3853 = vmatpush1.msra.mxu0 0.0
    %3854 = vmatprep.subr.mxu0 0.0
    %3855 = vmatpush1.msra.mxu0 0.0
    %3856 = vmatprep.subr.mxu0 0.0
    %3857 = vmatpush1.msra.mxu0 0.0
    %3858 = vmatprep.subr.mxu0 0.0
    %3859 = vmatpush1.msra.mxu0 0.0
    %3860 = vmatprep.subr.mxu0 0.0
    %3861 = vmatpush1.msra.mxu0 0.0
    %3862 = vmatprep.subr.mxu0 0.0
    %3863 = vmatpush1.msra.mxu0 0.0
    %3864 = vmatprep.subr.mxu0 0.0
    %3865 = vmatpush1.msra.mxu0 0.0
    %3866 = vmatprep.subr.mxu0 0.0
    %3867 = vmatpush1.msra.mxu0 0.0
    %3868 = vmatprep.subr.mxu0 0.0
    %3869 = vmatpush1.msra.mxu0 0.0
    %3870 = vmatprep.subr.mxu0 0.0
    %3871 = vmatpush1.msra.mxu0 0.0
    %3872 = vmatprep.subr.mxu0 0.0
    %3873 = vmatpush1.msra.mxu0 0.0
    %3874 = vmatprep.subr.mxu0 0.0
    %3875 = vmatpush1.msra.mxu0 0.0
    %3876 = vmatprep.subr.mxu0 0.0
    %3877 = vmatpush1.msra.mxu0 0.0
    %3878 = vmatprep.subr.mxu0 0.0
    %3879 = vmatpush1.msra.mxu0 0.0
    %3880 = vmatprep.subr.mxu0 0.0
    %3881 = vmatpush1.msra.mxu0 0.0
    %3882 = vmatprep.subr.mxu0 0.0
    %3883 = vmatpush1.msra.mxu0 0.0
    %3884 = vmatprep.subr.mxu0 0.0
    %3885 = vmatpush1.msra.mxu0 0.0
    %3886 = vmatprep.subr.mxu0 0.0
    %3887 = vmatpush1.msra.mxu0 0.0
    %3888 = vmatprep.subr.mxu0 0.0
    %3889 = vmatpush1.msra.mxu0 0.0
    %3890 = vmatprep.subr.mxu0 0.0
    %3891 = vmatpush1.msra.mxu0 0.0
    %3892 = vmatprep.subr.mxu0 0.0
    %3893 = vmatpush1.msra.mxu0 0.0
    %3894 = vmatprep.subr.mxu0 0.0
    %3895 = vmatpush1.msra.mxu0 0.0
    %3896 = vmatprep.subr.mxu0 0.0
    %3897 = vmatpush1.msra.mxu0 0.0
    %3898 = vmatprep.subr.mxu0 0.0
    %3899 = vmatpush1.msra.mxu0 0.0
    %3900 = vmatprep.subr.mxu0 0.0
    %3901 = vmatpush1.msra.mxu0 0.0
    %3902 = vmatprep.subr.mxu0 0.0
    %3903 = vmatpush1.msra.mxu0 0.0
    %3904 = vmatprep.subr.mxu0 0.0
    %3905 = vmatpush1.msra.mxu0 0.0
    %3906 = vmatprep.mubr.f32.mxu0 0.0
    %3907 = vmatmul.mubr.f32.gmra.mrb[0].mxu0 %v3698
    %v3908 = vpop.f32.mrb[0].mxu0
    %v3909 = vadd.f32 %v625, %v3908
    %v3910 = vpop.f32.mrb[0].mxu0
    %v3911 = vadd.f32 %v629, %v3910
    %3912 = vdwg.mxu0
    %3913 = vmatprep.subr.mxu0 %v739
    %3914 = vmatpush1.msra.mxu0 %v737
    %3915 = vmatprep.subr.mxu0 0.0
    %3916 = vmatpush1.msra.mxu0 0.0
    %3917 = vmatprep.subr.mxu0 0.0
    %3918 = vmatpush1.msra.mxu0 0.0
    %3919 = vmatprep.subr.mxu0 0.0
    %3920 = vmatpush1.msra.mxu0 0.0
    %3921 = vmatprep.subr.mxu0 0.0
    %3922 = vmatpush1.msra.mxu0 0.0
    %3923 = vmatprep.subr.mxu0 0.0
    %3924 = vmatpush1.msra.mxu0 0.0
    %3925 = vmatprep.subr.mxu0 0.0
    %3926 = vmatpush1.msra.mxu0 0.0
    %3927 = vmatprep.subr.mxu0 0.0
    %3928 = vmatpush1.msra.mxu0 0.0
    %3929 = vmatprep.subr.mxu0 0.0
    %3930 = vmatpush1.msra.mxu0 0.0
    %3931 = vmatprep.subr.mxu0 0.0
    %3932 = vmatpush1.msra.mxu0 0.0
    %3933 = vmatprep.subr.mxu0 0.0
    %3934 = vmatpush1.msra.mxu0 0.0
    %3935 = vmatprep.subr.mxu0 0.0
    %3936 = vmatpush1.msra.mxu0 0.0
    %3937 = vmatprep.subr.mxu0 0.0
    %3938 = vmatpush1.msra.mxu0 0.0
    %3939 = vmatprep.subr.mxu0 0.0
    %3940 = vmatpush1.msra.mxu0 0.0
    %3941 = vmatprep.subr.mxu0 0.0
    %3942 = vmatpush1.msra.mxu0 0.0
    %3943 = vmatprep.subr.mxu0 0.0
    %3944 = vmatpush1.msra.mxu0 0.0
    %3945 = vmatprep.subr.mxu0 0.0
    %3946 = vmatpush1.msra.mxu0 0.0
    %3947 = vmatprep.subr.mxu0 0.0
    %3948 = vmatpush1.msra.mxu0 0.0
    %3949 = vmatprep.subr.mxu0 0.0
    %3950 = vmatpush1.msra.mxu0 0.0
    %3951 = vmatprep.subr.mxu0 0.0
    %3952 = vmatpush1.msra.mxu0 0.0
    %3953 = vmatprep.subr.mxu0 0.0
    %3954 = vmatpush1.msra.mxu0 0.0
    %3955 = vmatprep.subr.mxu0 0.0
    %3956 = vmatpush1.msra.mxu0 0.0
    %3957 = vmatprep.subr.mxu0 0.0
    %3958 = vmatpush1.msra.mxu0 0.0
    %3959 = vmatprep.subr.mxu0 0.0
    %3960 = vmatpush1.msra.mxu0 0.0
    %3961 = vmatprep.subr.mxu0 0.0
    %3962 = vmatpush1.msra.mxu0 0.0
    %3963 = vmatprep.subr.mxu0 0.0
    %3964 = vmatpush1.msra.mxu0 0.0
    %3965 = vmatprep.subr.mxu0 0.0
    %3966 = vmatpush1.msra.mxu0 0.0
    %3967 = vmatprep.subr.mxu0 0.0
    %3968 = vmatpush1.msra.mxu0 0.0
    %3969 = vmatprep.subr.mxu0 0.0
    %3970 = vmatpush1.msra.mxu0 0.0
    %3971 = vmatprep.subr.mxu0 0.0
    %3972 = vmatpush1.msra.mxu0 0.0
    %3973 = vmatprep.subr.mxu0 0.0
    %3974 = vmatpush1.msra.mxu0 0.0
    %3975 = vmatprep.subr.mxu0 0.0
    %3976 = vmatpush1.msra.mxu0 0.0
    %3977 = vmatprep.mubr.f32.mxu0 0.0
    %3978 = vmatmul.mubr.f32.gmra.mrb[0].mxu0 %v3698
    %v3979 = vpop.f32.mrb[0].mxu0
    %v3980 = vadd.f32 %v633, %v3979
    %v3981 = vpop.f32.mrb[0].mxu0
    %v3982 = vadd.f32 %v637, %v3981
    %3983 = vdwg.mxu0
    %3984 = vmatprep.subr.mxu0 %v743
    %3985 = vmatpush1.msra.mxu0 %v741
    %3986 = vmatprep.subr.mxu0 0.0
    %3987 = vmatpush1.msra.mxu0 0.0
    %3988 = vmatprep.subr.mxu0 0.0
    %3989 = vmatpush1.msra.mxu0 0.0
    %3990 = vmatprep.subr.mxu0 0.0
    %3991 = vmatpush1.msra.mxu0 0.0
    %3992 = vmatprep.subr.mxu0 0.0
    %3993 = vmatpush1.msra.mxu0 0.0
    %3994 = vmatprep.subr.mxu0 0.0
    %3995 = vmatpush1.msra.mxu0 0.0
    %3996 = vmatprep.subr.mxu0 0.0
    %3997 = vmatpush1.msra.mxu0 0.0
    %3998 = vmatprep.subr.mxu0 0.0
    %3999 = vmatpush1.msra.mxu0 0.0
    %4000 = vmatprep.subr.mxu0 0.0
    %4001 = vmatpush1.msra.mxu0 0.0
    %4002 = vmatprep.subr.mxu0 0.0
    %4003 = vmatpush1.msra.mxu0 0.0
    %4004 = vmatprep.subr.mxu0 0.0
    %4005 = vmatpush1.msra.mxu0 0.0
    %4006 = vmatprep.subr.mxu0 0.0
    %4007 = vmatpush1.msra.mxu0 0.0
    %4008 = vmatprep.subr.mxu0 0.0
    %4009 = vmatpush1.msra.mxu0 0.0
    %4010 = vmatprep.subr.mxu0 0.0
    %4011 = vmatpush1.msra.mxu0 0.0
    %4012 = vmatprep.subr.mxu0 0.0
    %4013 = vmatpush1.msra.mxu0 0.0
    %4014 = vmatprep.subr.mxu0 0.0
    %4015 = vmatpush1.msra.mxu0 0.0
    %4016 = vmatprep.subr.mxu0 0.0
    %4017 = vmatpush1.msra.mxu0 0.0
    %4018 = vmatprep.subr.mxu0 0.0
    %4019 = vmatpush1.msra.mxu0 0.0
    %4020 = vmatprep.subr.mxu0 0.0
    %4021 = vmatpush1.msra.mxu0 0.0
    %4022 = vmatprep.subr.mxu0 0.0
    %4023 = vmatpush1.msra.mxu0 0.0
    %4024 = vmatprep.subr.mxu0 0.0
    %4025 = vmatpush1.msra.mxu0 0.0
    %4026 = vmatprep.subr.mxu0 0.0
    %4027 = vmatpush1.msra.mxu0 0.0
    %4028 = vmatprep.subr.mxu0 0.0
    %4029 = vmatpush1.msra.mxu0 0.0
    %4030 = vmatprep.subr.mxu0 0.0
    %4031 = vmatpush1.msra.mxu0 0.0
    %4032 = vmatprep.subr.mxu0 0.0
    %4033 = vmatpush1.msra.mxu0 0.0
    %4034 = vmatprep.subr.mxu0 0.0
    %4035 = vmatpush1.msra.mxu0 0.0
    %4036 = vmatprep.subr.mxu0 0.0
    %4037 = vmatpush1.msra.mxu0 0.0
    %4038 = vmatprep.subr.mxu0 0.0
    %4039 = vmatpush1.msra.mxu0 0.0
    %4040 = vmatprep.subr.mxu0 0.0
    %4041 = vmatpush1.msra.mxu0 0.0
    %4042 = vmatprep.subr.mxu0 0.0
    %4043 = vmatpush1.msra.mxu0 0.0
    %4044 = vmatprep.subr.mxu0 0.0
    %4045 = vmatpush1.msra.mxu0 0.0
    %4046 = vmatprep.subr.mxu0 0.0
    %4047 = vmatpush1.msra.mxu0 0.0
    %4048 = vmatprep.mubr.f32.mxu0 0.0
    %4049 = vmatmul.mubr.f32.gmra.mrb[0].mxu0 %v3698
    %v4050 = vpop.f32.mrb[0].mxu0
    %v4051 = vadd.f32 %v641, %v4050
    %v4052 = vpop.f32.mrb[0].mxu0
    %v4053 = vadd.f32 %v645, %v4052
    %4054 = vdwg.mxu0
    %4055 = vmatprep.subr.mxu0 %v747
    %4056 = vmatpush1.msra.mxu0 %v745
    %4057 = vmatprep.subr.mxu0 0.0
    %4058 = vmatpush1.msra.mxu0 0.0
    %4059 = vmatprep.subr.mxu0 0.0
    %4060 = vmatpush1.msra.mxu0 0.0
    %4061 = vmatprep.subr.mxu0 0.0
    %4062 = vmatpush1.msra.mxu0 0.0
    %4063 = vmatprep.subr.mxu0 0.0
    %4064 = vmatpush1.msra.mxu0 0.0
    %4065 = vmatprep.subr.mxu0 0.0
    %4066 = vmatpush1.msra.mxu0 0.0
    %4067 = vmatprep.subr.mxu0 0.0
    %4068 = vmatpush1.msra.mxu0 0.0
    %4069 = vmatprep.subr.mxu0 0.0
    %4070 = vmatpush1.msra.mxu0 0.0
    %4071 = vmatprep.subr.mxu0 0.0
    %4072 = vmatpush1.msra.mxu0 0.0
    %4073 = vmatprep.subr.mxu0 0.0
    %4074 = vmatpush1.msra.mxu0 0.0
    %4075 = vmatprep.subr.mxu0 0.0
    %4076 = vmatpush1.msra.mxu0 0.0
    %4077 = vmatprep.subr.mxu0 0.0
    %4078 = vmatpush1.msra.mxu0 0.0
    %4079 = vmatprep.subr.mxu0 0.0
    %4080 = vmatpush1.msra.mxu0 0.0
    %4081 = vmatprep.subr.mxu0 0.0
    %4082 = vmatpush1.msra.mxu0 0.0
    %4083 = vmatprep.subr.mxu0 0.0
    %4084 = vmatpush1.msra.mxu0 0.0
    %4085 = vmatprep.subr.mxu0 0.0
    %4086 = vmatpush1.msra.mxu0 0.0
    %4087 = vmatprep.subr.mxu0 0.0
    %4088 = vmatpush1.msra.mxu0 0.0
    %4089 = vmatprep.subr.mxu0 0.0
    %4090 = vmatpush1.msra.mxu0 0.0
    %4091 = vmatprep.subr.mxu0 0.0
    %4092 = vmatpush1.msra.mxu0 0.0
    %4093 = vmatprep.subr.mxu0 0.0
    %4094 = vmatpush1.msra.mxu0 0.0
    %4095 = vmatprep.subr.mxu0 0.0
    %4096 = vmatpush1.msra.mxu0 0.0
    %4097 = vmatprep.subr.mxu0 0.0
    %4098 = vmatpush1.msra.mxu0 0.0
    %4099 = vmatprep.subr.mxu0 0.0
    %4100 = vmatpush1.msra.mxu0 0.0
    %4101 = vmatprep.subr.mxu0 0.0
    %4102 = vmatpush1.msra.mxu0 0.0
    %4103 = vmatprep.subr.mxu0 0.0
    %4104 = vmatpush1.msra.mxu0 0.0
    %4105 = vmatprep.subr.mxu0 0.0
    %4106 = vmatpush1.msra.mxu0 0.0
    %4107 = vmatprep.subr.mxu0 0.0
    %4108 = vmatpush1.msra.mxu0 0.0
    %4109 = vmatprep.subr.mxu0 0.0
    %4110 = vmatpush1.msra.mxu0 0.0
    %4111 = vmatprep.subr.mxu0 0.0
    %4112 = vmatpush1.msra.mxu0 0.0
    %4113 = vmatprep.subr.mxu0 0.0
    %4114 = vmatpush1.msra.mxu0 0.0
    %4115 = vmatprep.subr.mxu0 0.0
    %4116 = vmatpush1.msra.mxu0 0.0
    %4117 = vmatprep.subr.mxu0 0.0
    %4118 = vmatpush1.msra.mxu0 0.0
    %4119 = vmatprep.mubr.f32.mxu0 0.0
    %4120 = vmatmul.mubr.f32.gmra.mrb[0].mxu0 %v3698
    %v4121 = vpop.f32.mrb[0].mxu0
    %v4122 = vadd.f32 %v649, %v4121
    %v4123 = vpop.f32.mrb[0].mxu0
    %v4124 = vadd.f32 %v653, %v4123
    %4125 = vdwg.mxu0
    %v4126 = vpack.c.bf16 %v3693, %v3693
    %v4127 = vpack.c.bf16 %v3694, %v3694
    %v4128 = vpack.c.bf16 %v3695, %v3695
    %4129 = vmatprep.subr.bf16.mxu0 %v2545
    %4130 = vmatpush1.bf16.msra.mxu0 %v2544
    %4131 = vmatprep.subr.bf16.mxu0 %v2557
    %4132 = vmatpush1.bf16.msra.mxu0 %v2556
    %4133 = vmatprep.subr.bf16.mxu0 %v2569
    %4134 = vmatpush1.bf16.msra.mxu0 %v2568
    %4135 = vmatprep.subr.bf16.mxu0 %v2581
    %4136 = vmatpush1.bf16.msra.mxu0 %v2580
    %4137 = vmatprep.subr.bf16.mxu0 %v2593
    %4138 = vmatpush1.bf16.msra.mxu0 %v2592
    %4139 = vmatprep.subr.bf16.mxu0 %v2605
    %4140 = vmatpush1.bf16.msra.mxu0 %v2604
    %4141 = vmatprep.subr.bf16.mxu0 %v2617
    %4142 = vmatpush1.bf16.msra.mxu0 %v2616
    %4143 = vmatprep.subr.bf16.mxu0 %v2629
    %4144 = vmatpush1.bf16.msra.mxu0 %v2628
    %4145 = vmatprep.subr.bf16.mxu0 %v2641
    %4146 = vmatpush1.bf16.msra.mxu0 %v2640
    %4147 = vmatprep.subr.bf16.mxu0 %v2653
    %4148 = vmatpush1.bf16.msra.mxu0 %v2652
    %4149 = vmatprep.subr.bf16.mxu0 %v2665
    %4150 = vmatpush1.bf16.msra.mxu0 %v2664
    %4151 = vmatprep.subr.bf16.mxu0 %v2677
    %4152 = vmatpush1.bf16.msra.mxu0 %v2676
    %4153 = vmatprep.subr.bf16.mxu0 %v2689
    %4154 = vmatpush1.bf16.msra.mxu0 %v2688
    %4155 = vmatprep.subr.bf16.mxu0 %v2701
    %4156 = vmatpush1.bf16.msra.mxu0 %v2700
    %4157 = vmatprep.subr.bf16.mxu0 %v2713
    %4158 = vmatpush1.bf16.msra.mxu0 %v2712
    %4159 = vmatprep.subr.bf16.mxu0 %v2725
    %4160 = vmatpush1.bf16.msra.mxu0 %v2724
    %4161 = vmatprep.mubr.bf16.mxu0 %v4127
    %4162 = vmatmul.mubr.bf16.gmra.mrb[0].mxu0 %v4126
    %v4163 = vpop.f32.mrb[0].mxu0
    %v4164 = vadd.f32 0.0, %v4163
    %v4165 = vpop.f32.mrb[0].mxu0
    %v4166 = vadd.f32 0.0, %v4165
    %v4167 = vpop.f32.mrb[0].mxu0
    %v4168 = vpop.f32.mrb[0].mxu0
    %4169 = vdwg.mxu0
    %4170 = vmatprep.subr.bf16.mxu0 %v2737
    %4171 = vmatpush1.bf16.msra.mxu0 %v2736
    %4172 = vmatprep.subr.bf16.mxu0 %v2749
    %4173 = vmatpush1.bf16.msra.mxu0 %v2748
    %4174 = vmatprep.subr.bf16.mxu0 %v2761
    %4175 = vmatpush1.bf16.msra.mxu0 %v2760
    %4176 = vmatprep.subr.bf16.mxu0 %v2773
    %4177 = vmatpush1.bf16.msra.mxu0 %v2772
    %4178 = vmatprep.subr.bf16.mxu0 %v2785
    %4179 = vmatpush1.bf16.msra.mxu0 %v2784
    %4180 = vmatprep.subr.bf16.mxu0 %v2797
    %4181 = vmatpush1.bf16.msra.mxu0 %v2796
    %4182 = vmatprep.subr.bf16.mxu0 %v2809
    %4183 = vmatpush1.bf16.msra.mxu0 %v2808
    %4184 = vmatprep.subr.bf16.mxu0 %v2821
    %4185 = vmatpush1.bf16.msra.mxu0 %v2820
    %4186 = vmatprep.subr.bf16.mxu0 0
    %4187 = vmatpush1.bf16.msra.mxu0 0
    %4188 = vmatprep.subr.bf16.mxu0 0
    %4189 = vmatpush1.bf16.msra.mxu0 0
    %4190 = vmatprep.subr.bf16.mxu0 0
    %4191 = vmatpush1.bf16.msra.mxu0 0
    %4192 = vmatprep.subr.bf16.mxu0 0
    %4193 = vmatpush1.bf16.msra.mxu0 0
    %4194 = vmatprep.subr.bf16.mxu0 0
    %4195 = vmatpush1.bf16.msra.mxu0 0
    %4196 = vmatprep.subr.bf16.mxu0 0
    %4197 = vmatpush1.bf16.msra.mxu0 0
    %4198 = vmatprep.subr.bf16.mxu0 0
    %4199 = vmatpush1.bf16.msra.mxu0 0
    %4200 = vmatprep.subr.bf16.mxu0 0
    %4201 = vmatpush1.bf16.msra.mxu0 0
    %4202 = vmatprep.mubr.bf16.mxu0 0
    %4203 = vmatmul.mubr.bf16.gmra.mrb[0].mxu0 %v4128
    %v4204 = vpop.f32.mrb[0].mxu0
    %v4205 = vadd.f32 %v4164, %v4204
    %v4206 = vpop.f32.mrb[0].mxu0
    %v4207 = vadd.f32 %v4166, %v4206
    %v4208 = vpop.f32.mrb[0].mxu0
    %v4209 = vpop.f32.mrb[0].mxu0
    %4210 = vdwg.mxu0
    %4211 = vmatprep.subr.bf16.mxu0 %v2547
    %4212 = vmatpush1.bf16.msra.mxu0 %v2546
    %4213 = vmatprep.subr.bf16.mxu0 %v2559
    %4214 = vmatpush1.bf16.msra.mxu0 %v2558
    %4215 = vmatprep.subr.bf16.mxu0 %v2571
    %4216 = vmatpush1.bf16.msra.mxu0 %v2570
    %4217 = vmatprep.subr.bf16.mxu0 %v2583
    %4218 = vmatpush1.bf16.msra.mxu0 %v2582
    %4219 = vmatprep.subr.bf16.mxu0 %v2595
    %4220 = vmatpush1.bf16.msra.mxu0 %v2594
    %4221 = vmatprep.subr.bf16.mxu0 %v2607
    %4222 = vmatpush1.bf16.msra.mxu0 %v2606
    %4223 = vmatprep.subr.bf16.mxu0 %v2619
    %4224 = vmatpush1.bf16.msra.mxu0 %v2618
    %4225 = vmatprep.subr.bf16.mxu0 %v2631
    %4226 = vmatpush1.bf16.msra.mxu0 %v2630
    %4227 = vmatprep.subr.bf16.mxu0 %v2643
    %4228 = vmatpush1.bf16.msra.mxu0 %v2642
    %4229 = vmatprep.subr.bf16.mxu0 %v2655
    %4230 = vmatpush1.bf16.msra.mxu0 %v2654
    %4231 = vmatprep.subr.bf16.mxu0 %v2667
    %4232 = vmatpush1.bf16.msra.mxu0 %v2666
    %4233 = vmatprep.subr.bf16.mxu0 %v2679
    %4234 = vmatpush1.bf16.msra.mxu0 %v2678
    %4235 = vmatprep.subr.bf16.mxu0 %v2691
    %4236 = vmatpush1.bf16.msra.mxu0 %v2690
    %4237 = vmatprep.subr.bf16.mxu0 %v2703
    %4238 = vmatpush1.bf16.msra.mxu0 %v2702
    %4239 = vmatprep.subr.bf16.mxu0 %v2715
    %4240 = vmatpush1.bf16.msra.mxu0 %v2714
    %4241 = vmatprep.subr.bf16.mxu0 %v2727
    %4242 = vmatpush1.bf16.msra.mxu0 %v2726
    %4243 = vmatprep.mubr.bf16.mxu0 %v4127
    %4244 = vmatmul.mubr.bf16.gmra.mrb[0].mxu0 %v4126
    %v4245 = vpop.f32.mrb[0].mxu0
    %v4246 = vadd.f32 0.0, %v4245
    %v4247 = vpop.f32.mrb[0].mxu0
    %v4248 = vadd.f32 0.0, %v4247
    %v4249 = vpop.f32.mrb[0].mxu0
    %v4250 = vpop.f32.mrb[0].mxu0
    %4251 = vdwg.mxu0
    %4252 = vmatprep.subr.bf16.mxu0 %v2739
    %4253 = vmatpush1.bf16.msra.mxu0 %v2738
    %4254 = vmatprep.subr.bf16.mxu0 %v2751
    %4255 = vmatpush1.bf16.msra.mxu0 %v2750
    %4256 = vmatprep.subr.bf16.mxu0 %v2763
    %4257 = vmatpush1.bf16.msra.mxu0 %v2762
    %4258 = vmatprep.subr.bf16.mxu0 %v2775
    %4259 = vmatpush1.bf16.msra.mxu0 %v2774
    %4260 = vmatprep.subr.bf16.mxu0 %v2787
    %4261 = vmatpush1.bf16.msra.mxu0 %v2786
    %4262 = vmatprep.subr.bf16.mxu0 %v2799
    %4263 = vmatpush1.bf16.msra.mxu0 %v2798
    %4264 = vmatprep.subr.bf16.mxu0 %v2811
    %4265 = vmatpush1.bf16.msra.mxu0 %v2810
    %4266 = vmatprep.subr.bf16.mxu0 %v2823
    %4267 = vmatpush1.bf16.msra.mxu0 %v2822
    %4268 = vmatprep.subr.bf16.mxu0 0
    %4269 = vmatpush1.bf16.msra.mxu0 0
    %4270 = vmatprep.subr.bf16.mxu0 0
    %4271 = vmatpush1.bf16.msra.mxu0 0
    %4272 = vmatprep.subr.bf16.mxu0 0
    %4273 = vmatpush1.bf16.msra.mxu0 0
    %4274 = vmatprep.subr.bf16.mxu0 0
    %4275 = vmatpush1.bf16.msra.mxu0 0
    %4276 = vmatprep.subr.bf16.mxu0 0
    %4277 = vmatpush1.bf16.msra.mxu0 0
    %4278 = vmatprep.subr.bf16.mxu0 0
    %4279 = vmatpush1.bf16.msra.mxu0 0
    %4280 = vmatprep.subr.bf16.mxu0 0
    %4281 = vmatpush1.bf16.msra.mxu0 0
    %4282 = vmatprep.subr.bf16.mxu0 0
    %4283 = vmatpush1.bf16.msra.mxu0 0
    %4284 = vmatprep.mubr.bf16.mxu0 0
    %4285 = vmatmul.mubr.bf16.gmra.mrb[0].mxu0 %v4128
    %v4286 = vpop.f32.mrb[0].mxu0
    %v4287 = vadd.f32 %v4246, %v4286
    %v4288 = vpop.f32.mrb[0].mxu0
    %v4289 = vadd.f32 %v4248, %v4288
    %v4290 = vpop.f32.mrb[0].mxu0
    %v4291 = vpop.f32.mrb[0].mxu0
    %4292 = vdwg.mxu0
    %4293 = vmatprep.subr.bf16.mxu0 %v2549
    %4294 = vmatpush1.bf16.msra.mxu0 %v2548
    %4295 = vmatprep.subr.bf16.mxu0 %v2561
    %4296 = vmatpush1.bf16.msra.mxu0 %v2560
    %4297 = vmatprep.subr.bf16.mxu0 %v2573
    %4298 = vmatpush1.bf16.msra.mxu0 %v2572
    %4299 = vmatprep.subr.bf16.mxu0 %v2585
    %4300 = vmatpush1.bf16.msra.mxu0 %v2584
    %4301 = vmatprep.subr.bf16.mxu0 %v2597
    %4302 = vmatpush1.bf16.msra.mxu0 %v2596
    %4303 = vmatprep.subr.bf16.mxu0 %v2609
    %4304 = vmatpush1.bf16.msra.mxu0 %v2608
    %4305 = vmatprep.subr.bf16.mxu0 %v2621
    %4306 = vmatpush1.bf16.msra.mxu0 %v2620
    %4307 = vmatprep.subr.bf16.mxu0 %v2633
    %4308 = vmatpush1.bf16.msra.mxu0 %v2632
    %4309 = vmatprep.subr.bf16.mxu0 %v2645
    %4310 = vmatpush1.bf16.msra.mxu0 %v2644
    %4311 = vmatprep.subr.bf16.mxu0 %v2657
    %4312 = vmatpush1.bf16.msra.mxu0 %v2656
    %4313 = vmatprep.subr.bf16.mxu0 %v2669
    %4314 = vmatpush1.bf16.msra.mxu0 %v2668
    %4315 = vmatprep.subr.bf16.mxu0 %v2681
    %4316 = vmatpush1.bf16.msra.mxu0 %v2680
    %4317 = vmatprep.subr.bf16.mxu0 %v2693
    %4318 = vmatpush1.bf16.msra.mxu0 %v2692
    %4319 = vmatprep.subr.bf16.mxu0 %v2705
    %4320 = vmatpush1.bf16.msra.mxu0 %v2704
    %4321 = vmatprep.subr.bf16.mxu0 %v2717
    %4322 = vmatpush1.bf16.msra.mxu0 %v2716
    %4323 = vmatprep.subr.bf16.mxu0 %v2729
    %4324 = vmatpush1.bf16.msra.mxu0 %v2728
    %4325 = vmatprep.mubr.bf16.mxu0 %v4127
    %4326 = vmatmul.mubr.bf16.gmra.mrb[0].mxu0 %v4126
    %v4327 = vpop.f32.mrb[0].mxu0
    %v4328 = vadd.f32 0.0, %v4327
    %v4329 = vpop.f32.mrb[0].mxu0
    %v4330 = vadd.f32 0.0, %v4329
    %v4331 = vpop.f32.mrb[0].mxu0
    %v4332 = vpop.f32.mrb[0].mxu0
    %4333 = vdwg.mxu0
    %4334 = vmatprep.subr.bf16.mxu0 %v2741
    %4335 = vmatpush1.bf16.msra.mxu0 %v2740
    %4336 = vmatprep.subr.bf16.mxu0 %v2753
    %4337 = vmatpush1.bf16.msra.mxu0 %v2752
    %4338 = vmatprep.subr.bf16.mxu0 %v2765
    %4339 = vmatpush1.bf16.msra.mxu0 %v2764
    %4340 = vmatprep.subr.bf16.mxu0 %v2777
    %4341 = vmatpush1.bf16.msra.mxu0 %v2776
    %4342 = vmatprep.subr.bf16.mxu0 %v2789
    %4343 = vmatpush1.bf16.msra.mxu0 %v2788
    %4344 = vmatprep.subr.bf16.mxu0 %v2801
    %4345 = vmatpush1.bf16.msra.mxu0 %v2800
    %4346 = vmatprep.subr.bf16.mxu0 %v2813
    %4347 = vmatpush1.bf16.msra.mxu0 %v2812
    %4348 = vmatprep.subr.bf16.mxu0 %v2825
    %4349 = vmatpush1.bf16.msra.mxu0 %v2824
    %4350 = vmatprep.subr.bf16.mxu0 0
    %4351 = vmatpush1.bf16.msra.mxu0 0
    %4352 = vmatprep.subr.bf16.mxu0 0
    %4353 = vmatpush1.bf16.msra.mxu0 0
    %4354 = vmatprep.subr.bf16.mxu0 0
    %4355 = vmatpush1.bf16.msra.mxu0 0
    %4356 = vmatprep.subr.bf16.mxu0 0
    %4357 = vmatpush1.bf16.msra.mxu0 0
    %4358 = vmatprep.subr.bf16.mxu0 0
    %4359 = vmatpush1.bf16.msra.mxu0 0
    %4360 = vmatprep.subr.bf16.mxu0 0
    %4361 = vmatpush1.bf16.msra.mxu0 0
    %4362 = vmatprep.subr.bf16.mxu0 0
    %4363 = vmatpush1.bf16.msra.mxu0 0
    %4364 = vmatprep.subr.bf16.mxu0 0
    %4365 = vmatpush1.bf16.msra.mxu0 0
    %4366 = vmatprep.mubr.bf16.mxu0 0
    %4367 = vmatmul.mubr.bf16.gmra.mrb[0].mxu0 %v4128
    %v4368 = vpop.f32.mrb[0].mxu0
    %v4369 = vadd.f32 %v4328, %v4368
    %v4370 = vpop.f32.mrb[0].mxu0
    %v4371 = vadd.f32 %v4330, %v4370
    %v4372 = vpop.f32.mrb[0].mxu0
    %v4373 = vpop.f32.mrb[0].mxu0
    %4374 = vdwg.mxu0
    %4375 = vmatprep.subr.bf16.mxu0 %v2551
    %4376 = vmatpush1.bf16.msra.mxu0 %v2550
    %4377 = vmatprep.subr.bf16.mxu0 %v2563
    %4378 = vmatpush1.bf16.msra.mxu0 %v2562
    %4379 = vmatprep.subr.bf16.mxu0 %v2575
    %4380 = vmatpush1.bf16.msra.mxu0 %v2574
    %4381 = vmatprep.subr.bf16.mxu0 %v2587
    %4382 = vmatpush1.bf16.msra.mxu0 %v2586
    %4383 = vmatprep.subr.bf16.mxu0 %v2599
    %4384 = vmatpush1.bf16.msra.mxu0 %v2598
    %4385 = vmatprep.subr.bf16.mxu0 %v2611
    %4386 = vmatpush1.bf16.msra.mxu0 %v2610
    %4387 = vmatprep.subr.bf16.mxu0 %v2623
    %4388 = vmatpush1.bf16.msra.mxu0 %v2622
    %4389 = vmatprep.subr.bf16.mxu0 %v2635
    %4390 = vmatpush1.bf16.msra.mxu0 %v2634
    %4391 = vmatprep.subr.bf16.mxu0 %v2647
    %4392 = vmatpush1.bf16.msra.mxu0 %v2646
    %4393 = vmatprep.subr.bf16.mxu0 %v2659
    %4394 = vmatpush1.bf16.msra.mxu0 %v2658
    %4395 = vmatprep.subr.bf16.mxu0 %v2671
    %4396 = vmatpush1.bf16.msra.mxu0 %v2670
    %4397 = vmatprep.subr.bf16.mxu0 %v2683
    %4398 = vmatpush1.bf16.msra.mxu0 %v2682
    %4399 = vmatprep.subr.bf16.mxu0 %v2695
    %4400 = vmatpush1.bf16.msra.mxu0 %v2694
    %4401 = vmatprep.subr.bf16.mxu0 %v2707
    %4402 = vmatpush1.bf16.msra.mxu0 %v2706
    %4403 = vmatprep.subr.bf16.mxu0 %v2719
    %4404 = vmatpush1.bf16.msra.mxu0 %v2718
    %4405 = vmatprep.subr.bf16.mxu0 %v2731
    %4406 = vmatpush1.bf16.msra.mxu0 %v2730
    %4407 = vmatprep.mubr.bf16.mxu0 %v4127
    %4408 = vmatmul.mubr.bf16.gmra.mrb[0].mxu0 %v4126
    %v4409 = vpop.f32.mrb[0].mxu0
    %v4410 = vadd.f32 0.0, %v4409
    %v4411 = vpop.f32.mrb[0].mxu0
    %v4412 = vadd.f32 0.0, %v4411
    %v4413 = vpop.f32.mrb[0].mxu0
    %v4414 = vpop.f32.mrb[0].mxu0
    %4415 = vdwg.mxu0
    %4416 = vmatprep.subr.bf16.mxu0 %v2743
    %4417 = vmatpush1.bf16.msra.mxu0 %v2742
    %4418 = vmatprep.subr.bf16.mxu0 %v2755
    %4419 = vmatpush1.bf16.msra.mxu0 %v2754
    %4420 = vmatprep.subr.bf16.mxu0 %v2767
    %4421 = vmatpush1.bf16.msra.mxu0 %v2766
    %4422 = vmatprep.subr.bf16.mxu0 %v2779
    %4423 = vmatpush1.bf16.msra.mxu0 %v2778
    %4424 = vmatprep.subr.bf16.mxu0 %v2791
    %4425 = vmatpush1.bf16.msra.mxu0 %v2790
    %4426 = vmatprep.subr.bf16.mxu0 %v2803
    %4427 = vmatpush1.bf16.msra.mxu0 %v2802
    %4428 = vmatprep.subr.bf16.mxu0 %v2815
    %4429 = vmatpush1.bf16.msra.mxu0 %v2814
    %4430 = vmatprep.subr.bf16.mxu0 %v2827
    %4431 = vmatpush1.bf16.msra.mxu0 %v2826
    %4432 = vmatprep.subr.bf16.mxu0 0
    %4433 = vmatpush1.bf16.msra.mxu0 0
    %4434 = vmatprep.subr.bf16.mxu0 0
    %4435 = vmatpush1.bf16.msra.mxu0 0
    %4436 = vmatprep.subr.bf16.mxu0 0
    %4437 = vmatpush1.bf16.msra.mxu0 0
    %4438 = vmatprep.subr.bf16.mxu0 0
    %4439 = vmatpush1.bf16.msra.mxu0 0
    %4440 = vmatprep.subr.bf16.mxu0 0
    %4441 = vmatpush1.bf16.msra.mxu0 0
    %4442 = vmatprep.subr.bf16.mxu0 0
    %4443 = vmatpush1.bf16.msra.mxu0 0
    %4444 = vmatprep.subr.bf16.mxu0 0
    %4445 = vmatpush1.bf16.msra.mxu0 0
    %4446 = vmatprep.subr.bf16.mxu0 0
    %4447 = vmatpush1.bf16.msra.mxu0 0
    %4448 = vmatprep.mubr.bf16.mxu0 0
    %4449 = vmatmul.mubr.bf16.gmra.mrb[0].mxu0 %v4128
    %v4450 = vpop.f32.mrb[0].mxu0
    %v4451 = vadd.f32 %v4410, %v4450
    %v4452 = vpop.f32.mrb[0].mxu0
    %v4453 = vadd.f32 %v4412, %v4452
    %v4454 = vpop.f32.mrb[0].mxu0
    %v4455 = vpop.f32.mrb[0].mxu0
    %4456 = vdwg.mxu0
    %4457 = vmatprep.subr.bf16.mxu0 %v2553
    %4458 = vmatpush1.bf16.msra.mxu0 %v2552
    %4459 = vmatprep.subr.bf16.mxu0 %v2565
    %4460 = vmatpush1.bf16.msra.mxu0 %v2564
    %4461 = vmatprep.subr.bf16.mxu0 %v2577
    %4462 = vmatpush1.bf16.msra.mxu0 %v2576
    %4463 = vmatprep.subr.bf16.mxu0 %v2589
    %4464 = vmatpush1.bf16.msra.mxu0 %v2588
    %4465 = vmatprep.subr.bf16.mxu0 %v2601
    %4466 = vmatpush1.bf16.msra.mxu0 %v2600
    %4467 = vmatprep.subr.bf16.mxu0 %v2613
    %4468 = vmatpush1.bf16.msra.mxu0 %v2612
    %4469 = vmatprep.subr.bf16.mxu0 %v2625
    %4470 = vmatpush1.bf16.msra.mxu0 %v2624
    %4471 = vmatprep.subr.bf16.mxu0 %v2637
    %4472 = vmatpush1.bf16.msra.mxu0 %v2636
    %4473 = vmatprep.subr.bf16.mxu0 %v2649
    %4474 = vmatpush1.bf16.msra.mxu0 %v2648
    %4475 = vmatprep.subr.bf16.mxu0 %v2661
    %4476 = vmatpush1.bf16.msra.mxu0 %v2660
    %4477 = vmatprep.subr.bf16.mxu0 %v2673
    %4478 = vmatpush1.bf16.msra.mxu0 %v2672
    %4479 = vmatprep.subr.bf16.mxu0 %v2685
    %4480 = vmatpush1.bf16.msra.mxu0 %v2684
    %4481 = vmatprep.subr.bf16.mxu0 %v2697
    %4482 = vmatpush1.bf16.msra.mxu0 %v2696
    %4483 = vmatprep.subr.bf16.mxu0 %v2709
    %4484 = vmatpush1.bf16.msra.mxu0 %v2708
    %4485 = vmatprep.subr.bf16.mxu0 %v2721
    %4486 = vmatpush1.bf16.msra.mxu0 %v2720
    %4487 = vmatprep.subr.bf16.mxu0 %v2733
    %4488 = vmatpush1.bf16.msra.mxu0 %v2732
    %4489 = vmatprep.mubr.bf16.mxu0 %v4127
    %4490 = vmatmul.mubr.bf16.gmra.mrb[0].mxu0 %v4126
    %v4491 = vpop.f32.mrb[0].mxu0
    %v4492 = vadd.f32 0.0, %v4491
    %v4493 = vpop.f32.mrb[0].mxu0
    %v4494 = vadd.f32 0.0, %v4493
    %v4495 = vpop.f32.mrb[0].mxu0
    %v4496 = vpop.f32.mrb[0].mxu0
    %4497 = vdwg.mxu0
    %4498 = vmatprep.subr.bf16.mxu0 %v2745
    %4499 = vmatpush1.bf16.msra.mxu0 %v2744
    %4500 = vmatprep.subr.bf16.mxu0 %v2757
    %4501 = vmatpush1.bf16.msra.mxu0 %v2756
    %4502 = vmatprep.subr.bf16.mxu0 %v2769
    %4503 = vmatpush1.bf16.msra.mxu0 %v2768
    %4504 = vmatprep.subr.bf16.mxu0 %v2781
    %4505 = vmatpush1.bf16.msra.mxu0 %v2780
    %4506 = vmatprep.subr.bf16.mxu0 %v2793
    %4507 = vmatpush1.bf16.msra.mxu0 %v2792
    %4508 = vmatprep.subr.bf16.mxu0 %v2805
    %4509 = vmatpush1.bf16.msra.mxu0 %v2804
    %4510 = vmatprep.subr.bf16.mxu0 %v2817
    %4511 = vmatpush1.bf16.msra.mxu0 %v2816
    %4512 = vmatprep.subr.bf16.mxu0 %v2829
    %4513 = vmatpush1.bf16.msra.mxu0 %v2828
    %4514 = vmatprep.subr.bf16.mxu0 0
    %4515 = vmatpush1.bf16.msra.mxu0 0
    %4516 = vmatprep.subr.bf16.mxu0 0
    %4517 = vmatpush1.bf16.msra.mxu0 0
    %4518 = vmatprep.subr.bf16.mxu0 0
    %4519 = vmatpush1.bf16.msra.mxu0 0
    %4520 = vmatprep.subr.bf16.mxu0 0
    %4521 = vmatpush1.bf16.msra.mxu0 0
    %4522 = vmatprep.subr.bf16.mxu0 0
    %4523 = vmatpush1.bf16.msra.mxu0 0
    %4524 = vmatprep.subr.bf16.mxu0 0
    %4525 = vmatpush1.bf16.msra.mxu0 0
    %4526 = vmatprep.subr.bf16.mxu0 0
    %4527 = vmatpush1.bf16.msra.mxu0 0
    %4528 = vmatprep.subr.bf16.mxu0 0
    %4529 = vmatpush1.bf16.msra.mxu0 0
    %4530 = vmatprep.mubr.bf16.mxu0 0
    %4531 = vmatmul.mubr.bf16.gmra.mrb[0].mxu0 %v4128
    %v4532 = vpop.f32.mrb[0].mxu0
    %v4533 = vadd.f32 %v4492, %v4532
    %v4534 = vpop.f32.mrb[0].mxu0
    %v4535 = vadd.f32 %v4494, %v4534
    %v4536 = vpop.f32.mrb[0].mxu0
    %v4537 = vpop.f32.mrb[0].mxu0
    %4538 = vdwg.mxu0
    %4539 = vmatprep.subr.bf16.mxu0 %v2555
    %4540 = vmatpush1.bf16.msra.mxu0 %v2554
    %4541 = vmatprep.subr.bf16.mxu0 %v2567
    %4542 = vmatpush1.bf16.msra.mxu0 %v2566
    %4543 = vmatprep.subr.bf16.mxu0 %v2579
    %4544 = vmatpush1.bf16.msra.mxu0 %v2578
    %4545 = vmatprep.subr.bf16.mxu0 %v2591
    %4546 = vmatpush1.bf16.msra.mxu0 %v2590
    %4547 = vmatprep.subr.bf16.mxu0 %v2603
    %4548 = vmatpush1.bf16.msra.mxu0 %v2602
    %4549 = vmatprep.subr.bf16.mxu0 %v2615
    %4550 = vmatpush1.bf16.msra.mxu0 %v2614
    %4551 = vmatprep.subr.bf16.mxu0 %v2627
    %4552 = vmatpush1.bf16.msra.mxu0 %v2626
    %4553 = vmatprep.subr.bf16.mxu0 %v2639
    %4554 = vmatpush1.bf16.msra.mxu0 %v2638
    %4555 = vmatprep.subr.bf16.mxu0 %v2651
    %4556 = vmatpush1.bf16.msra.mxu0 %v2650
    %4557 = vmatprep.subr.bf16.mxu0 %v2663
    %4558 = vmatpush1.bf16.msra.mxu0 %v2662
    %4559 = vmatprep.subr.bf16.mxu0 %v2675
    %4560 = vmatpush1.bf16.msra.mxu0 %v2674
    %4561 = vmatprep.subr.bf16.mxu0 %v2687
    %4562 = vmatpush1.bf16.msra.mxu0 %v2686
    %4563 = vmatprep.subr.bf16.mxu0 %v2699
    %4564 = vmatpush1.bf16.msra.mxu0 %v2698
    %4565 = vmatprep.subr.bf16.mxu0 %v2711
    %4566 = vmatpush1.bf16.msra.mxu0 %v2710
    %4567 = vmatprep.subr.bf16.mxu0 %v2723
    %4568 = vmatpush1.bf16.msra.mxu0 %v2722
    %4569 = vmatprep.subr.bf16.mxu0 %v2735
    %4570 = vmatpush1.bf16.msra.mxu0 %v2734
    %4571 = vmatprep.mubr.bf16.mxu0 %v4127
    %4572 = vmatmul.mubr.bf16.gmra.mrb[0].mxu0 %v4126
    %v4573 = vpop.f32.mrb[0].mxu0
    %v4574 = vadd.f32 0.0, %v4573
    %v4575 = vpop.f32.mrb[0].mxu0
    %v4576 = vadd.f32 0.0, %v4575
    %v4577 = vpop.f32.mrb[0].mxu0
    %v4578 = vpop.f32.mrb[0].mxu0
    %4579 = vdwg.mxu0
    %4580 = vmatprep.subr.bf16.mxu0 %v2747
    %4581 = vmatpush1.bf16.msra.mxu0 %v2746
    %4582 = vmatprep.subr.bf16.mxu0 %v2759
    %4583 = vmatpush1.bf16.msra.mxu0 %v2758
    %4584 = vmatprep.subr.bf16.mxu0 %v2771
    %4585 = vmatpush1.bf16.msra.mxu0 %v2770
    %4586 = vmatprep.subr.bf16.mxu0 %v2783
    %4587 = vmatpush1.bf16.msra.mxu0 %v2782
    %4588 = vmatprep.subr.bf16.mxu0 %v2795
    %4589 = vmatpush1.bf16.msra.mxu0 %v2794
    %4590 = vmatprep.subr.bf16.mxu0 %v2807
    %4591 = vmatpush1.bf16.msra.mxu0 %v2806
    %4592 = vmatprep.subr.bf16.mxu0 %v2819
    %4593 = vmatpush1.bf16.msra.mxu0 %v2818
    %4594 = vmatprep.subr.bf16.mxu0 %v2831
    %4595 = vmatpush1.bf16.msra.mxu0 %v2830
    %4596 = vmatprep.subr.bf16.mxu0 0
    %4597 = vmatpush1.bf16.msra.mxu0 0
    %4598 = vmatprep.subr.bf16.mxu0 0
    %4599 = vmatpush1.bf16.msra.mxu0 0
    %4600 = vmatprep.subr.bf16.mxu0 0
    %4601 = vmatpush1.bf16.msra.mxu0 0
    %4602 = vmatprep.subr.bf16.mxu0 0
    %4603 = vmatpush1.bf16.msra.mxu0 0
    %4604 = vmatprep.subr.bf16.mxu0 0
    %4605 = vmatpush1.bf16.msra.mxu0 0
    %4606 = vmatprep.subr.bf16.mxu0 0
    %4607 = vmatpush1.bf16.msra.mxu0 0
    %4608 = vmatprep.subr.bf16.mxu0 0
    %4609 = vmatpush1.bf16.msra.mxu0 0
    %4610 = vmatprep.subr.bf16.mxu0 0
    %4611 = vmatpush1.bf16.msra.mxu0 0
    %4612 = vmatprep.mubr.bf16.mxu0 0
    %4613 = vmatmul.mubr.bf16.gmra.mrb[0].mxu0 %v4128
    %v4614 = vpop.f32.mrb[0].mxu0
    %v4615 = vadd.f32 %v4574, %v4614
    %v4616 = vpop.f32.mrb[0].mxu0
    %v4617 = vadd.f32 %v4576, %v4616
    %v4618 = vpop.f32.mrb[0].mxu0
    %v4619 = vpop.f32.mrb[0].mxu0
    %4620 = vdwg.mxu0
    %v4621 = vadd.f32 %v3767, %v4205
    %v4622 = vadd.f32 %v3769, %v4207
    %v4623 = vadd.f32 %v3838, %v4287
    %v4624 = vadd.f32 %v3840, %v4289
    %v4625 = vadd.f32 %v3909, %v4369
    %v4626 = vadd.f32 %v3911, %v4371
    %v4627 = vadd.f32 %v3980, %v4451
    %v4628 = vadd.f32 %v3982, %v4453
    %v4629 = vadd.f32 %v4051, %v4533
    %v4630 = vadd.f32 %v4053, %v4535
    %v4631 = vadd.f32 %v4122, %v4615
    %v4632 = vadd.f32 %v4124, %v4617
    %v4633 = vxor.u32 %v4621, 2147483648
    %v4634 = vxor.u32 %v4622, 2147483648
    %v4635 = vxor.u32 %v4623, 2147483648
    %v4636 = vmul.f32 %v4633, 1.442695
    %v4637 = vpow.pop %v4636
    %v4638 = vmul.f32 %v4634, 1.442695
    %v4639 = vpow.pop %v4638
    %v4640 = vmul.f32 %v4635, 1.442695
    %v4641 = vpow.pop %v4640
    %v4642 = vadd.f32 %v4637, 1.0
    %v4643 = vadd.f32 %v4639, 1.0
    %v4644 = vadd.f32 %v4641, 1.0
    %v4645 = vrcp.pop %v4642
    %v4646 = vmul.f32 1.0, %v4645
    %v4647 = vrcp.pop %v4643
    %v4648 = vmul.f32 1.0, %v4647
    %v4649 = vrcp.pop %v4644
    %v4650 = vmul.f32 1.0, %v4649
    %v4651 = vxor.u32 %v4624, 2147483648
    %v4652 = vxor.u32 %v4625, 2147483648
    %v4653 = vxor.u32 %v4626, 2147483648
    %v4654 = vmul.f32 %v4651, 1.442695
    %v4655 = vpow.pop %v4654
    %v4656 = vmul.f32 %v4652, 1.442695
    %v4657 = vpow.pop %v4656
    %v4658 = vmul.f32 %v4653, 1.442695
    %v4659 = vpow.pop %v4658
    %v4660 = vadd.f32 %v4655, 1.0
    %v4661 = vadd.f32 %v4657, 1.0
    %v4662 = vadd.f32 %v4659, 1.0
    %v4663 = vrcp.pop %v4660
    %v4664 = vmul.f32 1.0, %v4663
    %v4665 = vrcp.pop %v4661
    %v4666 = vmul.f32 1.0, %v4665
    %v4667 = vrcp.pop %v4662
    %v4668 = vmul.f32 1.0, %v4667
    %v4669 = vtanh.pop %v4627
    %v4670 = vtanh.pop %v4628
    %v4671 = vtanh.pop %v4629
    %v4672 = vxor.u32 %v4630, 2147483648
    %v4673 = vxor.u32 %v4631, 2147483648
    %v4674 = vxor.u32 %v4632, 2147483648
    %v4675 = vmul.f32 %v4672, 1.442695
    %v4676 = vpow.pop %v4675
    %v4677 = vmul.f32 %v4673, 1.442695
    %v4678 = vpow.pop %v4677
    %v4679 = vmul.f32 %v4674, 1.442695
    %v4680 = vpow.pop %v4679
    %v4681 = vadd.f32 %v4676, 1.0
    %v4682 = vadd.f32 %v4678, 1.0
    %v4683 = vadd.f32 %v4680, 1.0
    %v4684 = vrcp.pop %v4681
    %v4685 = vmul.f32 1.0, %v4684
    %v4686 = vrcp.pop %v4682
    %v4687 = vmul.f32 1.0, %v4686
    %v4688 = vrcp.pop %v4683
    %v4689 = vmul.f32 1.0, %v4688
    %v4690 = vmul.f32 %v4664, %v3687
    %v4691 = vmul.f32 %v4666, %v3688
    %v4692 = vmul.f32 %v4668, %v3689
    %v4693 = vmul.f32 %v4646, %v4669
    %v4694 = vmul.f32 %v4648, %v4670
    %v4695 = vmul.f32 %v4650, %v4671
    %v4696 = vadd.f32 %v4690, %v4693
    %v4697 = vadd.f32 %v4691, %v4694
    %v4698 = vadd.f32 %v4692, %v4695
    %v4699 = vtanh.pop %v4696
    %v4700 = vtanh.pop %v4697
    %v4701 = vtanh.pop %v4698
    %v4702 = vmul.f32 %v4685, %v4699
    %v4703 = vmul.f32 %v4687, %v4700
    %v4704 = vmul.f32 %v4689, %v4701
    %4705 = vrot.lane.b32.xlu0 %v310, 122
    %v4706 = vpop.permute.xlu0 %4705
    %v4707 = vsel %vm720, %v4706, 0
    %4709 = vmatprep.subr.mxu0 %v727
    %4710 = vmatpush1.msra.mxu0 %v725
    %4711 = vmatprep.subr.mxu0 0.0
    %4712 = vmatpush1.msra.mxu0 0.0
    %4713 = vmatprep.subr.mxu0 0.0
    %4714 = vmatpush1.msra.mxu0 0.0
    %4715 = vmatprep.subr.mxu0 0.0
    %4716 = vmatpush1.msra.mxu0 0.0
    %4717 = vmatprep.subr.mxu0 0.0
    %4718 = vmatpush1.msra.mxu0 0.0
    %4719 = vmatprep.subr.mxu0 0.0
    %4720 = vmatpush1.msra.mxu0 0.0
    %4721 = vmatprep.subr.mxu0 0.0
    %4722 = vmatpush1.msra.mxu0 0.0
    %4723 = vmatprep.subr.mxu0 0.0
    %4724 = vmatpush1.msra.mxu0 0.0
    %4725 = vmatprep.subr.mxu0 0.0
    %4726 = vmatpush1.msra.mxu0 0.0
    %4727 = vmatprep.subr.mxu0 0.0
    %4728 = vmatpush1.msra.mxu0 0.0
    %4729 = vmatprep.subr.mxu0 0.0
    %4730 = vmatpush1.msra.mxu0 0.0
    %4731 = vmatprep.subr.mxu0 0.0
    %4732 = vmatpush1.msra.mxu0 0.0
    %4733 = vmatprep.subr.mxu0 0.0
    %4734 = vmatpush1.msra.mxu0 0.0
    %4735 = vmatprep.subr.mxu0 0.0
    %4736 = vmatpush1.msra.mxu0 0.0
    %4737 = vmatprep.subr.mxu0 0.0
    %4738 = vmatpush1.msra.mxu0 0.0
    %4739 = vmatprep.subr.mxu0 0.0
    %4740 = vmatpush1.msra.mxu0 0.0
    %4741 = vmatprep.subr.mxu0 0.0
    %4742 = vmatpush1.msra.mxu0 0.0
    %4743 = vmatprep.subr.mxu0 0.0
    %4744 = vmatpush1.msra.mxu0 0.0
    %4745 = vmatprep.subr.mxu0 0.0
    %4746 = vmatpush1.msra.mxu0 0.0
    %4747 = vmatprep.subr.mxu0 0.0
    %4748 = vmatpush1.msra.mxu0 0.0
    %4749 = vmatprep.subr.mxu0 0.0
    %4750 = vmatpush1.msra.mxu0 0.0
    %4751 = vmatprep.subr.mxu0 0.0
    %4752 = vmatpush1.msra.mxu0 0.0
    %4753 = vmatprep.subr.mxu0 0.0
    %4754 = vmatpush1.msra.mxu0 0.0
    %4755 = vmatprep.subr.mxu0 0.0
    %4756 = vmatpush1.msra.mxu0 0.0
    %4757 = vmatprep.subr.mxu0 0.0
    %4758 = vmatpush1.msra.mxu0 0.0
    %4759 = vmatprep.subr.mxu0 0.0
    %4760 = vmatpush1.msra.mxu0 0.0
    %4761 = vmatprep.subr.mxu0 0.0
    %4762 = vmatpush1.msra.mxu0 0.0
    %4763 = vmatprep.subr.mxu0 0.0
    %4764 = vmatpush1.msra.mxu0 0.0
    %4765 = vmatprep.subr.mxu0 0.0
    %4766 = vmatpush1.msra.mxu0 0.0
    %4767 = vmatprep.subr.mxu0 0.0
    %4768 = vmatpush1.msra.mxu0 0.0
    %4769 = vmatprep.subr.mxu0 0.0
    %4770 = vmatpush1.msra.mxu0 0.0
    %4771 = vmatprep.subr.mxu0 0.0
    %4772 = vmatpush1.msra.mxu0 0.0
    %4773 = vmatprep.mubr.f32.mxu0 0.0
    %4774 = vmatmul.mubr.f32.gmra.mrb[0].mxu0 %v4707
    %v4775 = vpop.f32.mrb[0].mxu0
    %v4776 = vadd.f32 %v609, %v4775
    %v4777 = vpop.f32.mrb[0].mxu0
    %v4778 = vadd.f32 %v613, %v4777
    %4779 = vdwg.mxu0
    %4780 = vmatprep.subr.mxu0 %v731
    %4781 = vmatpush1.msra.mxu0 %v729
    %4782 = vmatprep.subr.mxu0 0.0
    %4783 = vmatpush1.msra.mxu0 0.0
    %4784 = vmatprep.subr.mxu0 0.0
    %4785 = vmatpush1.msra.mxu0 0.0
    %4786 = vmatprep.subr.mxu0 0.0
    %4787 = vmatpush1.msra.mxu0 0.0
    %4788 = vmatprep.subr.mxu0 0.0
    %4789 = vmatpush1.msra.mxu0 0.0
    %4790 = vmatprep.subr.mxu0 0.0
    %4791 = vmatpush1.msra.mxu0 0.0
    %4792 = vmatprep.subr.mxu0 0.0
    %4793 = vmatpush1.msra.mxu0 0.0
    %4794 = vmatprep.subr.mxu0 0.0
    %4795 = vmatpush1.msra.mxu0 0.0
    %4796 = vmatprep.subr.mxu0 0.0
    %4797 = vmatpush1.msra.mxu0 0.0
    %4798 = vmatprep.subr.mxu0 0.0
    %4799 = vmatpush1.msra.mxu0 0.0
    %4800 = vmatprep.subr.mxu0 0.0
    %4801 = vmatpush1.msra.mxu0 0.0
    %4802 = vmatprep.subr.mxu0 0.0
    %4803 = vmatpush1.msra.mxu0 0.0
    %4804 = vmatprep.subr.mxu0 0.0
    %4805 = vmatpush1.msra.mxu0 0.0
    %4806 = vmatprep.subr.mxu0 0.0
    %4807 = vmatpush1.msra.mxu0 0.0
    %4808 = vmatprep.subr.mxu0 0.0
    %4809 = vmatpush1.msra.mxu0 0.0
    %4810 = vmatprep.subr.mxu0 0.0
    %4811 = vmatpush1.msra.mxu0 0.0
    %4812 = vmatprep.subr.mxu0 0.0
    %4813 = vmatpush1.msra.mxu0 0.0
    %4814 = vmatprep.subr.mxu0 0.0
    %4815 = vmatpush1.msra.mxu0 0.0
    %4816 = vmatprep.subr.mxu0 0.0
    %4817 = vmatpush1.msra.mxu0 0.0
    %4818 = vmatprep.subr.mxu0 0.0
    %4819 = vmatpush1.msra.mxu0 0.0
    %4820 = vmatprep.subr.mxu0 0.0
    %4821 = vmatpush1.msra.mxu0 0.0
    %4822 = vmatprep.subr.mxu0 0.0
    %4823 = vmatpush1.msra.mxu0 0.0
    %4824 = vmatprep.subr.mxu0 0.0
    %4825 = vmatpush1.msra.mxu0 0.0
    %4826 = vmatprep.subr.mxu0 0.0
    %4827 = vmatpush1.msra.mxu0 0.0
    %4828 = vmatprep.subr.mxu0 0.0
    %4829 = vmatpush1.msra.mxu0 0.0
    %4830 = vmatprep.subr.mxu0 0.0
    %4831 = vmatpush1.msra.mxu0 0.0
    %4832 = vmatprep.subr.mxu0 0.0
    %4833 = vmatpush1.msra.mxu0 0.0
    %4834 = vmatprep.subr.mxu0 0.0
    %4835 = vmatpush1.msra.mxu0 0.0
    %4836 = vmatprep.subr.mxu0 0.0
    %4837 = vmatpush1.msra.mxu0 0.0
    %4838 = vmatprep.subr.mxu0 0.0
    %4839 = vmatpush1.msra.mxu0 0.0
    %4840 = vmatprep.subr.mxu0 0.0
    %4841 = vmatpush1.msra.mxu0 0.0
    %4842 = vmatprep.subr.mxu0 0.0
    %4843 = vmatpush1.msra.mxu0 0.0
    %4844 = vmatprep.mubr.f32.mxu0 0.0
    %4845 = vmatmul.mubr.f32.gmra.mrb[0].mxu0 %v4707
    %v4846 = vpop.f32.mrb[0].mxu0
    %v4847 = vadd.f32 %v617, %v4846
    %v4848 = vpop.f32.mrb[0].mxu0
    %v4849 = vadd.f32 %v621, %v4848
    %4850 = vdwg.mxu0
    %4851 = vmatprep.subr.mxu0 %v735
    %4852 = vmatpush1.msra.mxu0 %v733
    %4853 = vmatprep.subr.mxu0 0.0
    %4854 = vmatpush1.msra.mxu0 0.0
    %4855 = vmatprep.subr.mxu0 0.0
    %4856 = vmatpush1.msra.mxu0 0.0
    %4857 = vmatprep.subr.mxu0 0.0
    %4858 = vmatpush1.msra.mxu0 0.0
    %4859 = vmatprep.subr.mxu0 0.0
    %4860 = vmatpush1.msra.mxu0 0.0
    %4861 = vmatprep.subr.mxu0 0.0
    %4862 = vmatpush1.msra.mxu0 0.0
    %4863 = vmatprep.subr.mxu0 0.0
    %4864 = vmatpush1.msra.mxu0 0.0
    %4865 = vmatprep.subr.mxu0 0.0
    %4866 = vmatpush1.msra.mxu0 0.0
    %4867 = vmatprep.subr.mxu0 0.0
    %4868 = vmatpush1.msra.mxu0 0.0
    %4869 = vmatprep.subr.mxu0 0.0
    %4870 = vmatpush1.msra.mxu0 0.0
    %4871 = vmatprep.subr.mxu0 0.0
    %4872 = vmatpush1.msra.mxu0 0.0
    %4873 = vmatprep.subr.mxu0 0.0
    %4874 = vmatpush1.msra.mxu0 0.0
    %4875 = vmatprep.subr.mxu0 0.0
    %4876 = vmatpush1.msra.mxu0 0.0
    %4877 = vmatprep.subr.mxu0 0.0
    %4878 = vmatpush1.msra.mxu0 0.0
    %4879 = vmatprep.subr.mxu0 0.0
    %4880 = vmatpush1.msra.mxu0 0.0
    %4881 = vmatprep.subr.mxu0 0.0
    %4882 = vmatpush1.msra.mxu0 0.0
    %4883 = vmatprep.subr.mxu0 0.0
    %4884 = vmatpush1.msra.mxu0 0.0
    %4885 = vmatprep.subr.mxu0 0.0
    %4886 = vmatpush1.msra.mxu0 0.0
    %4887 = vmatprep.subr.mxu0 0.0
    %4888 = vmatpush1.msra.mxu0 0.0
    %4889 = vmatprep.subr.mxu0 0.0
    %4890 = vmatpush1.msra.mxu0 0.0
    %4891 = vmatprep.subr.mxu0 0.0
    %4892 = vmatpush1.msra.mxu0 0.0
    %4893 = vmatprep.subr.mxu0 0.0
    %4894 = vmatpush1.msra.mxu0 0.0
    %4895 = vmatprep.subr.mxu0 0.0
    %4896 = vmatpush1.msra.mxu0 0.0
    %4897 = vmatprep.subr.mxu0 0.0
    %4898 = vmatpush1.msra.mxu0 0.0
    %4899 = vmatprep.subr.mxu0 0.0
    %4900 = vmatpush1.msra.mxu0 0.0
    %4901 = vmatprep.subr.mxu0 0.0
    %4902 = vmatpush1.msra.mxu0 0.0
    %4903 = vmatprep.subr.mxu0 0.0
    %4904 = vmatpush1.msra.mxu0 0.0
    %4905 = vmatprep.subr.mxu0 0.0
    %4906 = vmatpush1.msra.mxu0 0.0
    %4907 = vmatprep.subr.mxu0 0.0
    %4908 = vmatpush1.msra.mxu0 0.0
    %4909 = vmatprep.subr.mxu0 0.0
    %4910 = vmatpush1.msra.mxu0 0.0
    %4911 = vmatprep.subr.mxu0 0.0
    %4912 = vmatpush1.msra.mxu0 0.0
    %4913 = vmatprep.subr.mxu0 0.0
    %4914 = vmatpush1.msra.mxu0 0.0
    %4915 = vmatprep.mubr.f32.mxu0 0.0
    %4916 = vmatmul.mubr.f32.gmra.mrb[0].mxu0 %v4707
    %v4917 = vpop.f32.mrb[0].mxu0
    %v4918 = vadd.f32 %v625, %v4917
    %v4919 = vpop.f32.mrb[0].mxu0
    %v4920 = vadd.f32 %v629, %v4919
    %4921 = vdwg.mxu0
    %4922 = vmatprep.subr.mxu0 %v739
    %4923 = vmatpush1.msra.mxu0 %v737
    %4924 = vmatprep.subr.mxu0 0.0
    %4925 = vmatpush1.msra.mxu0 0.0
    %4926 = vmatprep.subr.mxu0 0.0
    %4927 = vmatpush1.msra.mxu0 0.0
    %4928 = vmatprep.subr.mxu0 0.0
    %4929 = vmatpush1.msra.mxu0 0.0
    %4930 = vmatprep.subr.mxu0 0.0
    %4931 = vmatpush1.msra.mxu0 0.0
    %4932 = vmatprep.subr.mxu0 0.0
    %4933 = vmatpush1.msra.mxu0 0.0
    %4934 = vmatprep.subr.mxu0 0.0
    %4935 = vmatpush1.msra.mxu0 0.0
    %4936 = vmatprep.subr.mxu0 0.0
    %4937 = vmatpush1.msra.mxu0 0.0
    %4938 = vmatprep.subr.mxu0 0.0
    %4939 = vmatpush1.msra.mxu0 0.0
    %4940 = vmatprep.subr.mxu0 0.0
    %4941 = vmatpush1.msra.mxu0 0.0
    %4942 = vmatprep.subr.mxu0 0.0
    %4943 = vmatpush1.msra.mxu0 0.0
    %4944 = vmatprep.subr.mxu0 0.0
    %4945 = vmatpush1.msra.mxu0 0.0
    %4946 = vmatprep.subr.mxu0 0.0
    %4947 = vmatpush1.msra.mxu0 0.0
    %4948 = vmatprep.subr.mxu0 0.0
    %4949 = vmatpush1.msra.mxu0 0.0
    %4950 = vmatprep.subr.mxu0 0.0
    %4951 = vmatpush1.msra.mxu0 0.0
    %4952 = vmatprep.subr.mxu0 0.0
    %4953 = vmatpush1.msra.mxu0 0.0
    %4954 = vmatprep.subr.mxu0 0.0
    %4955 = vmatpush1.msra.mxu0 0.0
    %4956 = vmatprep.subr.mxu0 0.0
    %4957 = vmatpush1.msra.mxu0 0.0
    %4958 = vmatprep.subr.mxu0 0.0
    %4959 = vmatpush1.msra.mxu0 0.0
    %4960 = vmatprep.subr.mxu0 0.0
    %4961 = vmatpush1.msra.mxu0 0.0
    %4962 = vmatprep.subr.mxu0 0.0
    %4963 = vmatpush1.msra.mxu0 0.0
    %4964 = vmatprep.subr.mxu0 0.0
    %4965 = vmatpush1.msra.mxu0 0.0
    %4966 = vmatprep.subr.mxu0 0.0
    %4967 = vmatpush1.msra.mxu0 0.0
    %4968 = vmatprep.subr.mxu0 0.0
    %4969 = vmatpush1.msra.mxu0 0.0
    %4970 = vmatprep.subr.mxu0 0.0
    %4971 = vmatpush1.msra.mxu0 0.0
    %4972 = vmatprep.subr.mxu0 0.0
    %4973 = vmatpush1.msra.mxu0 0.0
    %4974 = vmatprep.subr.mxu0 0.0
    %4975 = vmatpush1.msra.mxu0 0.0
    %4976 = vmatprep.subr.mxu0 0.0
    %4977 = vmatpush1.msra.mxu0 0.0
    %4978 = vmatprep.subr.mxu0 0.0
    %4979 = vmatpush1.msra.mxu0 0.0
    %4980 = vmatprep.subr.mxu0 0.0
    %4981 = vmatpush1.msra.mxu0 0.0
    %4982 = vmatprep.subr.mxu0 0.0
    %4983 = vmatpush1.msra.mxu0 0.0
    %4984 = vmatprep.subr.mxu0 0.0
    %4985 = vmatpush1.msra.mxu0 0.0
    %4986 = vmatprep.mubr.f32.mxu0 0.0
    %4987 = vmatmul.mubr.f32.gmra.mrb[0].mxu0 %v4707
    %v4988 = vpop.f32.mrb[0].mxu0
    %v4989 = vadd.f32 %v633, %v4988
    %v4990 = vpop.f32.mrb[0].mxu0
    %v4991 = vadd.f32 %v637, %v4990
    %4992 = vdwg.mxu0
    %4993 = vmatprep.subr.mxu0 %v743
    %4994 = vmatpush1.msra.mxu0 %v741
    %4995 = vmatprep.subr.mxu0 0.0
    %4996 = vmatpush1.msra.mxu0 0.0
    %4997 = vmatprep.subr.mxu0 0.0
    %4998 = vmatpush1.msra.mxu0 0.0
    %4999 = vmatprep.subr.mxu0 0.0
    %5000 = vmatpush1.msra.mxu0 0.0
    %5001 = vmatprep.subr.mxu0 0.0
    %5002 = vmatpush1.msra.mxu0 0.0
    %5003 = vmatprep.subr.mxu0 0.0
    %5004 = vmatpush1.msra.mxu0 0.0
    %5005 = vmatprep.subr.mxu0 0.0
    %5006 = vmatpush1.msra.mxu0 0.0
    %5007 = vmatprep.subr.mxu0 0.0
    %5008 = vmatpush1.msra.mxu0 0.0
    %5009 = vmatprep.subr.mxu0 0.0
    %5010 = vmatpush1.msra.mxu0 0.0
    %5011 = vmatprep.subr.mxu0 0.0
    %5012 = vmatpush1.msra.mxu0 0.0
    %5013 = vmatprep.subr.mxu0 0.0
    %5014 = vmatpush1.msra.mxu0 0.0
    %5015 = vmatprep.subr.mxu0 0.0
    %5016 = vmatpush1.msra.mxu0 0.0
    %5017 = vmatprep.subr.mxu0 0.0
    %5018 = vmatpush1.msra.mxu0 0.0
    %5019 = vmatprep.subr.mxu0 0.0
    %5020 = vmatpush1.msra.mxu0 0.0
    %5021 = vmatprep.subr.mxu0 0.0
    %5022 = vmatpush1.msra.mxu0 0.0
    %5023 = vmatprep.subr.mxu0 0.0
    %5024 = vmatpush1.msra.mxu0 0.0
    %5025 = vmatprep.subr.mxu0 0.0
    %5026 = vmatpush1.msra.mxu0 0.0
    %5027 = vmatprep.subr.mxu0 0.0
    %5028 = vmatpush1.msra.mxu0 0.0
    %5029 = vmatprep.subr.mxu0 0.0
    %5030 = vmatpush1.msra.mxu0 0.0
    %5031 = vmatprep.subr.mxu0 0.0
    %5032 = vmatpush1.msra.mxu0 0.0
    %5033 = vmatprep.subr.mxu0 0.0
    %5034 = vmatpush1.msra.mxu0 0.0
    %5035 = vmatprep.subr.mxu0 0.0
    %5036 = vmatpush1.msra.mxu0 0.0
    %5037 = vmatprep.subr.mxu0 0.0
    %5038 = vmatpush1.msra.mxu0 0.0
    %5039 = vmatprep.subr.mxu0 0.0
    %5040 = vmatpush1.msra.mxu0 0.0
    %5041 = vmatprep.subr.mxu0 0.0
    %5042 = vmatpush1.msra.mxu0 0.0
    %5043 = vmatprep.subr.mxu0 0.0
    %5044 = vmatpush1.msra.mxu0 0.0
    %5045 = vmatprep.subr.mxu0 0.0
    %5046 = vmatpush1.msra.mxu0 0.0
    %5047 = vmatprep.subr.mxu0 0.0
    %5048 = vmatpush1.msra.mxu0 0.0
    %5049 = vmatprep.subr.mxu0 0.0
    %5050 = vmatpush1.msra.mxu0 0.0
    %5051 = vmatprep.subr.mxu0 0.0
    %5052 = vmatpush1.msra.mxu0 0.0
    %5053 = vmatprep.subr.mxu0 0.0
    %5054 = vmatpush1.msra.mxu0 0.0
    %5055 = vmatprep.subr.mxu0 0.0
    %5056 = vmatpush1.msra.mxu0 0.0
    %5057 = vmatprep.mubr.f32.mxu0 0.0
    %5058 = vmatmul.mubr.f32.gmra.mrb[0].mxu0 %v4707
    %v5059 = vpop.f32.mrb[0].mxu0
    %v5060 = vadd.f32 %v641, %v5059
    %v5061 = vpop.f32.mrb[0].mxu0
    %v5062 = vadd.f32 %v645, %v5061
    %5063 = vdwg.mxu0
    %5064 = vmatprep.subr.mxu0 %v747
    %5065 = vmatpush1.msra.mxu0 %v745
    %5066 = vmatprep.subr.mxu0 0.0
    %5067 = vmatpush1.msra.mxu0 0.0
    %5068 = vmatprep.subr.mxu0 0.0
    %5069 = vmatpush1.msra.mxu0 0.0
    %5070 = vmatprep.subr.mxu0 0.0
    %5071 = vmatpush1.msra.mxu0 0.0
    %5072 = vmatprep.subr.mxu0 0.0
    %5073 = vmatpush1.msra.mxu0 0.0
    %5074 = vmatprep.subr.mxu0 0.0
    %5075 = vmatpush1.msra.mxu0 0.0
    %5076 = vmatprep.subr.mxu0 0.0
    %5077 = vmatpush1.msra.mxu0 0.0
    %5078 = vmatprep.subr.mxu0 0.0
    %5079 = vmatpush1.msra.mxu0 0.0
    %5080 = vmatprep.subr.mxu0 0.0
    %5081 = vmatpush1.msra.mxu0 0.0
    %5082 = vmatprep.subr.mxu0 0.0
    %5083 = vmatpush1.msra.mxu0 0.0
    %5084 = vmatprep.subr.mxu0 0.0
    %5085 = vmatpush1.msra.mxu0 0.0
    %5086 = vmatprep.subr.mxu0 0.0
    %5087 = vmatpush1.msra.mxu0 0.0
    %5088 = vmatprep.subr.mxu0 0.0
    %5089 = vmatpush1.msra.mxu0 0.0
    %5090 = vmatprep.subr.mxu0 0.0
    %5091 = vmatpush1.msra.mxu0 0.0
    %5092 = vmatprep.subr.mxu0 0.0
    %5093 = vmatpush1.msra.mxu0 0.0
    %5094 = vmatprep.subr.mxu0 0.0
    %5095 = vmatpush1.msra.mxu0 0.0
    %5096 = vmatprep.subr.mxu0 0.0
    %5097 = vmatpush1.msra.mxu0 0.0
    %5098 = vmatprep.subr.mxu0 0.0
    %5099 = vmatpush1.msra.mxu0 0.0
    %5100 = vmatprep.subr.mxu0 0.0
    %5101 = vmatpush1.msra.mxu0 0.0
    %5102 = vmatprep.subr.mxu0 0.0
    %5103 = vmatpush1.msra.mxu0 0.0
    %5104 = vmatprep.subr.mxu0 0.0
    %5105 = vmatpush1.msra.mxu0 0.0
    %5106 = vmatprep.subr.mxu0 0.0
    %5107 = vmatpush1.msra.mxu0 0.0
    %5108 = vmatprep.subr.mxu0 0.0
    %5109 = vmatpush1.msra.mxu0 0.0
    %5110 = vmatprep.subr.mxu0 0.0
    %5111 = vmatpush1.msra.mxu0 0.0
    %5112 = vmatprep.subr.mxu0 0.0
    %5113 = vmatpush1.msra.mxu0 0.0
    %5114 = vmatprep.subr.mxu0 0.0
    %5115 = vmatpush1.msra.mxu0 0.0
    %5116 = vmatprep.subr.mxu0 0.0
    %5117 = vmatpush1.msra.mxu0 0.0
    %5118 = vmatprep.subr.mxu0 0.0
    %5119 = vmatpush1.msra.mxu0 0.0
    %5120 = vmatprep.subr.mxu0 0.0
    %5121 = vmatpush1.msra.mxu0 0.0
    %5122 = vmatprep.subr.mxu0 0.0
    %5123 = vmatpush1.msra.mxu0 0.0
    %5124 = vmatprep.subr.mxu0 0.0
    %5125 = vmatpush1.msra.mxu0 0.0
    %5126 = vmatprep.subr.mxu0 0.0
    %5127 = vmatpush1.msra.mxu0 0.0
    %5128 = vmatprep.mubr.f32.mxu0 0.0
    %5129 = vmatmul.mubr.f32.gmra.mrb[0].mxu0 %v4707
    %v5130 = vpop.f32.mrb[0].mxu0
    %v5131 = vadd.f32 %v649, %v5130
    %v5132 = vpop.f32.mrb[0].mxu0
    %v5133 = vadd.f32 %v653, %v5132
    %5134 = vdwg.mxu0
    %v5135 = vpack.c.bf16 %v4702, %v4702
    %v5136 = vpack.c.bf16 %v4703, %v4703
    %v5137 = vpack.c.bf16 %v4704, %v4704
    %5138 = vmatprep.subr.bf16.mxu0 %v2545
    %5139 = vmatpush1.bf16.msra.mxu0 %v2544
    %5140 = vmatprep.subr.bf16.mxu0 %v2557
    %5141 = vmatpush1.bf16.msra.mxu0 %v2556
    %5142 = vmatprep.subr.bf16.mxu0 %v2569
    %5143 = vmatpush1.bf16.msra.mxu0 %v2568
    %5144 = vmatprep.subr.bf16.mxu0 %v2581
    %5145 = vmatpush1.bf16.msra.mxu0 %v2580
    %5146 = vmatprep.subr.bf16.mxu0 %v2593
    %5147 = vmatpush1.bf16.msra.mxu0 %v2592
    %5148 = vmatprep.subr.bf16.mxu0 %v2605
    %5149 = vmatpush1.bf16.msra.mxu0 %v2604
    %5150 = vmatprep.subr.bf16.mxu0 %v2617
    %5151 = vmatpush1.bf16.msra.mxu0 %v2616
    %5152 = vmatprep.subr.bf16.mxu0 %v2629
    %5153 = vmatpush1.bf16.msra.mxu0 %v2628
    %5154 = vmatprep.subr.bf16.mxu0 %v2641
    %5155 = vmatpush1.bf16.msra.mxu0 %v2640
    %5156 = vmatprep.subr.bf16.mxu0 %v2653
    %5157 = vmatpush1.bf16.msra.mxu0 %v2652
    %5158 = vmatprep.subr.bf16.mxu0 %v2665
    %5159 = vmatpush1.bf16.msra.mxu0 %v2664
    %5160 = vmatprep.subr.bf16.mxu0 %v2677
    %5161 = vmatpush1.bf16.msra.mxu0 %v2676
    %5162 = vmatprep.subr.bf16.mxu0 %v2689
    %5163 = vmatpush1.bf16.msra.mxu0 %v2688
    %5164 = vmatprep.subr.bf16.mxu0 %v2701
    %5165 = vmatpush1.bf16.msra.mxu0 %v2700
    %5166 = vmatprep.subr.bf16.mxu0 %v2713
    %5167 = vmatpush1.bf16.msra.mxu0 %v2712
    %5168 = vmatprep.subr.bf16.mxu0 %v2725
    %5169 = vmatpush1.bf16.msra.mxu0 %v2724
    %5170 = vmatprep.mubr.bf16.mxu0 %v5136
    %5171 = vmatmul.mubr.bf16.gmra.mrb[0].mxu0 %v5135
    %v5172 = vpop.f32.mrb[0].mxu0
    %v5173 = vadd.f32 0.0, %v5172
    %v5174 = vpop.f32.mrb[0].mxu0
    %v5175 = vadd.f32 0.0, %v5174
    %v5176 = vpop.f32.mrb[0].mxu0
    %v5177 = vpop.f32.mrb[0].mxu0
    %5178 = vdwg.mxu0
    %5179 = vmatprep.subr.bf16.mxu0 %v2737
    %5180 = vmatpush1.bf16.msra.mxu0 %v2736
    %5181 = vmatprep.subr.bf16.mxu0 %v2749
    %5182 = vmatpush1.bf16.msra.mxu0 %v2748
    %5183 = vmatprep.subr.bf16.mxu0 %v2761
    %5184 = vmatpush1.bf16.msra.mxu0 %v2760
    %5185 = vmatprep.subr.bf16.mxu0 %v2773
    %5186 = vmatpush1.bf16.msra.mxu0 %v2772
    %5187 = vmatprep.subr.bf16.mxu0 %v2785
    %5188 = vmatpush1.bf16.msra.mxu0 %v2784
    %5189 = vmatprep.subr.bf16.mxu0 %v2797
    %5190 = vmatpush1.bf16.msra.mxu0 %v2796
    %5191 = vmatprep.subr.bf16.mxu0 %v2809
    %5192 = vmatpush1.bf16.msra.mxu0 %v2808
    %5193 = vmatprep.subr.bf16.mxu0 %v2821
    %5194 = vmatpush1.bf16.msra.mxu0 %v2820
    %5195 = vmatprep.subr.bf16.mxu0 0
    %5196 = vmatpush1.bf16.msra.mxu0 0
    %5197 = vmatprep.subr.bf16.mxu0 0
    %5198 = vmatpush1.bf16.msra.mxu0 0
    %5199 = vmatprep.subr.bf16.mxu0 0
    %5200 = vmatpush1.bf16.msra.mxu0 0
    %5201 = vmatprep.subr.bf16.mxu0 0
    %5202 = vmatpush1.bf16.msra.mxu0 0
    %5203 = vmatprep.subr.bf16.mxu0 0
    %5204 = vmatpush1.bf16.msra.mxu0 0
    %5205 = vmatprep.subr.bf16.mxu0 0
    %5206 = vmatpush1.bf16.msra.mxu0 0
    %5207 = vmatprep.subr.bf16.mxu0 0
    %5208 = vmatpush1.bf16.msra.mxu0 0
    %5209 = vmatprep.subr.bf16.mxu0 0
    %5210 = vmatpush1.bf16.msra.mxu0 0
    %5211 = vmatprep.mubr.bf16.mxu0 0
    %5212 = vmatmul.mubr.bf16.gmra.mrb[0].mxu0 %v5137
    %v5213 = vpop.f32.mrb[0].mxu0
    %v5214 = vadd.f32 %v5173, %v5213
    %v5215 = vpop.f32.mrb[0].mxu0
    %v5216 = vadd.f32 %v5175, %v5215
    %v5217 = vpop.f32.mrb[0].mxu0
    %v5218 = vpop.f32.mrb[0].mxu0
    %5219 = vdwg.mxu0
    %5220 = vmatprep.subr.bf16.mxu0 %v2547
    %5221 = vmatpush1.bf16.msra.mxu0 %v2546
    %5222 = vmatprep.subr.bf16.mxu0 %v2559
    %5223 = vmatpush1.bf16.msra.mxu0 %v2558
    %5224 = vmatprep.subr.bf16.mxu0 %v2571
    %5225 = vmatpush1.bf16.msra.mxu0 %v2570
    %5226 = vmatprep.subr.bf16.mxu0 %v2583
    %5227 = vmatpush1.bf16.msra.mxu0 %v2582
    %5228 = vmatprep.subr.bf16.mxu0 %v2595
    %5229 = vmatpush1.bf16.msra.mxu0 %v2594
    %5230 = vmatprep.subr.bf16.mxu0 %v2607
    %5231 = vmatpush1.bf16.msra.mxu0 %v2606
    %5232 = vmatprep.subr.bf16.mxu0 %v2619
    %5233 = vmatpush1.bf16.msra.mxu0 %v2618
    %5234 = vmatprep.subr.bf16.mxu0 %v2631
    %5235 = vmatpush1.bf16.msra.mxu0 %v2630
    %5236 = vmatprep.subr.bf16.mxu0 %v2643
    %5237 = vmatpush1.bf16.msra.mxu0 %v2642
    %5238 = vmatprep.subr.bf16.mxu0 %v2655
    %5239 = vmatpush1.bf16.msra.mxu0 %v2654
    %5240 = vmatprep.subr.bf16.mxu0 %v2667
    %5241 = vmatpush1.bf16.msra.mxu0 %v2666
    %5242 = vmatprep.subr.bf16.mxu0 %v2679
    %5243 = vmatpush1.bf16.msra.mxu0 %v2678
    %5244 = vmatprep.subr.bf16.mxu0 %v2691
    %5245 = vmatpush1.bf16.msra.mxu0 %v2690
    %5246 = vmatprep.subr.bf16.mxu0 %v2703
    %5247 = vmatpush1.bf16.msra.mxu0 %v2702
    %5248 = vmatprep.subr.bf16.mxu0 %v2715
    %5249 = vmatpush1.bf16.msra.mxu0 %v2714
    %5250 = vmatprep.subr.bf16.mxu0 %v2727
    %5251 = vmatpush1.bf16.msra.mxu0 %v2726
    %5252 = vmatprep.mubr.bf16.mxu0 %v5136
    %5253 = vmatmul.mubr.bf16.gmra.mrb[0].mxu0 %v5135
    %v5254 = vpop.f32.mrb[0].mxu0
    %v5255 = vadd.f32 0.0, %v5254
    %v5256 = vpop.f32.mrb[0].mxu0
    %v5257 = vadd.f32 0.0, %v5256
    %v5258 = vpop.f32.mrb[0].mxu0
    %v5259 = vpop.f32.mrb[0].mxu0
    %5260 = vdwg.mxu0
    %5261 = vmatprep.subr.bf16.mxu0 %v2739
    %5262 = vmatpush1.bf16.msra.mxu0 %v2738
    %5263 = vmatprep.subr.bf16.mxu0 %v2751
    %5264 = vmatpush1.bf16.msra.mxu0 %v2750
    %5265 = vmatprep.subr.bf16.mxu0 %v2763
    %5266 = vmatpush1.bf16.msra.mxu0 %v2762
    %5267 = vmatprep.subr.bf16.mxu0 %v2775
    %5268 = vmatpush1.bf16.msra.mxu0 %v2774
    %5269 = vmatprep.subr.bf16.mxu0 %v2787
    %5270 = vmatpush1.bf16.msra.mxu0 %v2786
    %5271 = vmatprep.subr.bf16.mxu0 %v2799
    %5272 = vmatpush1.bf16.msra.mxu0 %v2798
    %5273 = vmatprep.subr.bf16.mxu0 %v2811
    %5274 = vmatpush1.bf16.msra.mxu0 %v2810
    %5275 = vmatprep.subr.bf16.mxu0 %v2823
    %5276 = vmatpush1.bf16.msra.mxu0 %v2822
    %5277 = vmatprep.subr.bf16.mxu0 0
    %5278 = vmatpush1.bf16.msra.mxu0 0
    %5279 = vmatprep.subr.bf16.mxu0 0
    %5280 = vmatpush1.bf16.msra.mxu0 0
    %5281 = vmatprep.subr.bf16.mxu0 0
    %5282 = vmatpush1.bf16.msra.mxu0 0
    %5283 = vmatprep.subr.bf16.mxu0 0
    %5284 = vmatpush1.bf16.msra.mxu0 0
    %5285 = vmatprep.subr.bf16.mxu0 0
    %5286 = vmatpush1.bf16.msra.mxu0 0
    %5287 = vmatprep.subr.bf16.mxu0 0
    %5288 = vmatpush1.bf16.msra.mxu0 0
    %5289 = vmatprep.subr.bf16.mxu0 0
    %5290 = vmatpush1.bf16.msra.mxu0 0
    %5291 = vmatprep.subr.bf16.mxu0 0
    %5292 = vmatpush1.bf16.msra.mxu0 0
    %5293 = vmatprep.mubr.bf16.mxu0 0
    %5294 = vmatmul.mubr.bf16.gmra.mrb[0].mxu0 %v5137
    %v5295 = vpop.f32.mrb[0].mxu0
    %v5296 = vadd.f32 %v5255, %v5295
    %v5297 = vpop.f32.mrb[0].mxu0
    %v5298 = vadd.f32 %v5257, %v5297
    %v5299 = vpop.f32.mrb[0].mxu0
    %v5300 = vpop.f32.mrb[0].mxu0
    %5301 = vdwg.mxu0
    %5302 = vmatprep.subr.bf16.mxu0 %v2549
    %5303 = vmatpush1.bf16.msra.mxu0 %v2548
    %5304 = vmatprep.subr.bf16.mxu0 %v2561
    %5305 = vmatpush1.bf16.msra.mxu0 %v2560
    %5306 = vmatprep.subr.bf16.mxu0 %v2573
    %5307 = vmatpush1.bf16.msra.mxu0 %v2572
    %5308 = vmatprep.subr.bf16.mxu0 %v2585
    %5309 = vmatpush1.bf16.msra.mxu0 %v2584
    %5310 = vmatprep.subr.bf16.mxu0 %v2597
    %5311 = vmatpush1.bf16.msra.mxu0 %v2596
    %5312 = vmatprep.subr.bf16.mxu0 %v2609
    %5313 = vmatpush1.bf16.msra.mxu0 %v2608
    %5314 = vmatprep.subr.bf16.mxu0 %v2621
    %5315 = vmatpush1.bf16.msra.mxu0 %v2620
    %5316 = vmatprep.subr.bf16.mxu0 %v2633
    %5317 = vmatpush1.bf16.msra.mxu0 %v2632
    %5318 = vmatprep.subr.bf16.mxu0 %v2645
    %5319 = vmatpush1.bf16.msra.mxu0 %v2644
    %5320 = vmatprep.subr.bf16.mxu0 %v2657
    %5321 = vmatpush1.bf16.msra.mxu0 %v2656
    %5322 = vmatprep.subr.bf16.mxu0 %v2669
    %5323 = vmatpush1.bf16.msra.mxu0 %v2668
    %5324 = vmatprep.subr.bf16.mxu0 %v2681
    %5325 = vmatpush1.bf16.msra.mxu0 %v2680
    %5326 = vmatprep.subr.bf16.mxu0 %v2693
    %5327 = vmatpush1.bf16.msra.mxu0 %v2692
    %5328 = vmatprep.subr.bf16.mxu0 %v2705
    %5329 = vmatpush1.bf16.msra.mxu0 %v2704
    %5330 = vmatprep.subr.bf16.mxu0 %v2717
    %5331 = vmatpush1.bf16.msra.mxu0 %v2716
    %5332 = vmatprep.subr.bf16.mxu0 %v2729
    %5333 = vmatpush1.bf16.msra.mxu0 %v2728
    %5334 = vmatprep.mubr.bf16.mxu0 %v5136
    %5335 = vmatmul.mubr.bf16.gmra.mrb[0].mxu0 %v5135
    %v5336 = vpop.f32.mrb[0].mxu0
    %v5337 = vadd.f32 0.0, %v5336
    %v5338 = vpop.f32.mrb[0].mxu0
    %v5339 = vadd.f32 0.0, %v5338
    %v5340 = vpop.f32.mrb[0].mxu0
    %v5341 = vpop.f32.mrb[0].mxu0
    %5342 = vdwg.mxu0
    %5343 = vmatprep.subr.bf16.mxu0 %v2741
    %5344 = vmatpush1.bf16.msra.mxu0 %v2740
    %5345 = vmatprep.subr.bf16.mxu0 %v2753
    %5346 = vmatpush1.bf16.msra.mxu0 %v2752
    %5347 = vmatprep.subr.bf16.mxu0 %v2765
    %5348 = vmatpush1.bf16.msra.mxu0 %v2764
    %5349 = vmatprep.subr.bf16.mxu0 %v2777
    %5350 = vmatpush1.bf16.msra.mxu0 %v2776
    %5351 = vmatprep.subr.bf16.mxu0 %v2789
    %5352 = vmatpush1.bf16.msra.mxu0 %v2788
    %5353 = vmatprep.subr.bf16.mxu0 %v2801
    %5354 = vmatpush1.bf16.msra.mxu0 %v2800
    %5355 = vmatprep.subr.bf16.mxu0 %v2813
    %5356 = vmatpush1.bf16.msra.mxu0 %v2812
    %5357 = vmatprep.subr.bf16.mxu0 %v2825
    %5358 = vmatpush1.bf16.msra.mxu0 %v2824
    %5359 = vmatprep.subr.bf16.mxu0 0
    %5360 = vmatpush1.bf16.msra.mxu0 0
    %5361 = vmatprep.subr.bf16.mxu0 0
    %5362 = vmatpush1.bf16.msra.mxu0 0
    %5363 = vmatprep.subr.bf16.mxu0 0
    %5364 = vmatpush1.bf16.msra.mxu0 0
    %5365 = vmatprep.subr.bf16.mxu0 0
    %5366 = vmatpush1.bf16.msra.mxu0 0
    %5367 = vmatprep.subr.bf16.mxu0 0
    %5368 = vmatpush1.bf16.msra.mxu0 0
    %5369 = vmatprep.subr.bf16.mxu0 0
    %5370 = vmatpush1.bf16.msra.mxu0 0
    %5371 = vmatprep.subr.bf16.mxu0 0
    %5372 = vmatpush1.bf16.msra.mxu0 0
    %5373 = vmatprep.subr.bf16.mxu0 0
    %5374 = vmatpush1.bf16.msra.mxu0 0
    %5375 = vmatprep.mubr.bf16.mxu0 0
    %5376 = vmatmul.mubr.bf16.gmra.mrb[0].mxu0 %v5137
    %v5377 = vpop.f32.mrb[0].mxu0
    %v5378 = vadd.f32 %v5337, %v5377
    %v5379 = vpop.f32.mrb[0].mxu0
    %v5380 = vadd.f32 %v5339, %v5379
    %v5381 = vpop.f32.mrb[0].mxu0
    %v5382 = vpop.f32.mrb[0].mxu0
    %5383 = vdwg.mxu0
    %5384 = vmatprep.subr.bf16.mxu0 %v2551
    %5385 = vmatpush1.bf16.msra.mxu0 %v2550
    %5386 = vmatprep.subr.bf16.mxu0 %v2563
    %5387 = vmatpush1.bf16.msra.mxu0 %v2562
    %5388 = vmatprep.subr.bf16.mxu0 %v2575
    %5389 = vmatpush1.bf16.msra.mxu0 %v2574
    %5390 = vmatprep.subr.bf16.mxu0 %v2587
    %5391 = vmatpush1.bf16.msra.mxu0 %v2586
    %5392 = vmatprep.subr.bf16.mxu0 %v2599
    %5393 = vmatpush1.bf16.msra.mxu0 %v2598
    %5394 = vmatprep.subr.bf16.mxu0 %v2611
    %5395 = vmatpush1.bf16.msra.mxu0 %v2610
    %5396 = vmatprep.subr.bf16.mxu0 %v2623
    %5397 = vmatpush1.bf16.msra.mxu0 %v2622
    %5398 = vmatprep.subr.bf16.mxu0 %v2635
    %5399 = vmatpush1.bf16.msra.mxu0 %v2634
    %5400 = vmatprep.subr.bf16.mxu0 %v2647
    %5401 = vmatpush1.bf16.msra.mxu0 %v2646
    %5402 = vmatprep.subr.bf16.mxu0 %v2659
    %5403 = vmatpush1.bf16.msra.mxu0 %v2658
    %5404 = vmatprep.subr.bf16.mxu0 %v2671
    %5405 = vmatpush1.bf16.msra.mxu0 %v2670
    %5406 = vmatprep.subr.bf16.mxu0 %v2683
    %5407 = vmatpush1.bf16.msra.mxu0 %v2682
    %5408 = vmatprep.subr.bf16.mxu0 %v2695
    %5409 = vmatpush1.bf16.msra.mxu0 %v2694
    %5410 = vmatprep.subr.bf16.mxu0 %v2707
    %5411 = vmatpush1.bf16.msra.mxu0 %v2706
    %5412 = vmatprep.subr.bf16.mxu0 %v2719
    %5413 = vmatpush1.bf16.msra.mxu0 %v2718
    %5414 = vmatprep.subr.bf16.mxu0 %v2731
    %5415 = vmatpush1.bf16.msra.mxu0 %v2730
    %5416 = vmatprep.mubr.bf16.mxu0 %v5136
    %5417 = vmatmul.mubr.bf16.gmra.mrb[0].mxu0 %v5135
    %v5418 = vpop.f32.mrb[0].mxu0
    %v5419 = vadd.f32 0.0, %v5418
    %v5420 = vpop.f32.mrb[0].mxu0
    %v5421 = vadd.f32 0.0, %v5420
    %v5422 = vpop.f32.mrb[0].mxu0
    %v5423 = vpop.f32.mrb[0].mxu0
    %5424 = vdwg.mxu0
    %5425 = vmatprep.subr.bf16.mxu0 %v2743
    %5426 = vmatpush1.bf16.msra.mxu0 %v2742
    %5427 = vmatprep.subr.bf16.mxu0 %v2755
    %5428 = vmatpush1.bf16.msra.mxu0 %v2754
    %5429 = vmatprep.subr.bf16.mxu0 %v2767
    %5430 = vmatpush1.bf16.msra.mxu0 %v2766
    %5431 = vmatprep.subr.bf16.mxu0 %v2779
    %5432 = vmatpush1.bf16.msra.mxu0 %v2778
    %5433 = vmatprep.subr.bf16.mxu0 %v2791
    %5434 = vmatpush1.bf16.msra.mxu0 %v2790
    %5435 = vmatprep.subr.bf16.mxu0 %v2803
    %5436 = vmatpush1.bf16.msra.mxu0 %v2802
    %5437 = vmatprep.subr.bf16.mxu0 %v2815
    %5438 = vmatpush1.bf16.msra.mxu0 %v2814
    %5439 = vmatprep.subr.bf16.mxu0 %v2827
    %5440 = vmatpush1.bf16.msra.mxu0 %v2826
    %5441 = vmatprep.subr.bf16.mxu0 0
    %5442 = vmatpush1.bf16.msra.mxu0 0
    %5443 = vmatprep.subr.bf16.mxu0 0
    %5444 = vmatpush1.bf16.msra.mxu0 0
    %5445 = vmatprep.subr.bf16.mxu0 0
    %5446 = vmatpush1.bf16.msra.mxu0 0
    %5447 = vmatprep.subr.bf16.mxu0 0
    %5448 = vmatpush1.bf16.msra.mxu0 0
    %5449 = vmatprep.subr.bf16.mxu0 0
    %5450 = vmatpush1.bf16.msra.mxu0 0
    %5451 = vmatprep.subr.bf16.mxu0 0
    %5452 = vmatpush1.bf16.msra.mxu0 0
    %5453 = vmatprep.subr.bf16.mxu0 0
    %5454 = vmatpush1.bf16.msra.mxu0 0
    %5455 = vmatprep.subr.bf16.mxu0 0
    %5456 = vmatpush1.bf16.msra.mxu0 0
    %5457 = vmatprep.mubr.bf16.mxu0 0
    %5458 = vmatmul.mubr.bf16.gmra.mrb[0].mxu0 %v5137
    %v5459 = vpop.f32.mrb[0].mxu0
    %v5460 = vadd.f32 %v5419, %v5459
    %v5461 = vpop.f32.mrb[0].mxu0
    %v5462 = vadd.f32 %v5421, %v5461
    %v5463 = vpop.f32.mrb[0].mxu0
    %v5464 = vpop.f32.mrb[0].mxu0
    %5465 = vdwg.mxu0
    %5466 = vmatprep.subr.bf16.mxu0 %v2553
    %5467 = vmatpush1.bf16.msra.mxu0 %v2552
    %5468 = vmatprep.subr.bf16.mxu0 %v2565
    %5469 = vmatpush1.bf16.msra.mxu0 %v2564
    %5470 = vmatprep.subr.bf16.mxu0 %v2577
    %5471 = vmatpush1.bf16.msra.mxu0 %v2576
    %5472 = vmatprep.subr.bf16.mxu0 %v2589
    %5473 = vmatpush1.bf16.msra.mxu0 %v2588
    %5474 = vmatprep.subr.bf16.mxu0 %v2601
    %5475 = vmatpush1.bf16.msra.mxu0 %v2600
    %5476 = vmatprep.subr.bf16.mxu0 %v2613
    %5477 = vmatpush1.bf16.msra.mxu0 %v2612
    %5478 = vmatprep.subr.bf16.mxu0 %v2625
    %5479 = vmatpush1.bf16.msra.mxu0 %v2624
    %5480 = vmatprep.subr.bf16.mxu0 %v2637
    %5481 = vmatpush1.bf16.msra.mxu0 %v2636
    %5482 = vmatprep.subr.bf16.mxu0 %v2649
    %5483 = vmatpush1.bf16.msra.mxu0 %v2648
    %5484 = vmatprep.subr.bf16.mxu0 %v2661
    %5485 = vmatpush1.bf16.msra.mxu0 %v2660
    %5486 = vmatprep.subr.bf16.mxu0 %v2673
    %5487 = vmatpush1.bf16.msra.mxu0 %v2672
    %5488 = vmatprep.subr.bf16.mxu0 %v2685
    %5489 = vmatpush1.bf16.msra.mxu0 %v2684
    %5490 = vmatprep.subr.bf16.mxu0 %v2697
    %5491 = vmatpush1.bf16.msra.mxu0 %v2696
    %5492 = vmatprep.subr.bf16.mxu0 %v2709
    %5493 = vmatpush1.bf16.msra.mxu0 %v2708
    %5494 = vmatprep.subr.bf16.mxu0 %v2721
    %5495 = vmatpush1.bf16.msra.mxu0 %v2720
    %5496 = vmatprep.subr.bf16.mxu0 %v2733
    %5497 = vmatpush1.bf16.msra.mxu0 %v2732
    %5498 = vmatprep.mubr.bf16.mxu0 %v5136
    %5499 = vmatmul.mubr.bf16.gmra.mrb[0].mxu0 %v5135
    %v5500 = vpop.f32.mrb[0].mxu0
    %v5501 = vadd.f32 0.0, %v5500
    %v5502 = vpop.f32.mrb[0].mxu0
    %v5503 = vadd.f32 0.0, %v5502
    %v5504 = vpop.f32.mrb[0].mxu0
    %v5505 = vpop.f32.mrb[0].mxu0
    %5506 = vdwg.mxu0
    %5507 = vmatprep.subr.bf16.mxu0 %v2745
    %5508 = vmatpush1.bf16.msra.mxu0 %v2744
    %5509 = vmatprep.subr.bf16.mxu0 %v2757
    %5510 = vmatpush1.bf16.msra.mxu0 %v2756
    %5511 = vmatprep.subr.bf16.mxu0 %v2769
    %5512 = vmatpush1.bf16.msra.mxu0 %v2768
    %5513 = vmatprep.subr.bf16.mxu0 %v2781
    %5514 = vmatpush1.bf16.msra.mxu0 %v2780
    %5515 = vmatprep.subr.bf16.mxu0 %v2793
    %5516 = vmatpush1.bf16.msra.mxu0 %v2792
    %5517 = vmatprep.subr.bf16.mxu0 %v2805
    %5518 = vmatpush1.bf16.msra.mxu0 %v2804
    %5519 = vmatprep.subr.bf16.mxu0 %v2817
    %5520 = vmatpush1.bf16.msra.mxu0 %v2816
    %5521 = vmatprep.subr.bf16.mxu0 %v2829
    %5522 = vmatpush1.bf16.msra.mxu0 %v2828
    %5523 = vmatprep.subr.bf16.mxu0 0
    %5524 = vmatpush1.bf16.msra.mxu0 0
    %5525 = vmatprep.subr.bf16.mxu0 0
    %5526 = vmatpush1.bf16.msra.mxu0 0
    %5527 = vmatprep.subr.bf16.mxu0 0
    %5528 = vmatpush1.bf16.msra.mxu0 0
    %5529 = vmatprep.subr.bf16.mxu0 0
    %5530 = vmatpush1.bf16.msra.mxu0 0
    %5531 = vmatprep.subr.bf16.mxu0 0
    %5532 = vmatpush1.bf16.msra.mxu0 0
    %5533 = vmatprep.subr.bf16.mxu0 0
    %5534 = vmatpush1.bf16.msra.mxu0 0
    %5535 = vmatprep.subr.bf16.mxu0 0
    %5536 = vmatpush1.bf16.msra.mxu0 0
    %5537 = vmatprep.subr.bf16.mxu0 0
    %5538 = vmatpush1.bf16.msra.mxu0 0
    %5539 = vmatprep.mubr.bf16.mxu0 0
    %5540 = vmatmul.mubr.bf16.gmra.mrb[0].mxu0 %v5137
    %v5541 = vpop.f32.mrb[0].mxu0
    %v5542 = vadd.f32 %v5501, %v5541
    %v5543 = vpop.f32.mrb[0].mxu0
    %v5544 = vadd.f32 %v5503, %v5543
    %v5545 = vpop.f32.mrb[0].mxu0
    %v5546 = vpop.f32.mrb[0].mxu0
    %5547 = vdwg.mxu0
    %5548 = vmatprep.subr.bf16.mxu0 %v2555
    %5549 = vmatpush1.bf16.msra.mxu0 %v2554
    %5550 = vmatprep.subr.bf16.mxu0 %v2567
    %5551 = vmatpush1.bf16.msra.mxu0 %v2566
    %5552 = vmatprep.subr.bf16.mxu0 %v2579
    %5553 = vmatpush1.bf16.msra.mxu0 %v2578
    %5554 = vmatprep.subr.bf16.mxu0 %v2591
    %5555 = vmatpush1.bf16.msra.mxu0 %v2590
    %5556 = vmatprep.subr.bf16.mxu0 %v2603
    %5557 = vmatpush1.bf16.msra.mxu0 %v2602
    %5558 = vmatprep.subr.bf16.mxu0 %v2615
    %5559 = vmatpush1.bf16.msra.mxu0 %v2614
    %5560 = vmatprep.subr.bf16.mxu0 %v2627
    %5561 = vmatpush1.bf16.msra.mxu0 %v2626
    %5562 = vmatprep.subr.bf16.mxu0 %v2639
    %5563 = vmatpush1.bf16.msra.mxu0 %v2638
    %5564 = vmatprep.subr.bf16.mxu0 %v2651
    %5565 = vmatpush1.bf16.msra.mxu0 %v2650
    %5566 = vmatprep.subr.bf16.mxu0 %v2663
    %5567 = vmatpush1.bf16.msra.mxu0 %v2662
    %5568 = vmatprep.subr.bf16.mxu0 %v2675
    %5569 = vmatpush1.bf16.msra.mxu0 %v2674
    %5570 = vmatprep.subr.bf16.mxu0 %v2687
    %5571 = vmatpush1.bf16.msra.mxu0 %v2686
    %5572 = vmatprep.subr.bf16.mxu0 %v2699
    %5573 = vmatpush1.bf16.msra.mxu0 %v2698
    %5574 = vmatprep.subr.bf16.mxu0 %v2711
    %5575 = vmatpush1.bf16.msra.mxu0 %v2710
    %5576 = vmatprep.subr.bf16.mxu0 %v2723
    %5577 = vmatpush1.bf16.msra.mxu0 %v2722
    %5578 = vmatprep.subr.bf16.mxu0 %v2735
    %5579 = vmatpush1.bf16.msra.mxu0 %v2734
    %5580 = vmatprep.mubr.bf16.mxu0 %v5136
    %5581 = vmatmul.mubr.bf16.gmra.mrb[0].mxu0 %v5135
    %v5582 = vpop.f32.mrb[0].mxu0
    %v5583 = vadd.f32 0.0, %v5582
    %v5584 = vpop.f32.mrb[0].mxu0
    %v5585 = vadd.f32 0.0, %v5584
    %v5586 = vpop.f32.mrb[0].mxu0
    %v5587 = vpop.f32.mrb[0].mxu0
    %5588 = vdwg.mxu0
    %5589 = vmatprep.subr.bf16.mxu0 %v2747
    %5590 = vmatpush1.bf16.msra.mxu0 %v2746
    %5591 = vmatprep.subr.bf16.mxu0 %v2759
    %5592 = vmatpush1.bf16.msra.mxu0 %v2758
    %5593 = vmatprep.subr.bf16.mxu0 %v2771
    %5594 = vmatpush1.bf16.msra.mxu0 %v2770
    %5595 = vmatprep.subr.bf16.mxu0 %v2783
    %5596 = vmatpush1.bf16.msra.mxu0 %v2782
    %5597 = vmatprep.subr.bf16.mxu0 %v2795
    %5598 = vmatpush1.bf16.msra.mxu0 %v2794
    %5599 = vmatprep.subr.bf16.mxu0 %v2807
    %5600 = vmatpush1.bf16.msra.mxu0 %v2806
    %5601 = vmatprep.subr.bf16.mxu0 %v2819
    %5602 = vmatpush1.bf16.msra.mxu0 %v2818
    %5603 = vmatprep.subr.bf16.mxu0 %v2831
    %5604 = vmatpush1.bf16.msra.mxu0 %v2830
    %5605 = vmatprep.subr.bf16.mxu0 0
    %5606 = vmatpush1.bf16.msra.mxu0 0
    %5607 = vmatprep.subr.bf16.mxu0 0
    %5608 = vmatpush1.bf16.msra.mxu0 0
    %5609 = vmatprep.subr.bf16.mxu0 0
    %5610 = vmatpush1.bf16.msra.mxu0 0
    %5611 = vmatprep.subr.bf16.mxu0 0
    %5612 = vmatpush1.bf16.msra.mxu0 0
    %5613 = vmatprep.subr.bf16.mxu0 0
    %5614 = vmatpush1.bf16.msra.mxu0 0
    %5615 = vmatprep.subr.bf16.mxu0 0
    %5616 = vmatpush1.bf16.msra.mxu0 0
    %5617 = vmatprep.subr.bf16.mxu0 0
    %5618 = vmatpush1.bf16.msra.mxu0 0
    %5619 = vmatprep.subr.bf16.mxu0 0
    %5620 = vmatpush1.bf16.msra.mxu0 0
    %5621 = vmatprep.mubr.bf16.mxu0 0
    %5622 = vmatmul.mubr.bf16.gmra.mrb[0].mxu0 %v5137
    %v5623 = vpop.f32.mrb[0].mxu0
    %v5624 = vadd.f32 %v5583, %v5623
    %v5625 = vpop.f32.mrb[0].mxu0
    %v5626 = vadd.f32 %v5585, %v5625
    %v5627 = vpop.f32.mrb[0].mxu0
    %v5628 = vpop.f32.mrb[0].mxu0
    %5629 = vdwg.mxu0
    %v5630 = vadd.f32 %v4776, %v5214
    %v5631 = vadd.f32 %v4778, %v5216
    %v5632 = vadd.f32 %v4847, %v5296
    %v5633 = vadd.f32 %v4849, %v5298
    %v5634 = vadd.f32 %v4918, %v5378
    %v5635 = vadd.f32 %v4920, %v5380
    %v5636 = vadd.f32 %v4989, %v5460
    %v5637 = vadd.f32 %v4991, %v5462
    %v5638 = vadd.f32 %v5060, %v5542
    %v5639 = vadd.f32 %v5062, %v5544
    %v5640 = vadd.f32 %v5131, %v5624
    %v5641 = vadd.f32 %v5133, %v5626
    %v5642 = vxor.u32 %v5630, 2147483648
    %v5643 = vxor.u32 %v5631, 2147483648
    %v5644 = vxor.u32 %v5632, 2147483648
    %v5645 = vmul.f32 %v5642, 1.442695
    %v5646 = vpow.pop %v5645
    %v5647 = vmul.f32 %v5643, 1.442695
    %v5648 = vpow.pop %v5647
    %v5649 = vmul.f32 %v5644, 1.442695
    %v5650 = vpow.pop %v5649
    %v5651 = vadd.f32 %v5646, 1.0
    %v5652 = vadd.f32 %v5648, 1.0
    %v5653 = vadd.f32 %v5650, 1.0
    %v5654 = vrcp.pop %v5651
    %v5655 = vmul.f32 1.0, %v5654
    %v5656 = vrcp.pop %v5652
    %v5657 = vmul.f32 1.0, %v5656
    %v5658 = vrcp.pop %v5653
    %v5659 = vmul.f32 1.0, %v5658
    %v5660 = vxor.u32 %v5633, 2147483648
    %v5661 = vxor.u32 %v5634, 2147483648
    %v5662 = vxor.u32 %v5635, 2147483648
    %v5663 = vmul.f32 %v5660, 1.442695
    %v5664 = vpow.pop %v5663
    %v5665 = vmul.f32 %v5661, 1.442695
    %v5666 = vpow.pop %v5665
    %v5667 = vmul.f32 %v5662, 1.442695
    %v5668 = vpow.pop %v5667
    %v5669 = vadd.f32 %v5664, 1.0
    %v5670 = vadd.f32 %v5666, 1.0
    %v5671 = vadd.f32 %v5668, 1.0
    %v5672 = vrcp.pop %v5669
    %v5673 = vmul.f32 1.0, %v5672
    %v5674 = vrcp.pop %v5670
    %v5675 = vmul.f32 1.0, %v5674
    %v5676 = vrcp.pop %v5671
    %v5677 = vmul.f32 1.0, %v5676
    %v5678 = vtanh.pop %v5636
    %v5679 = vtanh.pop %v5637
    %v5680 = vtanh.pop %v5638
    %v5681 = vxor.u32 %v5639, 2147483648
    %v5682 = vxor.u32 %v5640, 2147483648
    %v5683 = vxor.u32 %v5641, 2147483648
    %v5684 = vmul.f32 %v5681, 1.442695
    %v5685 = vpow.pop %v5684
    %v5686 = vmul.f32 %v5682, 1.442695
    %v5687 = vpow.pop %v5686
    %v5688 = vmul.f32 %v5683, 1.442695
    %v5689 = vpow.pop %v5688
    %v5690 = vadd.f32 %v5685, 1.0
    %v5691 = vadd.f32 %v5687, 1.0
    %v5692 = vadd.f32 %v5689, 1.0
    %v5693 = vrcp.pop %v5690
    %v5694 = vmul.f32 1.0, %v5693
    %v5695 = vrcp.pop %v5691
    %v5696 = vmul.f32 1.0, %v5695
    %v5697 = vrcp.pop %v5692
    %v5698 = vmul.f32 1.0, %v5697
    %v5699 = vmul.f32 %v5673, %v4696
    %v5700 = vmul.f32 %v5675, %v4697
    %v5701 = vmul.f32 %v5677, %v4698
    %v5702 = vmul.f32 %v5655, %v5678
    %v5703 = vmul.f32 %v5657, %v5679
    %v5704 = vmul.f32 %v5659, %v5680
    %v5705 = vadd.f32 %v5699, %v5702
    %v5706 = vadd.f32 %v5700, %v5703
    %v5707 = vadd.f32 %v5701, %v5704
    %v5708 = vtanh.pop %v5705
    %v5709 = vtanh.pop %v5706
    %v5710 = vtanh.pop %v5707
    %v5711 = vmul.f32 %v5694, %v5708
    %v5712 = vmul.f32 %v5696, %v5709
    %v5713 = vmul.f32 %v5698, %v5710
    %v5714 = vld [vmem:[%s8] sm:$0xff]
    %v5715 = vld [vmem:[%s8 + $0x8] sm:$0xff]
    %v5716 = vld [vmem:[%s8 + $0x10] sm:$0xff]
    %v5717 = vld [vmem:[%s8 + $0x18] sm:$0xff]
    %v5718 = vld [vmem:[%s8 + $0x20] sm:$0xff]
    %v5719 = vld [vmem:[%s8 + $0x28] sm:$0xff]
    %v5720 = vld [vmem:[%s8 + $0x30] sm:$0xff]
    %v5721 = vld [vmem:[%s8 + $0x38] sm:$0xff]
    %v5722 = vld [vmem:[%s8 + $0x40] sm:$0xff]
    %v5723 = vld [vmem:[%s8 + $0x48] sm:$0xff]
    %v5724 = vld [vmem:[%s8 + $0x50] sm:$0xff]
    %v5725 = vld [vmem:[%s8 + $0x58] sm:$0xff]
    %v5726 = vld [vmem:[%s8 + $0x60] sm:$0xff]
    %v5727 = vld [vmem:[%s8 + $0x68] sm:$0xff]
    %v5728 = vld [vmem:[%s8 + $0x70] sm:$0xff]
    %v5729 = vld [vmem:[%s8 + $0x78] sm:$0xff]
    %v5730 = vld [vmem:[%s8 + $0x80] sm:$0xff]
    %v5731 = vld [vmem:[%s8 + $0x88] sm:$0xff]
    %v5732 = vld [vmem:[%s8 + $0x90] sm:$0xff]
    %v5733 = vld [vmem:[%s8 + $0x98] sm:$0xff]
    %v5734 = vld [vmem:[%s8 + $0xa0] sm:$0xff]
    %v5735 = vld [vmem:[%s8 + $0xa8] sm:$0xff]
    %v5736 = vld [vmem:[%s8 + $0xb0] sm:$0xff]
    %v5737 = vld [vmem:[%s8 + $0xb8] sm:$0xff]
    %v5738 = vld [vmem:[%s8 + $0xc0] sm:$0xff]
    %v5739 = vld [vmem:[%s8 + $0xc8] sm:$0xff]
    %v5740 = vld [vmem:[%s8 + $0xd0] sm:$0xff]
    %v5741 = vld [vmem:[%s8 + $0xd8] sm:$0xff]
    %v5742 = vld [vmem:[%s8 + $0xe0] sm:$0xff]
    %v5743 = vld [vmem:[%s8 + $0xe8] sm:$0xff]
    %v5744 = vld [vmem:[%s8 + $0xf0] sm:$0xff]
    %v5745 = vld [vmem:[%s8 + $0xf8] sm:$0xff]
    %v5746 = vld [vmem:[%s8 + $0x100] sm:$0xff]
    %v5747 = vld [vmem:[%s8 + $0x108] sm:$0xff]
    %v5748 = vld [vmem:[%s8 + $0x110] sm:$0xff]
    %v5749 = vld [vmem:[%s8 + $0x118] sm:$0xff]
    %v5750 = vld [vmem:[%s8 + $0x120] sm:$0xff]
    %v5751 = vld [vmem:[%s8 + $0x128] sm:$0xff]
    %v5752 = vld [vmem:[%s8 + $0x130] sm:$0xff]
    %v5753 = vld [vmem:[%s8 + $0x138] sm:$0xff]
    %v5754 = vld [vmem:[%s8 + $0x140] sm:$0xff]
    %v5755 = vld [vmem:[%s8 + $0x148] sm:$0xff]
    %v5756 = vld [vmem:[%s8 + $0x150] sm:$0xff]
    %v5757 = vld [vmem:[%s8 + $0x158] sm:$0xff]
    %v5758 = vld [vmem:[%s8 + $0x160] sm:$0xff]
    %v5759 = vld [vmem:[%s8 + $0x168] sm:$0xff]
    %v5760 = vld [vmem:[%s8 + $0x170] sm:$0xff]
    %v5761 = vld [vmem:[%s8 + $0x178] sm:$0xff]
    %v5762 = vld [vmem:[#allocation2] sm:$0x1]
    %v5764 = vlaneseq
    %v5765 = vshrl.u32 %v5764, 7
    %v5766 = vsub.s32 0, %v5765
    %v5767 = vrot.slane %v5762, %v5766
    %5769 = vmatprep.subr.mxu0 0.0
    %5770 = vmatpush1.msra.mxu0 %v5714
    %5771 = vmatprep.subr.mxu0 0.0
    %5772 = vmatpush1.msra.mxu0 %v5715
    %5773 = vmatprep.subr.mxu0 0.0
    %5774 = vmatpush1.msra.mxu0 %v5716
    %5775 = vmatprep.subr.mxu0 0.0
    %5776 = vmatpush1.msra.mxu0 %v5717
    %5777 = vmatprep.subr.mxu0 0.0
    %5778 = vmatpush1.msra.mxu0 %v5718
    %5779 = vmatprep.subr.mxu0 0.0
    %5780 = vmatpush1.msra.mxu0 %v5719
    %5781 = vmatprep.subr.mxu0 0.0
    %5782 = vmatpush1.msra.mxu0 %v5720
    %5783 = vmatprep.subr.mxu0 0.0
    %5784 = vmatpush1.msra.mxu0 %v5721
    %5785 = vmatprep.subr.mxu0 0.0
    %5786 = vmatpush1.msra.mxu0 %v5722
    %5787 = vmatprep.subr.mxu0 0.0
    %5788 = vmatpush1.msra.mxu0 %v5723
    %5789 = vmatprep.subr.mxu0 0.0
    %5790 = vmatpush1.msra.mxu0 %v5724
    %5791 = vmatprep.subr.mxu0 0.0
    %5792 = vmatpush1.msra.mxu0 %v5725
    %5793 = vmatprep.subr.mxu0 0.0
    %5794 = vmatpush1.msra.mxu0 %v5726
    %5795 = vmatprep.subr.mxu0 0.0
    %5796 = vmatpush1.msra.mxu0 %v5727
    %5797 = vmatprep.subr.mxu0 0.0
    %5798 = vmatpush1.msra.mxu0 %v5728
    %5799 = vmatprep.subr.mxu0 0.0
    %5800 = vmatpush1.msra.mxu0 %v5729
    %5801 = vmatprep.subr.mxu0 0.0
    %5802 = vmatpush1.msra.mxu0 %v5730
    %5803 = vmatprep.subr.mxu0 0.0
    %5804 = vmatpush1.msra.mxu0 %v5731
    %5805 = vmatprep.subr.mxu0 0.0
    %5806 = vmatpush1.msra.mxu0 %v5732
    %5807 = vmatprep.subr.mxu0 0.0
    %5808 = vmatpush1.msra.mxu0 %v5733
    %5809 = vmatprep.subr.mxu0 0.0
    %5810 = vmatpush1.msra.mxu0 %v5734
    %5811 = vmatprep.subr.mxu0 0.0
    %5812 = vmatpush1.msra.mxu0 %v5735
    %5813 = vmatprep.subr.mxu0 0.0
    %5814 = vmatpush1.msra.mxu0 %v5736
    %5815 = vmatprep.subr.mxu0 0.0
    %5816 = vmatpush1.msra.mxu0 %v5737
    %5817 = vmatprep.subr.mxu0 0.0
    %5818 = vmatpush1.msra.mxu0 %v5738
    %5819 = vmatprep.subr.mxu0 0.0
    %5820 = vmatpush1.msra.mxu0 %v5739
    %5821 = vmatprep.subr.mxu0 0.0
    %5822 = vmatpush1.msra.mxu0 %v5740
    %5823 = vmatprep.subr.mxu0 0.0
    %5824 = vmatpush1.msra.mxu0 %v5741
    %5825 = vmatprep.subr.mxu0 0.0
    %5826 = vmatpush1.msra.mxu0 %v5742
    %5827 = vmatprep.subr.mxu0 0.0
    %5828 = vmatpush1.msra.mxu0 %v5743
    %5829 = vmatprep.subr.mxu0 0.0
    %5830 = vmatpush1.msra.mxu0 %v5744
    %5831 = vmatprep.subr.mxu0 0.0
    %5832 = vmatpush1.msra.mxu0 %v5745
    %5833 = vmatprep.mubr.f32.mxu0 %v5712
    %5834 = vmatmul.mubr.f32.gmra.mrb[0].mxu0 %v5711
    %v5835 = vpop.f32.mrb[0].mxu0
    %v5836 = vadd.f32 %v5767, %v5835
    %v5837 = vpop.f32.mrb[0].mxu0
    %5838 = vdwg.mxu0
    %5839 = vmatprep.subr.mxu0 0.0
    %5840 = vmatpush1.msra.mxu0 %v5746
    %5841 = vmatprep.subr.mxu0 0.0
    %5842 = vmatpush1.msra.mxu0 %v5747
    %5843 = vmatprep.subr.mxu0 0.0
    %5844 = vmatpush1.msra.mxu0 %v5748
    %5845 = vmatprep.subr.mxu0 0.0
    %5846 = vmatpush1.msra.mxu0 %v5749
    %5847 = vmatprep.subr.mxu0 0.0
    %5848 = vmatpush1.msra.mxu0 %v5750
    %5849 = vmatprep.subr.mxu0 0.0
    %5850 = vmatpush1.msra.mxu0 %v5751
    %5851 = vmatprep.subr.mxu0 0.0
    %5852 = vmatpush1.msra.mxu0 %v5752
    %5853 = vmatprep.subr.mxu0 0.0
    %5854 = vmatpush1.msra.mxu0 %v5753
    %5855 = vmatprep.subr.mxu0 0.0
    %5856 = vmatpush1.msra.mxu0 %v5754
    %5857 = vmatprep.subr.mxu0 0.0
    %5858 = vmatpush1.msra.mxu0 %v5755
    %5859 = vmatprep.subr.mxu0 0.0
    %5860 = vmatpush1.msra.mxu0 %v5756
    %5861 = vmatprep.subr.mxu0 0.0
    %5862 = vmatpush1.msra.mxu0 %v5757
    %5863 = vmatprep.subr.mxu0 0.0
    %5864 = vmatpush1.msra.mxu0 %v5758
    %5865 = vmatprep.subr.mxu0 0.0
    %5866 = vmatpush1.msra.mxu0 %v5759
    %5867 = vmatprep.subr.mxu0 0.0
    %5868 = vmatpush1.msra.mxu0 %v5760
    %5869 = vmatprep.subr.mxu0 0.0
    %5870 = vmatpush1.msra.mxu0 %v5761
    %5871 = vmatprep.subr.mxu0 0.0
    %5872 = vmatpush1.msra.mxu0 0.0
    %5873 = vmatprep.subr.mxu0 0.0
    %5874 = vmatpush1.msra.mxu0 0.0
    %5875 = vmatprep.subr.mxu0 0.0
    %5876 = vmatpush1.msra.mxu0 0.0
    %5877 = vmatprep.subr.mxu0 0.0
    %5878 = vmatpush1.msra.mxu0 0.0
    %5879 = vmatprep.subr.mxu0 0.0
    %5880 = vmatpush1.msra.mxu0 0.0
    %5881 = vmatprep.subr.mxu0 0.0
    %5882 = vmatpush1.msra.mxu0 0.0
    %5883 = vmatprep.subr.mxu0 0.0
    %5884 = vmatpush1.msra.mxu0 0.0
    %5885 = vmatprep.subr.mxu0 0.0
    %5886 = vmatpush1.msra.mxu0 0.0
    %5887 = vmatprep.subr.mxu0 0.0
    %5888 = vmatpush1.msra.mxu0 0.0
    %5889 = vmatprep.subr.mxu0 0.0
    %5890 = vmatpush1.msra.mxu0 0.0
    %5891 = vmatprep.subr.mxu0 0.0
    %5892 = vmatpush1.msra.mxu0 0.0
    %5893 = vmatprep.subr.mxu0 0.0
    %5894 = vmatpush1.msra.mxu0 0.0
    %5895 = vmatprep.subr.mxu0 0.0
    %5896 = vmatpush1.msra.mxu0 0.0
    %5897 = vmatprep.subr.mxu0 0.0
    %5898 = vmatpush1.msra.mxu0 0.0
    %5899 = vmatprep.subr.mxu0 0.0
    %5900 = vmatpush1.msra.mxu0 0.0
    %5901 = vmatprep.subr.mxu0 0.0
    %5902 = vmatpush1.msra.mxu0 0.0
    %5903 = vmatprep.mubr.f32.mxu0 0.0
    %5904 = vmatmul.mubr.f32.gmra.mrb[0].mxu0 %v5713
    %v5905 = vpop.f32.mrb[0].mxu0
    %v5906 = vadd.f32 %v5836, %v5905
    %v5907 = vpop.f32.mrb[0].mxu0
    %5908 = vdwg.mxu0
    %v5909 = vxor.u32 %v5906, 2147483648
    %v5910 = vmul.f32 %v5909, 1.442695
    %v5911 = vpow.pop %v5910
    %v5912 = vadd.f32 %v5911, 1.0
    %v5913 = vrcp.pop %v5912
    %v5914 = vmul.f32 1.0, %v5913
    %vm5915 = vcmask 1024
    %5916 = vst.msk [vmem:[%s10] sm:$0x3] %vm5915, %v5914
    // Predicated region
    $region66: #{magnitude7_forward.1} parent=1 // pred_check
      _
    $region67: #{magnitude7_forward.1} parent=1 // pred_check_branch
      %5918 = sbr.rel (0) target = $region69
    $region68: #{magnitude7_forward.1} parent=1 // pred_region
      _
    $region69: #{magnitude7_forward.1} parent=1 // pred_fallthru
      _
    // Predicated region
    $region70: #{magnitude7_forward.1} parent=1 // pred_check
      _
    $region71: #{magnitude7_forward.1} parent=1 // pred_check_branch
      %5920 = sbr.rel (0) target = $region73
    $region72: #{magnitude7_forward.1} parent=1 // pred_region
      _
    $region73: #{magnitude7_forward.1} parent=1 // pred_fallthru
      _
    %5921 = vsyncpa [#allocation4], 1
    %5922 = vsyncpa [#allocation6], 1
    %5923 = vsyncpa [#allocation9], 1
    %5924 = vsyncpa [#allocation12], 1

</llo_original>
